<compile_context>
chip_gen: v7x
topology: tpu7x:2x2x1
jax: 0.10.0
libtpu: 0.0.40
codegen_flags: <defaults>
</compile_context>

<pallas_src>
import jax
import jax.numpy as jnp
from jax.experimental import pallas as pl
from jax.experimental.pallas import tpu as pltpu
import numpy as np


# -----------------------------------------------------------------------------
# Pallas kernel: LSTM recurrence + relu/fc1/relu/fc2 head + sum over time.
# -----------------------------------------------------------------------------
def lstm_baseline_kernel(x_ref,       # (T, BP, I)   time-major, batch padded
                         wih_ref,     # (I, 4H)      gate order [i, f, g, o]
                         b_ref,       # (1, 4H)      b_ih + b_hh
                         whh_i_ref,   # (H, H)
                         whh_f_ref,   # (H, H)
                         whh_g_ref,   # (H, H)
                         whh_o_ref,   # (H, H)
                         w1_ref,      # (H, H)
                         b1_ref,      # (1, H)
                         w2_ref,      # (H, C)
                         b2_ref,      # (1, C)
                         out_ref):    # (BP, C)
    T, BP, _ = x_ref.shape
    H = whh_i_ref.shape[0]

    # ---- Hoisted input projection (off the serial critical path) ----
    x2d = x_ref[...].reshape(T * BP, x_ref.shape[2])          # (T*BP, I)
    xw = jnp.dot(x2d, wih_ref[...],
                 preferred_element_type=jnp.float32) + b_ref[...]   # (T*BP, 4H)

    # One-off per-gate split (outside the recurrence, so the misaligned lane
    # slice cost is paid once, not per timestep).
    xw_i = xw[:, 0 * H:1 * H]
    xw_f = xw[:, 1 * H:2 * H]
    xw_g = xw[:, 2 * H:3 * H]
    xw_o = xw[:, 3 * H:4 * H]

    whh_i = whh_i_ref[...]
    whh_f = whh_f_ref[...]
    whh_g = whh_g_ref[...]
    whh_o = whh_o_ref[...]

    # ---- Recurrence: fully unrolled, only h @ Whh_gate on the serial chain ----
    h = jnp.zeros((BP, H), jnp.float32)
    c = jnp.zeros((BP, H), jnp.float32)
    hs = []
    for t in range(T):                       # T is a compile-time constant
        r0 = t * BP
        i_g = jax.nn.sigmoid(xw_i[r0:r0 + BP]
                             + jnp.dot(h, whh_i, preferred_element_type=jnp.float32))
        f_g = jax.nn.sigmoid(xw_f[r0:r0 + BP]
                             + jnp.dot(h, whh_f, preferred_element_type=jnp.float32))
        g_g = jnp.tanh(xw_g[r0:r0 + BP]
                       + jnp.dot(h, whh_g, preferred_element_type=jnp.float32))
        o_g = jax.nn.sigmoid(xw_o[r0:r0 + BP]
                             + jnp.dot(h, whh_o, preferred_element_type=jnp.float32))
        c = f_g * c + i_g * g_g
        h = o_g * jnp.tanh(c)
        hs.append(h)

    # ---- Hoisted MLP head: two batched matmuls over all timesteps ----
    h_all = jnp.concatenate(hs, axis=0)                         # (T*BP, H)
    y = jnp.maximum(h_all, 0.0)
    y = jnp.maximum(jnp.dot(y, w1_ref[...],
                            preferred_element_type=jnp.float32) + b1_ref[...], 0.0)
    y = jnp.dot(y, w2_ref[...],
                preferred_element_type=jnp.float32) + b2_ref[...]  # (T*BP, C)

    # Sum over the sequence axis (T-1 small VPU adds).
    acc = y[0:BP]
    for t in range(1, T):
        acc = acc + y[t * BP:(t + 1) * BP]
    out_ref[...] = acc


def lstm_baseline_forward(x, params):
    """x: (B, T, INPUT_SIZE) float32  ->  (B, NUM_OF_CLASS) float32."""
    B, T, I = x.shape
    C = params["w2_t"].shape[1]

    # Pad batch to a multiple of 8 (f32 sublane count); slice back afterwards.
    BP = ((B + 7) // 8) * 8
    x_p = jnp.pad(x, ((0, BP - B), (0, 0), (0, 0)))
    # TODO(synk): the time-major transpose could be removed by producing x as
    # (T, B, I) upstream; negligible cost at these shapes.
    x_tbi = jnp.transpose(x_p, (1, 0, 2))                       # (T, BP, I)

    vmem = pl.BlockSpec(memory_space=pltpu.MemorySpace.VMEM)
    out = pl.pallas_call(
        lstm_baseline_kernel,
        out_shape=jax.ShapeDtypeStruct((BP, C), jnp.float32),
        in_specs=[vmem] * 11,
        out_specs=vmem,
    )(x_tbi,
      params["wih_t"], params["b"],
      params["whh_i_t"], params["whh_f_t"], params["whh_g_t"], params["whh_o_t"],
      params["w1_t"], params["b1"],
      params["w2_t"], params["b2"])
    return out[:B]


# -----------------------------------------------------------------------------
# Deterministic parameter init (PyTorch-style uniform(-1/sqrt(H), 1/sqrt(H))).
# -----------------------------------------------------------------------------
def init_params(key, input_size, lstm_size, num_class):
    H, I, C = lstm_size, input_size, num_class
    ks = jax.random.split(key, 10)
    s = 1.0 / np.sqrt(H)
    u = lambda k, shp: jax.random.uniform(k, shp, jnp.float32, -s, s)

    w_ih = u(ks[0], (4 * H, I))     # PyTorch layout (4H, I), rows [i, f, g, o]
    w_hh = u(ks[1], (4 * H, H))
    b_ih = u(ks[2], (4 * H,))
    b_hh = u(ks[3], (4 * H,))
    w1 = u(ks[4], (H, H))
    b1 = u(ks[5], (H,))
    w2 = u(ks[6], (C, H))
    b2 = u(ks[7], (C,))

    return {
        "wih_t": w_ih.T,                             # (I, 4H)
        "b": (b_ih + b_hh).reshape(1, 4 * H),        # (1, 4H)
        "whh_i_t": w_hh[0 * H:1 * H, :].T,           # (H, H)
        "whh_f_t": w_hh[1 * H:2 * H, :].T,
        "whh_g_t": w_hh[2 * H:3 * H, :].T,
        "whh_o_t": w_hh[3 * H:4 * H, :].T,
        "w1_t": w1.T,                                # (H, H)
        "b1": b1.reshape(1, H),
        "w2_t": w2.T,                                # (H, C)
        "b2": b2.reshape(1, C),
    }


# -----------------------------------------------------------------------------
# Pure-JAX reference (same math, no Pallas) for correctness check.
# -----------------------------------------------------------------------------
def reference_forward(x, params):
    B, T, I = x.shape
    H = params["whh_i_t"].shape[0]
    C = params["w2_t"].shape[1]
    whh_t = jnp.concatenate([params["whh_i_t"], params["whh_f_t"],
                             params["whh_g_t"], params["whh_o_t"]], axis=1)
    h = jnp.zeros((B, H), jnp.float32)
    c = jnp.zeros((B, H), jnp.float32)
    acc = jnp.zeros((B, C), jnp.float32)
    for t in range(T):
        gates = x[:, t, :] @ params["wih_t"] + h @ whh_t + params["b"]
        i_g = jax.nn.sigmoid(gates[:, 0 * H:1 * H])
        f_g = jax.nn.sigmoid(gates[:, 1 * H:2 * H])
        g_g = jnp.tanh(gates[:, 2 * H:3 * H])
        o_g = jax.nn.sigmoid(gates[:, 3 * H:4 * H])
        c = f_g * c + i_g * g_g
        h = o_g * jnp.tanh(c)
        y = jnp.maximum(h, 0.0)
        y = jnp.maximum(y @ params["w1_t"] + params["b1"], 0.0)
        y = y @ params["w2_t"] + params["b2"]
        acc = acc + y
    return acc


if __name__ == "__main__":
    INPUT_SIZE = 16
    LSTM_SIZE = 32
    NUM_OF_CLASS = 8
    B, T = 2, 8

    key = jax.random.PRNGKey(0)
    k_x, k_p = jax.random.split(key)
    x = jax.random.normal(k_x, (B, T, INPUT_SIZE), dtype=jnp.float32)
    params = init_params(k_p, INPUT_SIZE, LSTM_SIZE, NUM_OF_CLASS)

    out = lstm_baseline_forward(x, params)
    out = jax.block_until_ready(out)

    ref = reference_forward(x, params)
    np.testing.assert_allclose(np.asarray(out), np.asarray(ref),
                               rtol=1e-3, atol=1e-3)
    assert out.shape == (B, NUM_OF_CLASS)
    print("KERNEL_OK")
</pallas_src>

<mosaic_0001>
module attributes {stable_mosaic.version = 11 : i64} {
  func.func @lstm_baseline_kernel(%arg0: memref<8x8x16xf32, #tpu.memory_space<vmem>>, %arg1: memref<16x128xf32, #tpu.memory_space<vmem>>, %arg2: memref<1x128xf32, #tpu.memory_space<vmem>>, %arg3: memref<32x32xf32, #tpu.memory_space<vmem>>, %arg4: memref<32x32xf32, #tpu.memory_space<vmem>>, %arg5: memref<32x32xf32, #tpu.memory_space<vmem>>, %arg6: memref<32x32xf32, #tpu.memory_space<vmem>>, %arg7: memref<32x32xf32, #tpu.memory_space<vmem>>, %arg8: memref<1x32xf32, #tpu.memory_space<vmem>>, %arg9: memref<32x8xf32, #tpu.memory_space<vmem>>, %arg10: memref<1x8xf32, #tpu.memory_space<vmem>>, %arg11: memref<8x8xf32, #tpu.memory_space<vmem>>) attributes {dimension_semantics = [], scalar_prefetch = 0 : i64, scratch_operands = 0 : i64, tpu.core_type = #tpu.core_type<tc>} {
    %c0 = arith.constant 0 : index
    %c0_0 = arith.constant 0 : index
    %c0_1 = arith.constant 0 : index
    %0 = vector.load %arg0[%c0, %c0_0, %c0_1] : memref<8x8x16xf32, #tpu.memory_space<vmem>>, vector<8x8x16xf32>
    %1 = vector.shape_cast %0 : vector<8x8x16xf32> to vector<64x16xf32>
    %c0_2 = arith.constant 0 : index
    %c0_3 = arith.constant 0 : index
    %2 = vector.load %arg1[%c0_2, %c0_3] : memref<16x128xf32, #tpu.memory_space<vmem>>, vector<16x128xf32>
    %cst = arith.constant dense<0.000000e+00> : vector<64x128xf32>
    %3 = tpu.matmul %1, %2, %cst {dimension_numbers = #tpu.dot_dimension_numbers<[1], [0], [0], [1], [0, 0, 1, 1], [], []>} : vector<64x16xf32>, vector<16x128xf32>, vector<64x128xf32> -> vector<64x128xf32>
    %c0_4 = arith.constant 0 : index
    %c0_5 = arith.constant 0 : index
    %4 = vector.load %arg2[%c0_4, %c0_5] : memref<1x128xf32, #tpu.memory_space<vmem>>, vector<1x128xf32>
    %5 = vector.broadcast %4 : vector<1x128xf32> to vector<64x128xf32>
    %6 = arith.addf %3, %5 : vector<64x128xf32>
    %7 = vector.extract_strided_slice %6 {offsets = [0, 0], sizes = [64, 32], strides = [1, 1]} : vector<64x128xf32> to vector<64x32xf32>
    %8 = vector.extract_strided_slice %6 {offsets = [0, 32], sizes = [64, 32], strides = [1, 1]} : vector<64x128xf32> to vector<64x32xf32>
    %9 = vector.extract_strided_slice %6 {offsets = [0, 64], sizes = [64, 32], strides = [1, 1]} : vector<64x128xf32> to vector<64x32xf32>
    %10 = vector.extract_strided_slice %6 {offsets = [0, 96], sizes = [64, 32], strides = [1, 1]} : vector<64x128xf32> to vector<64x32xf32>
    %c0_6 = arith.constant 0 : index
    %c0_7 = arith.constant 0 : index
    %11 = vector.load %arg3[%c0_6, %c0_7] : memref<32x32xf32, #tpu.memory_space<vmem>>, vector<32x32xf32>
    %c0_8 = arith.constant 0 : index
    %c0_9 = arith.constant 0 : index
    %12 = vector.load %arg4[%c0_8, %c0_9] : memref<32x32xf32, #tpu.memory_space<vmem>>, vector<32x32xf32>
    %c0_10 = arith.constant 0 : index
    %c0_11 = arith.constant 0 : index
    %13 = vector.load %arg5[%c0_10, %c0_11] : memref<32x32xf32, #tpu.memory_space<vmem>>, vector<32x32xf32>
    %c0_12 = arith.constant 0 : index
    %c0_13 = arith.constant 0 : index
    %14 = vector.load %arg6[%c0_12, %c0_13] : memref<32x32xf32, #tpu.memory_space<vmem>>, vector<32x32xf32>
    %cst_14 = arith.constant 0.000000e+00 : f32
    %15 = vector.broadcast %cst_14 : f32 to vector<8x32xf32>
    %cst_15 = arith.constant 0.000000e+00 : f32
    %16 = vector.broadcast %cst_15 : f32 to vector<8x32xf32>
    %17 = vector.extract_strided_slice %7 {offsets = [0, 0], sizes = [8, 32], strides = [1, 1]} : vector<64x32xf32> to vector<8x32xf32>
    %cst_16 = arith.constant dense<0.000000e+00> : vector<8x32xf32>
    %18 = tpu.matmul %15, %11, %cst_16 {dimension_numbers = #tpu.dot_dimension_numbers<[1], [0], [0], [1], [0, 0, 1, 1], [], []>} : vector<8x32xf32>, vector<32x32xf32>, vector<8x32xf32> -> vector<8x32xf32>
    %19 = arith.addf %17, %18 : vector<8x32xf32>
    %20 = arith.negf %19 : vector<8x32xf32>
    %21 = math.exp %20 : vector<8x32xf32>
    %cst_17 = arith.constant 1.000000e+00 : f32
    %22 = vector.broadcast %cst_17 : f32 to vector<8x32xf32>
    %23 = arith.addf %22, %21 : vector<8x32xf32>
    %24 = arith.divf %22, %23 : vector<8x32xf32>
    %25 = vector.extract_strided_slice %8 {offsets = [0, 0], sizes = [8, 32], strides = [1, 1]} : vector<64x32xf32> to vector<8x32xf32>
    %cst_18 = arith.constant dense<0.000000e+00> : vector<8x32xf32>
    %26 = tpu.matmul %15, %12, %cst_18 {dimension_numbers = #tpu.dot_dimension_numbers<[1], [0], [0], [1], [0, 0, 1, 1], [], []>} : vector<8x32xf32>, vector<32x32xf32>, vector<8x32xf32> -> vector<8x32xf32>
    %27 = arith.addf %25, %26 : vector<8x32xf32>
    %28 = arith.negf %27 : vector<8x32xf32>
    %29 = math.exp %28 : vector<8x32xf32>
    %cst_19 = arith.constant 1.000000e+00 : f32
    %30 = vector.broadcast %cst_19 : f32 to vector<8x32xf32>
    %31 = arith.addf %30, %29 : vector<8x32xf32>
    %32 = arith.divf %30, %31 : vector<8x32xf32>
    %33 = vector.extract_strided_slice %9 {offsets = [0, 0], sizes = [8, 32], strides = [1, 1]} : vector<64x32xf32> to vector<8x32xf32>
    %cst_20 = arith.constant dense<0.000000e+00> : vector<8x32xf32>
    %34 = tpu.matmul %15, %13, %cst_20 {dimension_numbers = #tpu.dot_dimension_numbers<[1], [0], [0], [1], [0, 0, 1, 1], [], []>} : vector<8x32xf32>, vector<32x32xf32>, vector<8x32xf32> -> vector<8x32xf32>
    %35 = arith.addf %33, %34 : vector<8x32xf32>
    %36 = math.tanh %35 : vector<8x32xf32>
    %37 = vector.extract_strided_slice %10 {offsets = [0, 0], sizes = [8, 32], strides = [1, 1]} : vector<64x32xf32> to vector<8x32xf32>
    %cst_21 = arith.constant dense<0.000000e+00> : vector<8x32xf32>
    %38 = tpu.matmul %15, %14, %cst_21 {dimension_numbers = #tpu.dot_dimension_numbers<[1], [0], [0], [1], [0, 0, 1, 1], [], []>} : vector<8x32xf32>, vector<32x32xf32>, vector<8x32xf32> -> vector<8x32xf32>
    %39 = arith.addf %37, %38 : vector<8x32xf32>
    %40 = arith.negf %39 : vector<8x32xf32>
    %41 = math.exp %40 : vector<8x32xf32>
    %cst_22 = arith.constant 1.000000e+00 : f32
    %42 = vector.broadcast %cst_22 : f32 to vector<8x32xf32>
    %43 = arith.addf %42, %41 : vector<8x32xf32>
    %44 = arith.divf %42, %43 : vector<8x32xf32>
    %45 = arith.mulf %32, %16 : vector<8x32xf32>
    %46 = arith.mulf %24, %36 : vector<8x32xf32>
    %47 = arith.addf %45, %46 : vector<8x32xf32>
    %48 = math.tanh %47 : vector<8x32xf32>
    %49 = arith.mulf %44, %48 : vector<8x32xf32>
    %50 = vector.extract_strided_slice %7 {offsets = [8, 0], sizes = [8, 32], strides = [1, 1]} : vector<64x32xf32> to vector<8x32xf32>
    %cst_23 = arith.constant dense<0.000000e+00> : vector<8x32xf32>
    %51 = tpu.matmul %49, %11, %cst_23 {dimension_numbers = #tpu.dot_dimension_numbers<[1], [0], [0], [1], [0, 0, 1, 1], [], []>} : vector<8x32xf32>, vector<32x32xf32>, vector<8x32xf32> -> vector<8x32xf32>
    %52 = arith.addf %50, %51 : vector<8x32xf32>
    %53 = arith.negf %52 : vector<8x32xf32>
    %54 = math.exp %53 : vector<8x32xf32>
    %cst_24 = arith.constant 1.000000e+00 : f32
    %55 = vector.broadcast %cst_24 : f32 to vector<8x32xf32>
    %56 = arith.addf %55, %54 : vector<8x32xf32>
    %57 = arith.divf %55, %56 : vector<8x32xf32>
    %58 = vector.extract_strided_slice %8 {offsets = [8, 0], sizes = [8, 32], strides = [1, 1]} : vector<64x32xf32> to vector<8x32xf32>
    %cst_25 = arith.constant dense<0.000000e+00> : vector<8x32xf32>
    %59 = tpu.matmul %49, %12, %cst_25 {dimension_numbers = #tpu.dot_dimension_numbers<[1], [0], [0], [1], [0, 0, 1, 1], [], []>} : vector<8x32xf32>, vector<32x32xf32>, vector<8x32xf32> -> vector<8x32xf32>
    %60 = arith.addf %58, %59 : vector<8x32xf32>
    %61 = arith.negf %60 : vector<8x32xf32>
    %62 = math.exp %61 : vector<8x32xf32>
    %cst_26 = arith.constant 1.000000e+00 : f32
    %63 = vector.broadcast %cst_26 : f32 to vector<8x32xf32>
    %64 = arith.addf %63, %62 : vector<8x32xf32>
    %65 = arith.divf %63, %64 : vector<8x32xf32>
    %66 = vector.extract_strided_slice %9 {offsets = [8, 0], sizes = [8, 32], strides = [1, 1]} : vector<64x32xf32> to vector<8x32xf32>
    %cst_27 = arith.constant dense<0.000000e+00> : vector<8x32xf32>
    %67 = tpu.matmul %49, %13, %cst_27 {dimension_numbers = #tpu.dot_dimension_numbers<[1], [0], [0], [1], [0, 0, 1, 1], [], []>} : vector<8x32xf32>, vector<32x32xf32>, vector<8x32xf32> -> vector<8x32xf32>
    %68 = arith.addf %66, %67 : vector<8x32xf32>
    %69 = math.tanh %68 : vector<8x32xf32>
    %70 = vector.extract_strided_slice %10 {offsets = [8, 0], sizes = [8, 32], strides = [1, 1]} : vector<64x32xf32> to vector<8x32xf32>
    %cst_28 = arith.constant dense<0.000000e+00> : vector<8x32xf32>
    %71 = tpu.matmul %49, %14, %cst_28 {dimension_numbers = #tpu.dot_dimension_numbers<[1], [0], [0], [1], [0, 0, 1, 1], [], []>} : vector<8x32xf32>, vector<32x32xf32>, vector<8x32xf32> -> vector<8x32xf32>
    %72 = arith.addf %70, %71 : vector<8x32xf32>
    %73 = arith.negf %72 : vector<8x32xf32>
    %74 = math.exp %73 : vector<8x32xf32>
    %cst_29 = arith.constant 1.000000e+00 : f32
    %75 = vector.broadcast %cst_29 : f32 to vector<8x32xf32>
    %76 = arith.addf %75, %74 : vector<8x32xf32>
    %77 = arith.divf %75, %76 : vector<8x32xf32>
    %78 = arith.mulf %65, %47 : vector<8x32xf32>
    %79 = arith.mulf %57, %69 : vector<8x32xf32>
    %80 = arith.addf %78, %79 : vector<8x32xf32>
    %81 = math.tanh %80 : vector<8x32xf32>
    %82 = arith.mulf %77, %81 : vector<8x32xf32>
    %83 = vector.extract_strided_slice %7 {offsets = [16, 0], sizes = [8, 32], strides = [1, 1]} : vector<64x32xf32> to vector<8x32xf32>
    %cst_30 = arith.constant dense<0.000000e+00> : vector<8x32xf32>
    %84 = tpu.matmul %82, %11, %cst_30 {dimension_numbers = #tpu.dot_dimension_numbers<[1], [0], [0], [1], [0, 0, 1, 1], [], []>} : vector<8x32xf32>, vector<32x32xf32>, vector<8x32xf32> -> vector<8x32xf32>
    %85 = arith.addf %83, %84 : vector<8x32xf32>
    %86 = arith.negf %85 : vector<8x32xf32>
    %87 = math.exp %86 : vector<8x32xf32>
    %cst_31 = arith.constant 1.000000e+00 : f32
    %88 = vector.broadcast %cst_31 : f32 to vector<8x32xf32>
    %89 = arith.addf %88, %87 : vector<8x32xf32>
    %90 = arith.divf %88, %89 : vector<8x32xf32>
    %91 = vector.extract_strided_slice %8 {offsets = [16, 0], sizes = [8, 32], strides = [1, 1]} : vector<64x32xf32> to vector<8x32xf32>
    %cst_32 = arith.constant dense<0.000000e+00> : vector<8x32xf32>
    %92 = tpu.matmul %82, %12, %cst_32 {dimension_numbers = #tpu.dot_dimension_numbers<[1], [0], [0], [1], [0, 0, 1, 1], [], []>} : vector<8x32xf32>, vector<32x32xf32>, vector<8x32xf32> -> vector<8x32xf32>
    %93 = arith.addf %91, %92 : vector<8x32xf32>
    %94 = arith.negf %93 : vector<8x32xf32>
    %95 = math.exp %94 : vector<8x32xf32>
    %cst_33 = arith.constant 1.000000e+00 : f32
    %96 = vector.broadcast %cst_33 : f32 to vector<8x32xf32>
    %97 = arith.addf %96, %95 : vector<8x32xf32>
    %98 = arith.divf %96, %97 : vector<8x32xf32>
    %99 = vector.extract_strided_slice %9 {offsets = [16, 0], sizes = [8, 32], strides = [1, 1]} : vector<64x32xf32> to vector<8x32xf32>
    %cst_34 = arith.constant dense<0.000000e+00> : vector<8x32xf32>
    %100 = tpu.matmul %82, %13, %cst_34 {dimension_numbers = #tpu.dot_dimension_numbers<[1], [0], [0], [1], [0, 0, 1, 1], [], []>} : vector<8x32xf32>, vector<32x32xf32>, vector<8x32xf32> -> vector<8x32xf32>
    %101 = arith.addf %99, %100 : vector<8x32xf32>
    %102 = math.tanh %101 : vector<8x32xf32>
    %103 = vector.extract_strided_slice %10 {offsets = [16, 0], sizes = [8, 32], strides = [1, 1]} : vector<64x32xf32> to vector<8x32xf32>
    %cst_35 = arith.constant dense<0.000000e+00> : vector<8x32xf32>
    %104 = tpu.matmul %82, %14, %cst_35 {dimension_numbers = #tpu.dot_dimension_numbers<[1], [0], [0], [1], [0, 0, 1, 1], [], []>} : vector<8x32xf32>, vector<32x32xf32>, vector<8x32xf32> -> vector<8x32xf32>
    %105 = arith.addf %103, %104 : vector<8x32xf32>
    %106 = arith.negf %105 : vector<8x32xf32>
    %107 = math.exp %106 : vector<8x32xf32>
    %cst_36 = arith.constant 1.000000e+00 : f32
    %108 = vector.broadcast %cst_36 : f32 to vector<8x32xf32>
    %109 = arith.addf %108, %107 : vector<8x32xf32>
    %110 = arith.divf %108, %109 : vector<8x32xf32>
    %111 = arith.mulf %98, %80 : vector<8x32xf32>
    %112 = arith.mulf %90, %102 : vector<8x32xf32>
    %113 = arith.addf %111, %112 : vector<8x32xf32>
    %114 = math.tanh %113 : vector<8x32xf32>
    %115 = arith.mulf %110, %114 : vector<8x32xf32>
    %116 = vector.extract_strided_slice %7 {offsets = [24, 0], sizes = [8, 32], strides = [1, 1]} : vector<64x32xf32> to vector<8x32xf32>
    %cst_37 = arith.constant dense<0.000000e+00> : vector<8x32xf32>
    %117 = tpu.matmul %115, %11, %cst_37 {dimension_numbers = #tpu.dot_dimension_numbers<[1], [0], [0], [1], [0, 0, 1, 1], [], []>} : vector<8x32xf32>, vector<32x32xf32>, vector<8x32xf32> -> vector<8x32xf32>
    %118 = arith.addf %116, %117 : vector<8x32xf32>
    %119 = arith.negf %118 : vector<8x32xf32>
    %120 = math.exp %119 : vector<8x32xf32>
    %cst_38 = arith.constant 1.000000e+00 : f32
    %121 = vector.broadcast %cst_38 : f32 to vector<8x32xf32>
    %122 = arith.addf %121, %120 : vector<8x32xf32>
    %123 = arith.divf %121, %122 : vector<8x32xf32>
    %124 = vector.extract_strided_slice %8 {offsets = [24, 0], sizes = [8, 32], strides = [1, 1]} : vector<64x32xf32> to vector<8x32xf32>
    %cst_39 = arith.constant dense<0.000000e+00> : vector<8x32xf32>
    %125 = tpu.matmul %115, %12, %cst_39 {dimension_numbers = #tpu.dot_dimension_numbers<[1], [0], [0], [1], [0, 0, 1, 1], [], []>} : vector<8x32xf32>, vector<32x32xf32>, vector<8x32xf32> -> vector<8x32xf32>
    %126 = arith.addf %124, %125 : vector<8x32xf32>
    %127 = arith.negf %126 : vector<8x32xf32>
    %128 = math.exp %127 : vector<8x32xf32>
    %cst_40 = arith.constant 1.000000e+00 : f32
    %129 = vector.broadcast %cst_40 : f32 to vector<8x32xf32>
    %130 = arith.addf %129, %128 : vector<8x32xf32>
    %131 = arith.divf %129, %130 : vector<8x32xf32>
    %132 = vector.extract_strided_slice %9 {offsets = [24, 0], sizes = [8, 32], strides = [1, 1]} : vector<64x32xf32> to vector<8x32xf32>
    %cst_41 = arith.constant dense<0.000000e+00> : vector<8x32xf32>
    %133 = tpu.matmul %115, %13, %cst_41 {dimension_numbers = #tpu.dot_dimension_numbers<[1], [0], [0], [1], [0, 0, 1, 1], [], []>} : vector<8x32xf32>, vector<32x32xf32>, vector<8x32xf32> -> vector<8x32xf32>
    %134 = arith.addf %132, %133 : vector<8x32xf32>
    %135 = math.tanh %134 : vector<8x32xf32>
    %136 = vector.extract_strided_slice %10 {offsets = [24, 0], sizes = [8, 32], strides = [1, 1]} : vector<64x32xf32> to vector<8x32xf32>
    %cst_42 = arith.constant dense<0.000000e+00> : vector<8x32xf32>
    %137 = tpu.matmul %115, %14, %cst_42 {dimension_numbers = #tpu.dot_dimension_numbers<[1], [0], [0], [1], [0, 0, 1, 1], [], []>} : vector<8x32xf32>, vector<32x32xf32>, vector<8x32xf32> -> vector<8x32xf32>
    %138 = arith.addf %136, %137 : vector<8x32xf32>
    %139 = arith.negf %138 : vector<8x32xf32>
    %140 = math.exp %139 : vector<8x32xf32>
    %cst_43 = arith.constant 1.000000e+00 : f32
    %141 = vector.broadcast %cst_43 : f32 to vector<8x32xf32>
    %142 = arith.addf %141, %140 : vector<8x32xf32>
    %143 = arith.divf %141, %142 : vector<8x32xf32>
    %144 = arith.mulf %131, %113 : vector<8x32xf32>
    %145 = arith.mulf %123, %135 : vector<8x32xf32>
    %146 = arith.addf %144, %145 : vector<8x32xf32>
    %147 = math.tanh %146 : vector<8x32xf32>
    %148 = arith.mulf %143, %147 : vector<8x32xf32>
    %149 = vector.extract_strided_slice %7 {offsets = [32, 0], sizes = [8, 32], strides = [1, 1]} : vector<64x32xf32> to vector<8x32xf32>
    %cst_44 = arith.constant dense<0.000000e+00> : vector<8x32xf32>
    %150 = tpu.matmul %148, %11, %cst_44 {dimension_numbers = #tpu.dot_dimension_numbers<[1], [0], [0], [1], [0, 0, 1, 1], [], []>} : vector<8x32xf32>, vector<32x32xf32>, vector<8x32xf32> -> vector<8x32xf32>
    %151 = arith.addf %149, %150 : vector<8x32xf32>
    %152 = arith.negf %151 : vector<8x32xf32>
    %153 = math.exp %152 : vector<8x32xf32>
    %cst_45 = arith.constant 1.000000e+00 : f32
    %154 = vector.broadcast %cst_45 : f32 to vector<8x32xf32>
    %155 = arith.addf %154, %153 : vector<8x32xf32>
    %156 = arith.divf %154, %155 : vector<8x32xf32>
    %157 = vector.extract_strided_slice %8 {offsets = [32, 0], sizes = [8, 32], strides = [1, 1]} : vector<64x32xf32> to vector<8x32xf32>
    %cst_46 = arith.constant dense<0.000000e+00> : vector<8x32xf32>
    %158 = tpu.matmul %148, %12, %cst_46 {dimension_numbers = #tpu.dot_dimension_numbers<[1], [0], [0], [1], [0, 0, 1, 1], [], []>} : vector<8x32xf32>, vector<32x32xf32>, vector<8x32xf32> -> vector<8x32xf32>
    %159 = arith.addf %157, %158 : vector<8x32xf32>
    %160 = arith.negf %159 : vector<8x32xf32>
    %161 = math.exp %160 : vector<8x32xf32>
    %cst_47 = arith.constant 1.000000e+00 : f32
    %162 = vector.broadcast %cst_47 : f32 to vector<8x32xf32>
    %163 = arith.addf %162, %161 : vector<8x32xf32>
    %164 = arith.divf %162, %163 : vector<8x32xf32>
    %165 = vector.extract_strided_slice %9 {offsets = [32, 0], sizes = [8, 32], strides = [1, 1]} : vector<64x32xf32> to vector<8x32xf32>
    %cst_48 = arith.constant dense<0.000000e+00> : vector<8x32xf32>
    %166 = tpu.matmul %148, %13, %cst_48 {dimension_numbers = #tpu.dot_dimension_numbers<[1], [0], [0], [1], [0, 0, 1, 1], [], []>} : vector<8x32xf32>, vector<32x32xf32>, vector<8x32xf32> -> vector<8x32xf32>
    %167 = arith.addf %165, %166 : vector<8x32xf32>
    %168 = math.tanh %167 : vector<8x32xf32>
    %169 = vector.extract_strided_slice %10 {offsets = [32, 0], sizes = [8, 32], strides = [1, 1]} : vector<64x32xf32> to vector<8x32xf32>
    %cst_49 = arith.constant dense<0.000000e+00> : vector<8x32xf32>
    %170 = tpu.matmul %148, %14, %cst_49 {dimension_numbers = #tpu.dot_dimension_numbers<[1], [0], [0], [1], [0, 0, 1, 1], [], []>} : vector<8x32xf32>, vector<32x32xf32>, vector<8x32xf32> -> vector<8x32xf32>
    %171 = arith.addf %169, %170 : vector<8x32xf32>
    %172 = arith.negf %171 : vector<8x32xf32>
    %173 = math.exp %172 : vector<8x32xf32>
    %cst_50 = arith.constant 1.000000e+00 : f32
    %174 = vector.broadcast %cst_50 : f32 to vector<8x32xf32>
    %175 = arith.addf %174, %173 : vector<8x32xf32>
    %176 = arith.divf %174, %175 : vector<8x32xf32>
    %177 = arith.mulf %164, %146 : vector<8x32xf32>
    %178 = arith.mulf %156, %168 : vector<8x32xf32>
    %179 = arith.addf %177, %178 : vector<8x32xf32>
    %180 = math.tanh %179 : vector<8x32xf32>
    %181 = arith.mulf %176, %180 : vector<8x32xf32>
    %182 = vector.extract_strided_slice %7 {offsets = [40, 0], sizes = [8, 32], strides = [1, 1]} : vector<64x32xf32> to vector<8x32xf32>
    %cst_51 = arith.constant dense<0.000000e+00> : vector<8x32xf32>
    %183 = tpu.matmul %181, %11, %cst_51 {dimension_numbers = #tpu.dot_dimension_numbers<[1], [0], [0], [1], [0, 0, 1, 1], [], []>} : vector<8x32xf32>, vector<32x32xf32>, vector<8x32xf32> -> vector<8x32xf32>
    %184 = arith.addf %182, %183 : vector<8x32xf32>
    %185 = arith.negf %184 : vector<8x32xf32>
    %186 = math.exp %185 : vector<8x32xf32>
    %cst_52 = arith.constant 1.000000e+00 : f32
    %187 = vector.broadcast %cst_52 : f32 to vector<8x32xf32>
    %188 = arith.addf %187, %186 : vector<8x32xf32>
    %189 = arith.divf %187, %188 : vector<8x32xf32>
    %190 = vector.extract_strided_slice %8 {offsets = [40, 0], sizes = [8, 32], strides = [1, 1]} : vector<64x32xf32> to vector<8x32xf32>
    %cst_53 = arith.constant dense<0.000000e+00> : vector<8x32xf32>
    %191 = tpu.matmul %181, %12, %cst_53 {dimension_numbers = #tpu.dot_dimension_numbers<[1], [0], [0], [1], [0, 0, 1, 1], [], []>} : vector<8x32xf32>, vector<32x32xf32>, vector<8x32xf32> -> vector<8x32xf32>
    %192 = arith.addf %190, %191 : vector<8x32xf32>
    %193 = arith.negf %192 : vector<8x32xf32>
    %194 = math.exp %193 : vector<8x32xf32>
    %cst_54 = arith.constant 1.000000e+00 : f32
    %195 = vector.broadcast %cst_54 : f32 to vector<8x32xf32>
    %196 = arith.addf %195, %194 : vector<8x32xf32>
    %197 = arith.divf %195, %196 : vector<8x32xf32>
    %198 = vector.extract_strided_slice %9 {offsets = [40, 0], sizes = [8, 32], strides = [1, 1]} : vector<64x32xf32> to vector<8x32xf32>
    %cst_55 = arith.constant dense<0.000000e+00> : vector<8x32xf32>
    %199 = tpu.matmul %181, %13, %cst_55 {dimension_numbers = #tpu.dot_dimension_numbers<[1], [0], [0], [1], [0, 0, 1, 1], [], []>} : vector<8x32xf32>, vector<32x32xf32>, vector<8x32xf32> -> vector<8x32xf32>
    %200 = arith.addf %198, %199 : vector<8x32xf32>
    %201 = math.tanh %200 : vector<8x32xf32>
    %202 = vector.extract_strided_slice %10 {offsets = [40, 0], sizes = [8, 32], strides = [1, 1]} : vector<64x32xf32> to vector<8x32xf32>
    %cst_56 = arith.constant dense<0.000000e+00> : vector<8x32xf32>
    %203 = tpu.matmul %181, %14, %cst_56 {dimension_numbers = #tpu.dot_dimension_numbers<[1], [0], [0], [1], [0, 0, 1, 1], [], []>} : vector<8x32xf32>, vector<32x32xf32>, vector<8x32xf32> -> vector<8x32xf32>
    %204 = arith.addf %202, %203 : vector<8x32xf32>
    %205 = arith.negf %204 : vector<8x32xf32>
    %206 = math.exp %205 : vector<8x32xf32>
    %cst_57 = arith.constant 1.000000e+00 : f32
    %207 = vector.broadcast %cst_57 : f32 to vector<8x32xf32>
    %208 = arith.addf %207, %206 : vector<8x32xf32>
    %209 = arith.divf %207, %208 : vector<8x32xf32>
    %210 = arith.mulf %197, %179 : vector<8x32xf32>
    %211 = arith.mulf %189, %201 : vector<8x32xf32>
    %212 = arith.addf %210, %211 : vector<8x32xf32>
    %213 = math.tanh %212 : vector<8x32xf32>
    %214 = arith.mulf %209, %213 : vector<8x32xf32>
    %215 = vector.extract_strided_slice %7 {offsets = [48, 0], sizes = [8, 32], strides = [1, 1]} : vector<64x32xf32> to vector<8x32xf32>
    %cst_58 = arith.constant dense<0.000000e+00> : vector<8x32xf32>
    %216 = tpu.matmul %214, %11, %cst_58 {dimension_numbers = #tpu.dot_dimension_numbers<[1], [0], [0], [1], [0, 0, 1, 1], [], []>} : vector<8x32xf32>, vector<32x32xf32>, vector<8x32xf32> -> vector<8x32xf32>
    %217 = arith.addf %215, %216 : vector<8x32xf32>
    %218 = arith.negf %217 : vector<8x32xf32>
    %219 = math.exp %218 : vector<8x32xf32>
    %cst_59 = arith.constant 1.000000e+00 : f32
    %220 = vector.broadcast %cst_59 : f32 to vector<8x32xf32>
    %221 = arith.addf %220, %219 : vector<8x32xf32>
    %222 = arith.divf %220, %221 : vector<8x32xf32>
    %223 = vector.extract_strided_slice %8 {offsets = [48, 0], sizes = [8, 32], strides = [1, 1]} : vector<64x32xf32> to vector<8x32xf32>
    %cst_60 = arith.constant dense<0.000000e+00> : vector<8x32xf32>
    %224 = tpu.matmul %214, %12, %cst_60 {dimension_numbers = #tpu.dot_dimension_numbers<[1], [0], [0], [1], [0, 0, 1, 1], [], []>} : vector<8x32xf32>, vector<32x32xf32>, vector<8x32xf32> -> vector<8x32xf32>
    %225 = arith.addf %223, %224 : vector<8x32xf32>
    %226 = arith.negf %225 : vector<8x32xf32>
    %227 = math.exp %226 : vector<8x32xf32>
    %cst_61 = arith.constant 1.000000e+00 : f32
    %228 = vector.broadcast %cst_61 : f32 to vector<8x32xf32>
    %229 = arith.addf %228, %227 : vector<8x32xf32>
    %230 = arith.divf %228, %229 : vector<8x32xf32>
    %231 = vector.extract_strided_slice %9 {offsets = [48, 0], sizes = [8, 32], strides = [1, 1]} : vector<64x32xf32> to vector<8x32xf32>
    %cst_62 = arith.constant dense<0.000000e+00> : vector<8x32xf32>
    %232 = tpu.matmul %214, %13, %cst_62 {dimension_numbers = #tpu.dot_dimension_numbers<[1], [0], [0], [1], [0, 0, 1, 1], [], []>} : vector<8x32xf32>, vector<32x32xf32>, vector<8x32xf32> -> vector<8x32xf32>
    %233 = arith.addf %231, %232 : vector<8x32xf32>
    %234 = math.tanh %233 : vector<8x32xf32>
    %235 = vector.extract_strided_slice %10 {offsets = [48, 0], sizes = [8, 32], strides = [1, 1]} : vector<64x32xf32> to vector<8x32xf32>
    %cst_63 = arith.constant dense<0.000000e+00> : vector<8x32xf32>
    %236 = tpu.matmul %214, %14, %cst_63 {dimension_numbers = #tpu.dot_dimension_numbers<[1], [0], [0], [1], [0, 0, 1, 1], [], []>} : vector<8x32xf32>, vector<32x32xf32>, vector<8x32xf32> -> vector<8x32xf32>
    %237 = arith.addf %235, %236 : vector<8x32xf32>
    %238 = arith.negf %237 : vector<8x32xf32>
    %239 = math.exp %238 : vector<8x32xf32>
    %cst_64 = arith.constant 1.000000e+00 : f32
    %240 = vector.broadcast %cst_64 : f32 to vector<8x32xf32>
    %241 = arith.addf %240, %239 : vector<8x32xf32>
    %242 = arith.divf %240, %241 : vector<8x32xf32>
    %243 = arith.mulf %230, %212 : vector<8x32xf32>
    %244 = arith.mulf %222, %234 : vector<8x32xf32>
    %245 = arith.addf %243, %244 : vector<8x32xf32>
    %246 = math.tanh %245 : vector<8x32xf32>
    %247 = arith.mulf %242, %246 : vector<8x32xf32>
    %248 = vector.extract_strided_slice %7 {offsets = [56, 0], sizes = [8, 32], strides = [1, 1]} : vector<64x32xf32> to vector<8x32xf32>
    %cst_65 = arith.constant dense<0.000000e+00> : vector<8x32xf32>
    %249 = tpu.matmul %247, %11, %cst_65 {dimension_numbers = #tpu.dot_dimension_numbers<[1], [0], [0], [1], [0, 0, 1, 1], [], []>} : vector<8x32xf32>, vector<32x32xf32>, vector<8x32xf32> -> vector<8x32xf32>
    %250 = arith.addf %248, %249 : vector<8x32xf32>
    %251 = arith.negf %250 : vector<8x32xf32>
    %252 = math.exp %251 : vector<8x32xf32>
    %cst_66 = arith.constant 1.000000e+00 : f32
    %253 = vector.broadcast %cst_66 : f32 to vector<8x32xf32>
    %254 = arith.addf %253, %252 : vector<8x32xf32>
    %255 = arith.divf %253, %254 : vector<8x32xf32>
    %256 = vector.extract_strided_slice %8 {offsets = [56, 0], sizes = [8, 32], strides = [1, 1]} : vector<64x32xf32> to vector<8x32xf32>
    %cst_67 = arith.constant dense<0.000000e+00> : vector<8x32xf32>
    %257 = tpu.matmul %247, %12, %cst_67 {dimension_numbers = #tpu.dot_dimension_numbers<[1], [0], [0], [1], [0, 0, 1, 1], [], []>} : vector<8x32xf32>, vector<32x32xf32>, vector<8x32xf32> -> vector<8x32xf32>
    %258 = arith.addf %256, %257 : vector<8x32xf32>
    %259 = arith.negf %258 : vector<8x32xf32>
    %260 = math.exp %259 : vector<8x32xf32>
    %cst_68 = arith.constant 1.000000e+00 : f32
    %261 = vector.broadcast %cst_68 : f32 to vector<8x32xf32>
    %262 = arith.addf %261, %260 : vector<8x32xf32>
    %263 = arith.divf %261, %262 : vector<8x32xf32>
    %264 = vector.extract_strided_slice %9 {offsets = [56, 0], sizes = [8, 32], strides = [1, 1]} : vector<64x32xf32> to vector<8x32xf32>
    %cst_69 = arith.constant dense<0.000000e+00> : vector<8x32xf32>
    %265 = tpu.matmul %247, %13, %cst_69 {dimension_numbers = #tpu.dot_dimension_numbers<[1], [0], [0], [1], [0, 0, 1, 1], [], []>} : vector<8x32xf32>, vector<32x32xf32>, vector<8x32xf32> -> vector<8x32xf32>
    %266 = arith.addf %264, %265 : vector<8x32xf32>
    %267 = math.tanh %266 : vector<8x32xf32>
    %268 = vector.extract_strided_slice %10 {offsets = [56, 0], sizes = [8, 32], strides = [1, 1]} : vector<64x32xf32> to vector<8x32xf32>
    %cst_70 = arith.constant dense<0.000000e+00> : vector<8x32xf32>
    %269 = tpu.matmul %247, %14, %cst_70 {dimension_numbers = #tpu.dot_dimension_numbers<[1], [0], [0], [1], [0, 0, 1, 1], [], []>} : vector<8x32xf32>, vector<32x32xf32>, vector<8x32xf32> -> vector<8x32xf32>
    %270 = arith.addf %268, %269 : vector<8x32xf32>
    %271 = arith.negf %270 : vector<8x32xf32>
    %272 = math.exp %271 : vector<8x32xf32>
    %cst_71 = arith.constant 1.000000e+00 : f32
    %273 = vector.broadcast %cst_71 : f32 to vector<8x32xf32>
    %274 = arith.addf %273, %272 : vector<8x32xf32>
    %275 = arith.divf %273, %274 : vector<8x32xf32>
    %276 = arith.mulf %263, %245 : vector<8x32xf32>
    %277 = arith.mulf %255, %267 : vector<8x32xf32>
    %278 = arith.addf %276, %277 : vector<8x32xf32>
    %279 = math.tanh %278 : vector<8x32xf32>
    %280 = arith.mulf %275, %279 : vector<8x32xf32>
    %281 = tpu.concatenate %49, %82, %115, %148, %181, %214, %247, %280 in 0 : vector<8x32xf32>, vector<8x32xf32>, vector<8x32xf32>, vector<8x32xf32>, vector<8x32xf32>, vector<8x32xf32>, vector<8x32xf32>, vector<8x32xf32> -> vector<64x32xf32>
    %cst_72 = arith.constant 0.000000e+00 : f32
    %282 = vector.broadcast %cst_72 : f32 to vector<64x32xf32>
    %283 = arith.maximumf %281, %282 : vector<64x32xf32>
    %c0_73 = arith.constant 0 : index
    %c0_74 = arith.constant 0 : index
    %284 = vector.load %arg7[%c0_73, %c0_74] : memref<32x32xf32, #tpu.memory_space<vmem>>, vector<32x32xf32>
    %cst_75 = arith.constant dense<0.000000e+00> : vector<64x32xf32>
    %285 = tpu.matmul %283, %284, %cst_75 {dimension_numbers = #tpu.dot_dimension_numbers<[1], [0], [0], [1], [0, 0, 1, 1], [], []>} : vector<64x32xf32>, vector<32x32xf32>, vector<64x32xf32> -> vector<64x32xf32>
    %c0_76 = arith.constant 0 : index
    %c0_77 = arith.constant 0 : index
    %286 = vector.load %arg8[%c0_76, %c0_77] : memref<1x32xf32, #tpu.memory_space<vmem>>, vector<1x32xf32>
    %287 = vector.broadcast %286 : vector<1x32xf32> to vector<64x32xf32>
    %288 = arith.addf %285, %287 : vector<64x32xf32>
    %cst_78 = arith.constant 0.000000e+00 : f32
    %289 = vector.broadcast %cst_78 : f32 to vector<64x32xf32>
    %290 = arith.maximumf %288, %289 : vector<64x32xf32>
    %c0_79 = arith.constant 0 : index
    %c0_80 = arith.constant 0 : index
    %291 = vector.load %arg9[%c0_79, %c0_80] : memref<32x8xf32, #tpu.memory_space<vmem>>, vector<32x8xf32>
    %cst_81 = arith.constant dense<0.000000e+00> : vector<64x8xf32>
    %292 = tpu.matmul %290, %291, %cst_81 {dimension_numbers = #tpu.dot_dimension_numbers<[1], [0], [0], [1], [0, 0, 1, 1], [], []>} : vector<64x32xf32>, vector<32x8xf32>, vector<64x8xf32> -> vector<64x8xf32>
    %c0_82 = arith.constant 0 : index
    %c0_83 = arith.constant 0 : index
    %293 = vector.load %arg10[%c0_82, %c0_83] : memref<1x8xf32, #tpu.memory_space<vmem>>, vector<1x8xf32>
    %294 = vector.broadcast %293 : vector<1x8xf32> to vector<64x8xf32>
    %295 = arith.addf %292, %294 : vector<64x8xf32>
    %296 = vector.extract_strided_slice %295 {offsets = [0, 0], sizes = [8, 8], strides = [1, 1]} : vector<64x8xf32> to vector<8x8xf32>
    %297 = vector.extract_strided_slice %295 {offsets = [8, 0], sizes = [8, 8], strides = [1, 1]} : vector<64x8xf32> to vector<8x8xf32>
    %298 = arith.addf %296, %297 : vector<8x8xf32>
    %299 = vector.extract_strided_slice %295 {offsets = [16, 0], sizes = [8, 8], strides = [1, 1]} : vector<64x8xf32> to vector<8x8xf32>
    %300 = arith.addf %298, %299 : vector<8x8xf32>
    %301 = vector.extract_strided_slice %295 {offsets = [24, 0], sizes = [8, 8], strides = [1, 1]} : vector<64x8xf32> to vector<8x8xf32>
    %302 = arith.addf %300, %301 : vector<8x8xf32>
    %303 = vector.extract_strided_slice %295 {offsets = [32, 0], sizes = [8, 8], strides = [1, 1]} : vector<64x8xf32> to vector<8x8xf32>
    %304 = arith.addf %302, %303 : vector<8x8xf32>
    %305 = vector.extract_strided_slice %295 {offsets = [40, 0], sizes = [8, 8], strides = [1, 1]} : vector<64x8xf32> to vector<8x8xf32>
    %306 = arith.addf %304, %305 : vector<8x8xf32>
    %307 = vector.extract_strided_slice %295 {offsets = [48, 0], sizes = [8, 8], strides = [1, 1]} : vector<64x8xf32> to vector<8x8xf32>
    %308 = arith.addf %306, %307 : vector<8x8xf32>
    %309 = vector.extract_strided_slice %295 {offsets = [56, 0], sizes = [8, 8], strides = [1, 1]} : vector<64x8xf32> to vector<8x8xf32>
    %310 = arith.addf %308, %309 : vector<8x8xf32>
    %c0_84 = arith.constant 0 : index
    %c0_85 = arith.constant 0 : index
    %311 = vector.load %arg11[%c0_84, %c0_85] : memref<8x8xf32, #tpu.memory_space<vmem>>, vector<8x8xf32>
    tpu.vector_store %arg11[%c0_84, %c0_85], %310 {strides = array<i32>} : memref<8x8xf32, #tpu.memory_space<vmem>>, vector<8x8xf32>,
    return
  }
}

</mosaic_0001>

<llo_original>
// kernel: tpu_custom_call.1
$region0: #{tpu_custom_call.1}
  #allocation0 [shape = 'u32[]', space=smem, size = 0x4, offset = 0x4, fixed_abs, tag = 'smem constant byte address 0x4 - core index']
  #allocation1 [shape = 'u32[144,128]{1,0:T(1,128)}', space=vmem, size = 0x12000, scoped, tag = 'internal scratch']
  %s0 = inlined_call_operand.hbm [shape: f32[8,8,16], index: 0, kind: input, shape index: {}]
  %s1 = inlined_call_operand.hbm [shape: f32[16,128], index: 1, kind: input, shape index: {}]
  %s2 = inlined_call_operand.vmem [shape: f32[1,128], index: 2, kind: input, shape index: {}]
  %s3 = inlined_call_operand.vmem [shape: f32[32,32], index: 3, kind: input, shape index: {}]
  %s4 = inlined_call_operand.hbm [shape: f32[32,32], index: 4, kind: input, shape index: {}]
  %s5 = inlined_call_operand.hbm [shape: f32[32,32], index: 5, kind: input, shape index: {}]
  %s6 = inlined_call_operand.hbm [shape: f32[32,32], index: 6, kind: input, shape index: {}]
  %s7 = inlined_call_operand.vmem [shape: f32[32,32], index: 7, kind: input, shape index: {}]
  %s8 = inlined_call_operand.vmem [shape: f32[1,32], index: 8, kind: input, shape index: {}]
  %s9 = inlined_call_operand.vmem [shape: f32[32,8], index: 9, kind: input, shape index: {}]
  %s10 = inlined_call_operand.vmem [shape: f32[1,8], index: 10, kind: input, shape index: {}]
  %s11 = inlined_call_operand.hbm [shape: f32[8,8], index: 11, kind: output, shape index: {}]
  %s12 = sld [smem:[#allocation0]]
  $region74: #{tpu_custom_call.1} parent=0
    _
  %s14 = ssub.s32 1, %s12
  %s15 = scalar_select 0, %s14, %s12
  $region1: #{tpu_custom_call.1} parent=0
    #allocation2 [shape = 'u8[32768]{0}', space=vmem, size = 0x8000, scoped, tag = 'input window, operand 0, single buffered']
    #allocation3 [shape = 's32[1]{0}', space=sflag, size = 0x4, scoped, tag = 'scoped memory for tpu_custom_call.1']
    #allocation4 [shape = 's32[1]{0}', space=sflag, size = 0x4, scoped, tag = 'scoped memory for tpu_custom_call.1']
    #allocation5 [shape = 'u8[8192]{0}', space=vmem, size = 0x2000, scoped, tag = 'input window, operand 1, single buffered']
    #allocation6 [shape = 's32[1]{0}', space=sflag, size = 0x4, scoped, tag = 'scoped memory for tpu_custom_call.1']
    #allocation7 [shape = 'u8[16384]{0}', space=vmem, size = 0x4000, scoped, tag = 'input window, operand 4, single buffered']
    #allocation8 [shape = 'u8[16384]{0}', space=vmem, size = 0x4000, scoped, tag = 'input window, operand 5, single buffered']
    #allocation9 [shape = 's32[1]{0}', space=sflag, size = 0x4, scoped, tag = 'scoped memory for tpu_custom_call.1']
    #allocation10 [shape = 'u8[16384]{0}', space=vmem, size = 0x4000, scoped, tag = 'input window, operand 6, single buffered']
    #allocation11 [shape = 'u8[4096]{0}', space=vmem, size = 0x1000, scoped, tag = 'output window, operand 0, single buffered']
    %16 = vsyncpa [#allocation3], 0
    %17 = vsyncpa [#allocation6], 0
    %18 = vsyncpa [#allocation9], 0
    %19 = vsyncpa [#allocation4], 0
    // Predicated region
    $region2: #{tpu_custom_call.1} parent=1 // pred_check
      _
    $region3: #{tpu_custom_call.1} parent=1 // pred_check_branch
      %21 = sbr.rel (0) target = $region5
    $region4: #{tpu_custom_call.1} parent=1 // pred_region
      %s23 = ssub.s32 1024, 1024
      %24 = vsyncadd [#allocation3], %s23
      %s25 = sshll.u32 [#allocation2], 4
      %s26 = int_to_ptr.vmem [resolvable:$true] %s25
      %31 = dma.hbm_to_vmem [thread:$0]  %s0, 1024, %s26, [#allocation3], 128, 128, 8
    $region5: #{tpu_custom_call.1} parent=1 // pred_fallthru
      _
    // Predicated region
    $region6: #{tpu_custom_call.1} parent=1 // pred_check
      _
    $region7: #{tpu_custom_call.1} parent=1 // pred_check_branch
      %33 = sbr.rel (0) target = $region9
    $region8: #{tpu_custom_call.1} parent=1 // pred_region
      %s35 = ssub.s32 256, 256
      %36 = vsyncadd [#allocation6], %s35
      %s37 = sshll.u32 [#allocation5], 4
      %s38 = int_to_ptr.vmem [resolvable:$true] %s37
      %43 = dma.hbm_to_vmem [thread:$0]  %s1, 256, %s38, [#allocation6], 128, 128, 8
    $region9: #{tpu_custom_call.1} parent=1 // pred_fallthru
      _
    // Predicated region
    $region10: #{tpu_custom_call.1} parent=1 // pred_check
      _
    $region11: #{tpu_custom_call.1} parent=1 // pred_check_branch
      %45 = sbr.rel (0) target = $region13
    $region12: #{tpu_custom_call.1} parent=1 // pred_region
      _
    $region13: #{tpu_custom_call.1} parent=1 // pred_fallthru
      _
    // Predicated region
    $region14: #{tpu_custom_call.1} parent=1 // pred_check
      _
    $region15: #{tpu_custom_call.1} parent=1 // pred_check_branch
      %47 = sbr.rel (0) target = $region17
    $region16: #{tpu_custom_call.1} parent=1 // pred_region
      _
    $region17: #{tpu_custom_call.1} parent=1 // pred_fallthru
      _
    // Predicated region
    $region18: #{tpu_custom_call.1} parent=1 // pred_check
      _
    $region19: #{tpu_custom_call.1} parent=1 // pred_check_branch
      %49 = sbr.rel (0) target = $region21
    $region20: #{tpu_custom_call.1} parent=1 // pred_region
      %s51 = ssub.s32 512, 512
      %52 = vsyncadd [#allocation6], %s51
      %s53 = sshll.u32 [#allocation7], 4
      %s54 = int_to_ptr.vmem [resolvable:$true] %s53
      %59 = dma.hbm_to_vmem [thread:$0]  %s4, 512, %s54, [#allocation6], 128, 128, 8
    $region21: #{tpu_custom_call.1} parent=1 // pred_fallthru
      _
    // Predicated region
    $region22: #{tpu_custom_call.1} parent=1 // pred_check
      _
    $region23: #{tpu_custom_call.1} parent=1 // pred_check_branch
      %61 = sbr.rel (0) target = $region25
    $region24: #{tpu_custom_call.1} parent=1 // pred_region
      %s63 = ssub.s32 512, 512
      %64 = vsyncadd [#allocation9], %s63
      %s65 = sshll.u32 [#allocation8], 4
      %s66 = int_to_ptr.vmem [resolvable:$true] %s65
      %71 = dma.hbm_to_vmem [thread:$0]  %s5, 512, %s66, [#allocation9], 128, 128, 8
    $region25: #{tpu_custom_call.1} parent=1 // pred_fallthru
      _
    // Predicated region
    $region26: #{tpu_custom_call.1} parent=1 // pred_check
      _
    $region27: #{tpu_custom_call.1} parent=1 // pred_check_branch
      %73 = sbr.rel (0) target = $region29
    $region28: #{tpu_custom_call.1} parent=1 // pred_region
      %s75 = ssub.s32 512, 512
      %76 = vsyncadd [#allocation9], %s75
      %s77 = sshll.u32 [#allocation10], 4
      %s78 = int_to_ptr.vmem [resolvable:$true] %s77
      %83 = dma.hbm_to_vmem [thread:$0]  %s6, 512, %s78, [#allocation9], 128, 128, 8
    $region29: #{tpu_custom_call.1} parent=1 // pred_fallthru
      _
    // Predicated region
    $region30: #{tpu_custom_call.1} parent=1 // pred_check
      _
    $region31: #{tpu_custom_call.1} parent=1 // pred_check_branch
      %85 = sbr.rel (0) target = $region33
    $region32: #{tpu_custom_call.1} parent=1 // pred_region
      _
    $region33: #{tpu_custom_call.1} parent=1 // pred_fallthru
      _
    // Predicated region
    $region34: #{tpu_custom_call.1} parent=1 // pred_check
      _
    $region35: #{tpu_custom_call.1} parent=1 // pred_check_branch
      %87 = sbr.rel (0) target = $region37
    $region36: #{tpu_custom_call.1} parent=1 // pred_region
      _
    $region37: #{tpu_custom_call.1} parent=1 // pred_fallthru
      _
    // Predicated region
    $region38: #{tpu_custom_call.1} parent=1 // pred_check
      _
    $region39: #{tpu_custom_call.1} parent=1 // pred_check_branch
      %89 = sbr.rel (0) target = $region41
    $region40: #{tpu_custom_call.1} parent=1 // pred_region
      _
    $region41: #{tpu_custom_call.1} parent=1 // pred_fallthru
      _
    // Predicated region
    $region42: #{tpu_custom_call.1} parent=1 // pred_check
      _
    $region43: #{tpu_custom_call.1} parent=1 // pred_check_branch
      %91 = sbr.rel (0) target = $region45
    $region44: #{tpu_custom_call.1} parent=1 // pred_region
      _
    $region45: #{tpu_custom_call.1} parent=1 // pred_fallthru
      _
    // Predicated region
    $region46: #{tpu_custom_call.1} parent=1 // pred_check
      _
    $region47: #{tpu_custom_call.1} parent=1 // pred_check_branch
      %93 = sbr.rel (0) target = $region49
    $region48: #{tpu_custom_call.1} parent=1 // pred_region
      %94 = dma.done [#allocation3], 1024
    $region49: #{tpu_custom_call.1} parent=1 // pred_fallthru
      _
    // Predicated region
    $region50: #{tpu_custom_call.1} parent=1 // pred_check
      _
    $region51: #{tpu_custom_call.1} parent=1 // pred_check_branch
      %96 = sbr.rel (0) target = $region53
    $region52: #{tpu_custom_call.1} parent=1 // pred_region
      %97 = dma.done [#allocation6], 256
    $region53: #{tpu_custom_call.1} parent=1 // pred_fallthru
      _
    // Predicated region
    $region54: #{tpu_custom_call.1} parent=1 // pred_check
      _
    $region55: #{tpu_custom_call.1} parent=1 // pred_check_branch
      %99 = sbr.rel (0) target = $region57
    $region56: #{tpu_custom_call.1} parent=1 // pred_region
      %100 = dma.done [#allocation6], 512
    $region57: #{tpu_custom_call.1} parent=1 // pred_fallthru
      _
    // Predicated region
    $region58: #{tpu_custom_call.1} parent=1 // pred_check
      _
    $region59: #{tpu_custom_call.1} parent=1 // pred_check_branch
      %102 = sbr.rel (0) target = $region61
    $region60: #{tpu_custom_call.1} parent=1 // pred_region
      %103 = dma.done [#allocation9], 512
    $region61: #{tpu_custom_call.1} parent=1 // pred_fallthru
      _
    // Predicated region
    $region62: #{tpu_custom_call.1} parent=1 // pred_check
      _
    $region63: #{tpu_custom_call.1} parent=1 // pred_check_branch
      %105 = sbr.rel (0) target = $region65
    $region64: #{tpu_custom_call.1} parent=1 // pred_region
      %106 = dma.done [#allocation9], 512
    $region65: #{tpu_custom_call.1} parent=1 // pred_fallthru
      _
    %v107 = vld [vmem:[#allocation2] sm:$0xff]
    %v108 = vld [vmem:[#allocation2 + $0x8] sm:$0xff]
    %v109 = vld [vmem:[#allocation2 + $0x10] sm:$0xff]
    %v110 = vld [vmem:[#allocation2 + $0x18] sm:$0xff]
    %v111 = vld [vmem:[#allocation2 + $0x20] sm:$0xff]
    %v112 = vld [vmem:[#allocation2 + $0x28] sm:$0xff]
    %v113 = vld [vmem:[#allocation2 + $0x30] sm:$0xff]
    %v114 = vld [vmem:[#allocation2 + $0x38] sm:$0xff]
    %v115 = vld [vmem:[#allocation5] sm:$0xff]
    %v116 = vld [vmem:[#allocation5 + $0x8] sm:$0xff]
    %v117 = vld [vmem:[%s2] sm:$0x1]
    %v119 = vlaneseq
    %v120 = vshrl.u32 %v119, 7
    %v121 = vsub.s32 0, %v120
    %v122 = vrot.slane %v117, %v121
    %vm124 = vcmask 130048
    %v126 = vsel %vm124, %v107, 0
    %v129 = vsel %vm124, %v108, 0
    %v132 = vsel %vm124, %v109, 0
    %v135 = vsel %vm124, %v110, 0
    %v138 = vsel %vm124, %v111, 0
    %v141 = vsel %vm124, %v112, 0
    %v144 = vsel %vm124, %v113, 0
    %v147 = vsel %vm124, %v114, 0
    %149 = vmatprep.subr.mxu0 0.0
    %150 = vmatpush1.msra.mxu0 %v115
    %151 = vmatprep.subr.mxu0 0.0
    %152 = vmatpush1.msra.mxu0 %v116
    %153 = vmatprep.subr.mxu0 0.0
    %154 = vmatpush1.msra.mxu0 0.0
    %155 = vmatprep.subr.mxu0 0.0
    %156 = vmatpush1.msra.mxu0 0.0
    %157 = vmatprep.subr.mxu0 0.0
    %158 = vmatpush1.msra.mxu0 0.0
    %159 = vmatprep.subr.mxu0 0.0
    %160 = vmatpush1.msra.mxu0 0.0
    %161 = vmatprep.subr.mxu0 0.0
    %162 = vmatpush1.msra.mxu0 0.0
    %163 = vmatprep.subr.mxu0 0.0
    %164 = vmatpush1.msra.mxu0 0.0
    %165 = vmatprep.subr.mxu0 0.0
    %166 = vmatpush1.msra.mxu0 0.0
    %167 = vmatprep.subr.mxu0 0.0
    %168 = vmatpush1.msra.mxu0 0.0
    %169 = vmatprep.subr.mxu0 0.0
    %170 = vmatpush1.msra.mxu0 0.0
    %171 = vmatprep.subr.mxu0 0.0
    %172 = vmatpush1.msra.mxu0 0.0
    %173 = vmatprep.subr.mxu0 0.0
    %174 = vmatpush1.msra.mxu0 0.0
    %175 = vmatprep.subr.mxu0 0.0
    %176 = vmatpush1.msra.mxu0 0.0
    %177 = vmatprep.subr.mxu0 0.0
    %178 = vmatpush1.msra.mxu0 0.0
    %179 = vmatprep.subr.mxu0 0.0
    %180 = vmatpush1.msra.mxu0 0.0
    %181 = vmatprep.subr.mxu0 0.0
    %182 = vmatpush1.msra.mxu0 0.0
    %183 = vmatprep.subr.mxu0 0.0
    %184 = vmatpush1.msra.mxu0 0.0
    %185 = vmatprep.subr.mxu0 0.0
    %186 = vmatpush1.msra.mxu0 0.0
    %187 = vmatprep.subr.mxu0 0.0
    %188 = vmatpush1.msra.mxu0 0.0
    %189 = vmatprep.subr.mxu0 0.0
    %190 = vmatpush1.msra.mxu0 0.0
    %191 = vmatprep.subr.mxu0 0.0
    %192 = vmatpush1.msra.mxu0 0.0
    %193 = vmatprep.subr.mxu0 0.0
    %194 = vmatpush1.msra.mxu0 0.0
    %195 = vmatprep.subr.mxu0 0.0
    %196 = vmatpush1.msra.mxu0 0.0
    %197 = vmatprep.subr.mxu0 0.0
    %198 = vmatpush1.msra.mxu0 0.0
    %199 = vmatprep.subr.mxu0 0.0
    %200 = vmatpush1.msra.mxu0 0.0
    %201 = vmatprep.subr.mxu0 0.0
    %202 = vmatpush1.msra.mxu0 0.0
    %203 = vmatprep.subr.mxu0 0.0
    %204 = vmatpush1.msra.mxu0 0.0
    %205 = vmatprep.subr.mxu0 0.0
    %206 = vmatpush1.msra.mxu0 0.0
    %207 = vmatprep.subr.mxu0 0.0
    %208 = vmatpush1.msra.mxu0 0.0
    %209 = vmatprep.subr.mxu0 0.0
    %210 = vmatpush1.msra.mxu0 0.0
    %211 = vmatprep.subr.mxu0 0.0
    %212 = vmatpush1.msra.mxu0 0.0
    %213 = vmatprep.mubr.f32.mxu0 0.0
    %214 = vmatmul.mubr.f32.gmra.mrb[0].mxu0 %v126
    %v215 = vpop.f32.mrb[0].mxu0
    %v216 = vadd.f32 %v122, %v215
    %v217 = vpop.f32.mrb[0].mxu0
    %218 = vmatprep.mubr.f32.mxu0 0.0
    %219 = vmatmul.mubr.f32.gmra.mrb[0].mxu0 %v129
    %v220 = vpop.f32.mrb[0].mxu0
    %v221 = vadd.f32 %v122, %v220
    %v222 = vpop.f32.mrb[0].mxu0
    %223 = vmatprep.mubr.f32.mxu0 0.0
    %224 = vmatmul.mubr.f32.gmra.mrb[0].mxu0 %v132
    %v225 = vpop.f32.mrb[0].mxu0
    %v226 = vadd.f32 %v122, %v225
    %v227 = vpop.f32.mrb[0].mxu0
    %228 = vmatprep.mubr.f32.mxu0 0.0
    %229 = vmatmul.mubr.f32.gmra.mrb[0].mxu0 %v135
    %v230 = vpop.f32.mrb[0].mxu0
    %v231 = vadd.f32 %v122, %v230
    %v232 = vpop.f32.mrb[0].mxu0
    %233 = vmatprep.mubr.f32.mxu0 0.0
    %234 = vmatmul.mubr.f32.gmra.mrb[0].mxu0 %v138
    %v235 = vpop.f32.mrb[0].mxu0
    %v236 = vadd.f32 %v122, %v235
    %v237 = vpop.f32.mrb[0].mxu0
    %238 = vmatprep.mubr.f32.mxu0 0.0
    %239 = vmatmul.mubr.f32.gmra.mrb[0].mxu0 %v141
    %v240 = vpop.f32.mrb[0].mxu0
    %v241 = vadd.f32 %v122, %v240
    %v242 = vpop.f32.mrb[0].mxu0
    %243 = vmatprep.mubr.f32.mxu0 0.0
    %244 = vmatmul.mubr.f32.gmra.mrb[0].mxu0 %v144
    %v245 = vpop.f32.mrb[0].mxu0
    %v246 = vadd.f32 %v122, %v245
    %v247 = vpop.f32.mrb[0].mxu0
    %248 = vmatprep.mubr.f32.mxu0 0.0
    %249 = vmatmul.mubr.f32.gmra.mrb[0].mxu0 %v147
    %v250 = vpop.f32.mrb[0].mxu0
    %v251 = vadd.f32 %v122, %v250
    %v252 = vpop.f32.mrb[0].mxu0
    %253 = vdwg.mxu0
    %v254 = vld [vmem:[%s3] sm:$0xff]
    %v255 = vld [vmem:[%s3 + $0x8] sm:$0xff]
    %v256 = vld [vmem:[%s3 + $0x10] sm:$0xff]
    %v257 = vld [vmem:[%s3 + $0x18] sm:$0xff]
    %v258 = vld [vmem:[#allocation7] sm:$0xff]
    %v259 = vld [vmem:[#allocation7 + $0x8] sm:$0xff]
    %v260 = vld [vmem:[#allocation7 + $0x10] sm:$0xff]
    %v261 = vld [vmem:[#allocation7 + $0x18] sm:$0xff]
    %v262 = vld [vmem:[#allocation8] sm:$0xff]
    %v263 = vld [vmem:[#allocation8 + $0x8] sm:$0xff]
    %v264 = vld [vmem:[#allocation8 + $0x10] sm:$0xff]
    %v265 = vld [vmem:[#allocation8 + $0x18] sm:$0xff]
    %v266 = vld [vmem:[#allocation10] sm:$0xff]
    %v267 = vld [vmem:[#allocation10 + $0x8] sm:$0xff]
    %v268 = vld [vmem:[#allocation10 + $0x10] sm:$0xff]
    %v269 = vld [vmem:[#allocation10 + $0x18] sm:$0xff]
    %vm270 = vcmask 261120
    %v272 = vsel %vm270, 0.0, 0
    %274 = vmatprep.subr.mxu0 0.0
    %275 = vmatpush1.msra.mxu0 %v254
    %276 = vmatprep.subr.mxu0 0.0
    %277 = vmatpush1.msra.mxu0 %v255
    %278 = vmatprep.subr.mxu0 0.0
    %279 = vmatpush1.msra.mxu0 %v256
    %280 = vmatprep.subr.mxu0 0.0
    %281 = vmatpush1.msra.mxu0 %v257
    %282 = vmatprep.subr.mxu0 0.0
    %283 = vmatpush1.msra.mxu0 0.0
    %284 = vmatprep.subr.mxu0 0.0
    %285 = vmatpush1.msra.mxu0 0.0
    %286 = vmatprep.subr.mxu0 0.0
    %287 = vmatpush1.msra.mxu0 0.0
    %288 = vmatprep.subr.mxu0 0.0
    %289 = vmatpush1.msra.mxu0 0.0
    %290 = vmatprep.subr.mxu0 0.0
    %291 = vmatpush1.msra.mxu0 0.0
    %292 = vmatprep.subr.mxu0 0.0
    %293 = vmatpush1.msra.mxu0 0.0
    %294 = vmatprep.subr.mxu0 0.0
    %295 = vmatpush1.msra.mxu0 0.0
    %296 = vmatprep.subr.mxu0 0.0
    %297 = vmatpush1.msra.mxu0 0.0
    %298 = vmatprep.subr.mxu0 0.0
    %299 = vmatpush1.msra.mxu0 0.0
    %300 = vmatprep.subr.mxu0 0.0
    %301 = vmatpush1.msra.mxu0 0.0
    %302 = vmatprep.subr.mxu0 0.0
    %303 = vmatpush1.msra.mxu0 0.0
    %304 = vmatprep.subr.mxu0 0.0
    %305 = vmatpush1.msra.mxu0 0.0
    %306 = vmatprep.subr.mxu0 0.0
    %307 = vmatpush1.msra.mxu0 0.0
    %308 = vmatprep.subr.mxu0 0.0
    %309 = vmatpush1.msra.mxu0 0.0
    %310 = vmatprep.subr.mxu0 0.0
    %311 = vmatpush1.msra.mxu0 0.0
    %312 = vmatprep.subr.mxu0 0.0
    %313 = vmatpush1.msra.mxu0 0.0
    %314 = vmatprep.subr.mxu0 0.0
    %315 = vmatpush1.msra.mxu0 0.0
    %316 = vmatprep.subr.mxu0 0.0
    %317 = vmatpush1.msra.mxu0 0.0
    %318 = vmatprep.subr.mxu0 0.0
    %319 = vmatpush1.msra.mxu0 0.0
    %320 = vmatprep.subr.mxu0 0.0
    %321 = vmatpush1.msra.mxu0 0.0
    %322 = vmatprep.subr.mxu0 0.0
    %323 = vmatpush1.msra.mxu0 0.0
    %324 = vmatprep.subr.mxu0 0.0
    %325 = vmatpush1.msra.mxu0 0.0
    %326 = vmatprep.subr.mxu0 0.0
    %327 = vmatpush1.msra.mxu0 0.0
    %328 = vmatprep.subr.mxu0 0.0
    %329 = vmatpush1.msra.mxu0 0.0
    %330 = vmatprep.subr.mxu0 0.0
    %331 = vmatpush1.msra.mxu0 0.0
    %332 = vmatprep.subr.mxu0 0.0
    %333 = vmatpush1.msra.mxu0 0.0
    %334 = vmatprep.subr.mxu0 0.0
    %335 = vmatpush1.msra.mxu0 0.0
    %336 = vmatprep.subr.mxu0 0.0
    %337 = vmatpush1.msra.mxu0 0.0
    %338 = vmatprep.mubr.f32.mxu0 0.0
    %339 = vmatmul.mubr.f32.gmra.mrb[0].mxu0 %v272
    %v340 = vpop.f32.mrb[0].mxu0
    %v341 = vadd.f32 0.0, %v340
    %v342 = vpop.f32.mrb[0].mxu0
    %343 = vdwg.mxu0
    %v344 = vadd.f32 %v216, %v341
    %v345 = vxor.u32 %v344, 2147483648
    %v346 = vmul.f32 %v345, 1.442695
    %v347 = vpow.pop %v346
    %v348 = vadd.f32 %v347, 1.0
    %v349 = vrcp.pop %v348
    %v350 = vmul.f32 1.0, %v349
    %351 = vmatprep.subr.mxu0 0.0
    %352 = vmatpush1.msra.mxu0 %v258
    %353 = vmatprep.subr.mxu0 0.0
    %354 = vmatpush1.msra.mxu0 %v259
    %355 = vmatprep.subr.mxu0 0.0
    %356 = vmatpush1.msra.mxu0 %v260
    %357 = vmatprep.subr.mxu0 0.0
    %358 = vmatpush1.msra.mxu0 %v261
    %359 = vmatprep.subr.mxu0 0.0
    %360 = vmatpush1.msra.mxu0 0.0
    %361 = vmatprep.subr.mxu0 0.0
    %362 = vmatpush1.msra.mxu0 0.0
    %363 = vmatprep.subr.mxu0 0.0
    %364 = vmatpush1.msra.mxu0 0.0
    %365 = vmatprep.subr.mxu0 0.0
    %366 = vmatpush1.msra.mxu0 0.0
    %367 = vmatprep.subr.mxu0 0.0
    %368 = vmatpush1.msra.mxu0 0.0
    %369 = vmatprep.subr.mxu0 0.0
    %370 = vmatpush1.msra.mxu0 0.0
    %371 = vmatprep.subr.mxu0 0.0
    %372 = vmatpush1.msra.mxu0 0.0
    %373 = vmatprep.subr.mxu0 0.0
    %374 = vmatpush1.msra.mxu0 0.0
    %375 = vmatprep.subr.mxu0 0.0
    %376 = vmatpush1.msra.mxu0 0.0
    %377 = vmatprep.subr.mxu0 0.0
    %378 = vmatpush1.msra.mxu0 0.0
    %379 = vmatprep.subr.mxu0 0.0
    %380 = vmatpush1.msra.mxu0 0.0
    %381 = vmatprep.subr.mxu0 0.0
    %382 = vmatpush1.msra.mxu0 0.0
    %383 = vmatprep.subr.mxu0 0.0
    %384 = vmatpush1.msra.mxu0 0.0
    %385 = vmatprep.subr.mxu0 0.0
    %386 = vmatpush1.msra.mxu0 0.0
    %387 = vmatprep.subr.mxu0 0.0
    %388 = vmatpush1.msra.mxu0 0.0
    %389 = vmatprep.subr.mxu0 0.0
    %390 = vmatpush1.msra.mxu0 0.0
    %391 = vmatprep.subr.mxu0 0.0
    %392 = vmatpush1.msra.mxu0 0.0
    %393 = vmatprep.subr.mxu0 0.0
    %394 = vmatpush1.msra.mxu0 0.0
    %395 = vmatprep.subr.mxu0 0.0
    %396 = vmatpush1.msra.mxu0 0.0
    %397 = vmatprep.subr.mxu0 0.0
    %398 = vmatpush1.msra.mxu0 0.0
    %399 = vmatprep.subr.mxu0 0.0
    %400 = vmatpush1.msra.mxu0 0.0
    %401 = vmatprep.subr.mxu0 0.0
    %402 = vmatpush1.msra.mxu0 0.0
    %403 = vmatprep.subr.mxu0 0.0
    %404 = vmatpush1.msra.mxu0 0.0
    %405 = vmatprep.subr.mxu0 0.0
    %406 = vmatpush1.msra.mxu0 0.0
    %407 = vmatprep.subr.mxu0 0.0
    %408 = vmatpush1.msra.mxu0 0.0
    %409 = vmatprep.subr.mxu0 0.0
    %410 = vmatpush1.msra.mxu0 0.0
    %411 = vmatprep.subr.mxu0 0.0
    %412 = vmatpush1.msra.mxu0 0.0
    %413 = vmatprep.subr.mxu0 0.0
    %414 = vmatpush1.msra.mxu0 0.0
    %415 = vmatprep.mubr.f32.mxu0 0.0
    %416 = vmatmul.mubr.f32.gmra.mrb[0].mxu0 %v272
    %v417 = vpop.f32.mrb[0].mxu0
    %v418 = vadd.f32 0.0, %v417
    %v419 = vpop.f32.mrb[0].mxu0
    %420 = vdwg.mxu0
    %422 = vrot.lane.b32.xlu0 %v418, 32
    %v423 = vpop.permute.xlu0 %422
    %v425 = vadd.f32 %v216, %v423
    %v426 = vxor.u32 %v425, 2147483648
    %v427 = vmul.f32 %v426, 1.442695
    %v428 = vpow.pop %v427
    %v429 = vadd.f32 %v428, 1.0
    %v430 = vrcp.pop %v429
    %v431 = vmul.f32 1.0, %v430
    %432 = vmatprep.subr.mxu0 0.0
    %433 = vmatpush1.msra.mxu0 %v262
    %434 = vmatprep.subr.mxu0 0.0
    %435 = vmatpush1.msra.mxu0 %v263
    %436 = vmatprep.subr.mxu0 0.0
    %437 = vmatpush1.msra.mxu0 %v264
    %438 = vmatprep.subr.mxu0 0.0
    %439 = vmatpush1.msra.mxu0 %v265
    %440 = vmatprep.subr.mxu0 0.0
    %441 = vmatpush1.msra.mxu0 0.0
    %442 = vmatprep.subr.mxu0 0.0
    %443 = vmatpush1.msra.mxu0 0.0
    %444 = vmatprep.subr.mxu0 0.0
    %445 = vmatpush1.msra.mxu0 0.0
    %446 = vmatprep.subr.mxu0 0.0
    %447 = vmatpush1.msra.mxu0 0.0
    %448 = vmatprep.subr.mxu0 0.0
    %449 = vmatpush1.msra.mxu0 0.0
    %450 = vmatprep.subr.mxu0 0.0
    %451 = vmatpush1.msra.mxu0 0.0
    %452 = vmatprep.subr.mxu0 0.0
    %453 = vmatpush1.msra.mxu0 0.0
    %454 = vmatprep.subr.mxu0 0.0
    %455 = vmatpush1.msra.mxu0 0.0
    %456 = vmatprep.subr.mxu0 0.0
    %457 = vmatpush1.msra.mxu0 0.0
    %458 = vmatprep.subr.mxu0 0.0
    %459 = vmatpush1.msra.mxu0 0.0
    %460 = vmatprep.subr.mxu0 0.0
    %461 = vmatpush1.msra.mxu0 0.0
    %462 = vmatprep.subr.mxu0 0.0
    %463 = vmatpush1.msra.mxu0 0.0
    %464 = vmatprep.subr.mxu0 0.0
    %465 = vmatpush1.msra.mxu0 0.0
    %466 = vmatprep.subr.mxu0 0.0
    %467 = vmatpush1.msra.mxu0 0.0
    %468 = vmatprep.subr.mxu0 0.0
    %469 = vmatpush1.msra.mxu0 0.0
    %470 = vmatprep.subr.mxu0 0.0
    %471 = vmatpush1.msra.mxu0 0.0
    %472 = vmatprep.subr.mxu0 0.0
    %473 = vmatpush1.msra.mxu0 0.0
    %474 = vmatprep.subr.mxu0 0.0
    %475 = vmatpush1.msra.mxu0 0.0
    %476 = vmatprep.subr.mxu0 0.0
    %477 = vmatpush1.msra.mxu0 0.0
    %478 = vmatprep.subr.mxu0 0.0
    %479 = vmatpush1.msra.mxu0 0.0
    %480 = vmatprep.subr.mxu0 0.0
    %481 = vmatpush1.msra.mxu0 0.0
    %482 = vmatprep.subr.mxu0 0.0
    %483 = vmatpush1.msra.mxu0 0.0
    %484 = vmatprep.subr.mxu0 0.0
    %485 = vmatpush1.msra.mxu0 0.0
    %486 = vmatprep.subr.mxu0 0.0
    %487 = vmatpush1.msra.mxu0 0.0
    %488 = vmatprep.subr.mxu0 0.0
    %489 = vmatpush1.msra.mxu0 0.0
    %490 = vmatprep.subr.mxu0 0.0
    %491 = vmatpush1.msra.mxu0 0.0
    %492 = vmatprep.subr.mxu0 0.0
    %493 = vmatpush1.msra.mxu0 0.0
    %494 = vmatprep.subr.mxu0 0.0
    %495 = vmatpush1.msra.mxu0 0.0
    %496 = vmatprep.mubr.f32.mxu0 0.0
    %497 = vmatmul.mubr.f32.gmra.mrb[0].mxu0 %v272
    %v498 = vpop.f32.mrb[0].mxu0
    %v499 = vadd.f32 0.0, %v498
    %v500 = vpop.f32.mrb[0].mxu0
    %501 = vdwg.mxu0
    %503 = vrot.lane.b32.xlu0 %v499, 64
    %v504 = vpop.permute.xlu0 %503
    %v506 = vadd.f32 %v216, %v504
    %v507 = vtanh.pop %v506
    %508 = vmatprep.subr.mxu0 0.0
    %509 = vmatpush1.msra.mxu0 %v266
    %510 = vmatprep.subr.mxu0 0.0
    %511 = vmatpush1.msra.mxu0 %v267
    %512 = vmatprep.subr.mxu0 0.0
    %513 = vmatpush1.msra.mxu0 %v268
    %514 = vmatprep.subr.mxu0 0.0
    %515 = vmatpush1.msra.mxu0 %v269
    %516 = vmatprep.subr.mxu0 0.0
    %517 = vmatpush1.msra.mxu0 0.0
    %518 = vmatprep.subr.mxu0 0.0
    %519 = vmatpush1.msra.mxu0 0.0
    %520 = vmatprep.subr.mxu0 0.0
    %521 = vmatpush1.msra.mxu0 0.0
    %522 = vmatprep.subr.mxu0 0.0
    %523 = vmatpush1.msra.mxu0 0.0
    %524 = vmatprep.subr.mxu0 0.0
    %525 = vmatpush1.msra.mxu0 0.0
    %526 = vmatprep.subr.mxu0 0.0
    %527 = vmatpush1.msra.mxu0 0.0
    %528 = vmatprep.subr.mxu0 0.0
    %529 = vmatpush1.msra.mxu0 0.0
    %530 = vmatprep.subr.mxu0 0.0
    %531 = vmatpush1.msra.mxu0 0.0
    %532 = vmatprep.subr.mxu0 0.0
    %533 = vmatpush1.msra.mxu0 0.0
    %534 = vmatprep.subr.mxu0 0.0
    %535 = vmatpush1.msra.mxu0 0.0
    %536 = vmatprep.subr.mxu0 0.0
    %537 = vmatpush1.msra.mxu0 0.0
    %538 = vmatprep.subr.mxu0 0.0
    %539 = vmatpush1.msra.mxu0 0.0
    %540 = vmatprep.subr.mxu0 0.0
    %541 = vmatpush1.msra.mxu0 0.0
    %542 = vmatprep.subr.mxu0 0.0
    %543 = vmatpush1.msra.mxu0 0.0
    %544 = vmatprep.subr.mxu0 0.0
    %545 = vmatpush1.msra.mxu0 0.0
    %546 = vmatprep.subr.mxu0 0.0
    %547 = vmatpush1.msra.mxu0 0.0
    %548 = vmatprep.subr.mxu0 0.0
    %549 = vmatpush1.msra.mxu0 0.0
    %550 = vmatprep.subr.mxu0 0.0
    %551 = vmatpush1.msra.mxu0 0.0
    %552 = vmatprep.subr.mxu0 0.0
    %553 = vmatpush1.msra.mxu0 0.0
    %554 = vmatprep.subr.mxu0 0.0
    %555 = vmatpush1.msra.mxu0 0.0
    %556 = vmatprep.subr.mxu0 0.0
    %557 = vmatpush1.msra.mxu0 0.0
    %558 = vmatprep.subr.mxu0 0.0
    %559 = vmatpush1.msra.mxu0 0.0
    %560 = vmatprep.subr.mxu0 0.0
    %561 = vmatpush1.msra.mxu0 0.0
    %562 = vmatprep.subr.mxu0 0.0
    %563 = vmatpush1.msra.mxu0 0.0
    %564 = vmatprep.subr.mxu0 0.0
    %565 = vmatpush1.msra.mxu0 0.0
    %566 = vmatprep.subr.mxu0 0.0
    %567 = vmatpush1.msra.mxu0 0.0
    %568 = vmatprep.subr.mxu0 0.0
    %569 = vmatpush1.msra.mxu0 0.0
    %570 = vmatprep.subr.mxu0 0.0
    %571 = vmatpush1.msra.mxu0 0.0
    %572 = vmatprep.mubr.f32.mxu0 0.0
    %573 = vmatmul.mubr.f32.gmra.mrb[0].mxu0 %v272
    %v574 = vpop.f32.mrb[0].mxu0
    %v575 = vadd.f32 0.0, %v574
    %v576 = vpop.f32.mrb[0].mxu0
    %577 = vdwg.mxu0
    %579 = vrot.lane.b32.xlu0 %v575, 96
    %v580 = vpop.permute.xlu0 %579
    %v582 = vadd.f32 %v216, %v580
    %v583 = vxor.u32 %v582, 2147483648
    %v584 = vmul.f32 %v583, 1.442695
    %v585 = vpow.pop %v584
    %v586 = vadd.f32 %v585, 1.0
    %v587 = vrcp.pop %v586
    %v588 = vmul.f32 1.0, %v587
    %v589 = vmul.f32 %v431, 0.0
    %591 = vrot.lane.b32.xlu0 %v507, 64
    %v592 = vpop.permute.xlu0 %591
    %v594 = vmul.f32 %v350, %v592
    %596 = vrot.lane.b32.xlu0 %v594, 32
    %v597 = vpop.permute.xlu0 %596
    %v599 = vadd.f32 %v589, %v597
    %v600 = vtanh.pop %v599
    %602 = vrot.lane.b32.xlu0 %v600, 64
    %v603 = vpop.permute.xlu0 %602
    %v605 = vmul.f32 %v588, %v603
    %607 = vrot.lane.b32.xlu0 %v605, 32
    %v608 = vpop.permute.xlu0 %607
    %v609 = vsel %vm270, %v608, 0
    %611 = vmatprep.subr.mxu0 0.0
    %612 = vmatpush1.msra.mxu0 %v254
    %613 = vmatprep.subr.mxu0 0.0
    %614 = vmatpush1.msra.mxu0 %v255
    %615 = vmatprep.subr.mxu0 0.0
    %616 = vmatpush1.msra.mxu0 %v256
    %617 = vmatprep.subr.mxu0 0.0
    %618 = vmatpush1.msra.mxu0 %v257
    %619 = vmatprep.subr.mxu0 0.0
    %620 = vmatpush1.msra.mxu0 0.0
    %621 = vmatprep.subr.mxu0 0.0
    %622 = vmatpush1.msra.mxu0 0.0
    %623 = vmatprep.subr.mxu0 0.0
    %624 = vmatpush1.msra.mxu0 0.0
    %625 = vmatprep.subr.mxu0 0.0
    %626 = vmatpush1.msra.mxu0 0.0
    %627 = vmatprep.subr.mxu0 0.0
    %628 = vmatpush1.msra.mxu0 0.0
    %629 = vmatprep.subr.mxu0 0.0
    %630 = vmatpush1.msra.mxu0 0.0
    %631 = vmatprep.subr.mxu0 0.0
    %632 = vmatpush1.msra.mxu0 0.0
    %633 = vmatprep.subr.mxu0 0.0
    %634 = vmatpush1.msra.mxu0 0.0
    %635 = vmatprep.subr.mxu0 0.0
    %636 = vmatpush1.msra.mxu0 0.0
    %637 = vmatprep.subr.mxu0 0.0
    %638 = vmatpush1.msra.mxu0 0.0
    %639 = vmatprep.subr.mxu0 0.0
    %640 = vmatpush1.msra.mxu0 0.0
    %641 = vmatprep.subr.mxu0 0.0
    %642 = vmatpush1.msra.mxu0 0.0
    %643 = vmatprep.subr.mxu0 0.0
    %644 = vmatpush1.msra.mxu0 0.0
    %645 = vmatprep.subr.mxu0 0.0
    %646 = vmatpush1.msra.mxu0 0.0
    %647 = vmatprep.subr.mxu0 0.0
    %648 = vmatpush1.msra.mxu0 0.0
    %649 = vmatprep.subr.mxu0 0.0
    %650 = vmatpush1.msra.mxu0 0.0
    %651 = vmatprep.subr.mxu0 0.0
    %652 = vmatpush1.msra.mxu0 0.0
    %653 = vmatprep.subr.mxu0 0.0
    %654 = vmatpush1.msra.mxu0 0.0
    %655 = vmatprep.subr.mxu0 0.0
    %656 = vmatpush1.msra.mxu0 0.0
    %657 = vmatprep.subr.mxu0 0.0
    %658 = vmatpush1.msra.mxu0 0.0
    %659 = vmatprep.subr.mxu0 0.0
    %660 = vmatpush1.msra.mxu0 0.0
    %661 = vmatprep.subr.mxu0 0.0
    %662 = vmatpush1.msra.mxu0 0.0
    %663 = vmatprep.subr.mxu0 0.0
    %664 = vmatpush1.msra.mxu0 0.0
    %665 = vmatprep.subr.mxu0 0.0
    %666 = vmatpush1.msra.mxu0 0.0
    %667 = vmatprep.subr.mxu0 0.0
    %668 = vmatpush1.msra.mxu0 0.0
    %669 = vmatprep.subr.mxu0 0.0
    %670 = vmatpush1.msra.mxu0 0.0
    %671 = vmatprep.subr.mxu0 0.0
    %672 = vmatpush1.msra.mxu0 0.0
    %673 = vmatprep.subr.mxu0 0.0
    %674 = vmatpush1.msra.mxu0 0.0
    %675 = vmatprep.mubr.f32.mxu0 0.0
    %676 = vmatmul.mubr.f32.gmra.mrb[0].mxu0 %v609
    %v677 = vpop.f32.mrb[0].mxu0
    %v678 = vadd.f32 0.0, %v677
    %v679 = vpop.f32.mrb[0].mxu0
    %680 = vdwg.mxu0
    %v681 = vadd.f32 %v221, %v678
    %v682 = vxor.u32 %v681, 2147483648
    %v683 = vmul.f32 %v682, 1.442695
    %v684 = vpow.pop %v683
    %v685 = vadd.f32 %v684, 1.0
    %v686 = vrcp.pop %v685
    %v687 = vmul.f32 1.0, %v686
    %688 = vmatprep.subr.mxu0 0.0
    %689 = vmatpush1.msra.mxu0 %v258
    %690 = vmatprep.subr.mxu0 0.0
    %691 = vmatpush1.msra.mxu0 %v259
    %692 = vmatprep.subr.mxu0 0.0
    %693 = vmatpush1.msra.mxu0 %v260
    %694 = vmatprep.subr.mxu0 0.0
    %695 = vmatpush1.msra.mxu0 %v261
    %696 = vmatprep.subr.mxu0 0.0
    %697 = vmatpush1.msra.mxu0 0.0
    %698 = vmatprep.subr.mxu0 0.0
    %699 = vmatpush1.msra.mxu0 0.0
    %700 = vmatprep.subr.mxu0 0.0
    %701 = vmatpush1.msra.mxu0 0.0
    %702 = vmatprep.subr.mxu0 0.0
    %703 = vmatpush1.msra.mxu0 0.0
    %704 = vmatprep.subr.mxu0 0.0
    %705 = vmatpush1.msra.mxu0 0.0
    %706 = vmatprep.subr.mxu0 0.0
    %707 = vmatpush1.msra.mxu0 0.0
    %708 = vmatprep.subr.mxu0 0.0
    %709 = vmatpush1.msra.mxu0 0.0
    %710 = vmatprep.subr.mxu0 0.0
    %711 = vmatpush1.msra.mxu0 0.0
    %712 = vmatprep.subr.mxu0 0.0
    %713 = vmatpush1.msra.mxu0 0.0
    %714 = vmatprep.subr.mxu0 0.0
    %715 = vmatpush1.msra.mxu0 0.0
    %716 = vmatprep.subr.mxu0 0.0
    %717 = vmatpush1.msra.mxu0 0.0
    %718 = vmatprep.subr.mxu0 0.0
    %719 = vmatpush1.msra.mxu0 0.0
    %720 = vmatprep.subr.mxu0 0.0
    %721 = vmatpush1.msra.mxu0 0.0
    %722 = vmatprep.subr.mxu0 0.0
    %723 = vmatpush1.msra.mxu0 0.0
    %724 = vmatprep.subr.mxu0 0.0
    %725 = vmatpush1.msra.mxu0 0.0
    %726 = vmatprep.subr.mxu0 0.0
    %727 = vmatpush1.msra.mxu0 0.0
    %728 = vmatprep.subr.mxu0 0.0
    %729 = vmatpush1.msra.mxu0 0.0
    %730 = vmatprep.subr.mxu0 0.0
    %731 = vmatpush1.msra.mxu0 0.0
    %732 = vmatprep.subr.mxu0 0.0
    %733 = vmatpush1.msra.mxu0 0.0
    %734 = vmatprep.subr.mxu0 0.0
    %735 = vmatpush1.msra.mxu0 0.0
    %736 = vmatprep.subr.mxu0 0.0
    %737 = vmatpush1.msra.mxu0 0.0
    %738 = vmatprep.subr.mxu0 0.0
    %739 = vmatpush1.msra.mxu0 0.0
    %740 = vmatprep.subr.mxu0 0.0
    %741 = vmatpush1.msra.mxu0 0.0
    %742 = vmatprep.subr.mxu0 0.0
    %743 = vmatpush1.msra.mxu0 0.0
    %744 = vmatprep.subr.mxu0 0.0
    %745 = vmatpush1.msra.mxu0 0.0
    %746 = vmatprep.subr.mxu0 0.0
    %747 = vmatpush1.msra.mxu0 0.0
    %748 = vmatprep.subr.mxu0 0.0
    %749 = vmatpush1.msra.mxu0 0.0
    %750 = vmatprep.subr.mxu0 0.0
    %751 = vmatpush1.msra.mxu0 0.0
    %752 = vmatprep.mubr.f32.mxu0 0.0
    %753 = vmatmul.mubr.f32.gmra.mrb[0].mxu0 %v609
    %v754 = vpop.f32.mrb[0].mxu0
    %v755 = vadd.f32 0.0, %v754
    %v756 = vpop.f32.mrb[0].mxu0
    %757 = vdwg.mxu0
    %759 = vrot.lane.b32.xlu0 %v755, 32
    %v760 = vpop.permute.xlu0 %759
    %v762 = vadd.f32 %v221, %v760
    %v763 = vxor.u32 %v762, 2147483648
    %v764 = vmul.f32 %v763, 1.442695
    %v765 = vpow.pop %v764
    %v766 = vadd.f32 %v765, 1.0
    %v767 = vrcp.pop %v766
    %v768 = vmul.f32 1.0, %v767
    %769 = vmatprep.subr.mxu0 0.0
    %770 = vmatpush1.msra.mxu0 %v262
    %771 = vmatprep.subr.mxu0 0.0
    %772 = vmatpush1.msra.mxu0 %v263
    %773 = vmatprep.subr.mxu0 0.0
    %774 = vmatpush1.msra.mxu0 %v264
    %775 = vmatprep.subr.mxu0 0.0
    %776 = vmatpush1.msra.mxu0 %v265
    %777 = vmatprep.subr.mxu0 0.0
    %778 = vmatpush1.msra.mxu0 0.0
    %779 = vmatprep.subr.mxu0 0.0
    %780 = vmatpush1.msra.mxu0 0.0
    %781 = vmatprep.subr.mxu0 0.0
    %782 = vmatpush1.msra.mxu0 0.0
    %783 = vmatprep.subr.mxu0 0.0
    %784 = vmatpush1.msra.mxu0 0.0
    %785 = vmatprep.subr.mxu0 0.0
    %786 = vmatpush1.msra.mxu0 0.0
    %787 = vmatprep.subr.mxu0 0.0
    %788 = vmatpush1.msra.mxu0 0.0
    %789 = vmatprep.subr.mxu0 0.0
    %790 = vmatpush1.msra.mxu0 0.0
    %791 = vmatprep.subr.mxu0 0.0
    %792 = vmatpush1.msra.mxu0 0.0
    %793 = vmatprep.subr.mxu0 0.0
    %794 = vmatpush1.msra.mxu0 0.0
    %795 = vmatprep.subr.mxu0 0.0
    %796 = vmatpush1.msra.mxu0 0.0
    %797 = vmatprep.subr.mxu0 0.0
    %798 = vmatpush1.msra.mxu0 0.0
    %799 = vmatprep.subr.mxu0 0.0
    %800 = vmatpush1.msra.mxu0 0.0
    %801 = vmatprep.subr.mxu0 0.0
    %802 = vmatpush1.msra.mxu0 0.0
    %803 = vmatprep.subr.mxu0 0.0
    %804 = vmatpush1.msra.mxu0 0.0
    %805 = vmatprep.subr.mxu0 0.0
    %806 = vmatpush1.msra.mxu0 0.0
    %807 = vmatprep.subr.mxu0 0.0
    %808 = vmatpush1.msra.mxu0 0.0
    %809 = vmatprep.subr.mxu0 0.0
    %810 = vmatpush1.msra.mxu0 0.0
    %811 = vmatprep.subr.mxu0 0.0
    %812 = vmatpush1.msra.mxu0 0.0
    %813 = vmatprep.subr.mxu0 0.0
    %814 = vmatpush1.msra.mxu0 0.0
    %815 = vmatprep.subr.mxu0 0.0
    %816 = vmatpush1.msra.mxu0 0.0
    %817 = vmatprep.subr.mxu0 0.0
    %818 = vmatpush1.msra.mxu0 0.0
    %819 = vmatprep.subr.mxu0 0.0
    %820 = vmatpush1.msra.mxu0 0.0
    %821 = vmatprep.subr.mxu0 0.0
    %822 = vmatpush1.msra.mxu0 0.0
    %823 = vmatprep.subr.mxu0 0.0
    %824 = vmatpush1.msra.mxu0 0.0
    %825 = vmatprep.subr.mxu0 0.0
    %826 = vmatpush1.msra.mxu0 0.0
    %827 = vmatprep.subr.mxu0 0.0
    %828 = vmatpush1.msra.mxu0 0.0
    %829 = vmatprep.subr.mxu0 0.0
    %830 = vmatpush1.msra.mxu0 0.0
    %831 = vmatprep.subr.mxu0 0.0
    %832 = vmatpush1.msra.mxu0 0.0
    %833 = vmatprep.mubr.f32.mxu0 0.0
    %834 = vmatmul.mubr.f32.gmra.mrb[0].mxu0 %v609
    %v835 = vpop.f32.mrb[0].mxu0
    %v836 = vadd.f32 0.0, %v835
    %v837 = vpop.f32.mrb[0].mxu0
    %838 = vdwg.mxu0
    %840 = vrot.lane.b32.xlu0 %v836, 64
    %v841 = vpop.permute.xlu0 %840
    %v843 = vadd.f32 %v221, %v841
    %v844 = vtanh.pop %v843
    %845 = vmatprep.subr.mxu0 0.0
    %846 = vmatpush1.msra.mxu0 %v266
    %847 = vmatprep.subr.mxu0 0.0
    %848 = vmatpush1.msra.mxu0 %v267
    %849 = vmatprep.subr.mxu0 0.0
    %850 = vmatpush1.msra.mxu0 %v268
    %851 = vmatprep.subr.mxu0 0.0
    %852 = vmatpush1.msra.mxu0 %v269
    %853 = vmatprep.subr.mxu0 0.0
    %854 = vmatpush1.msra.mxu0 0.0
    %855 = vmatprep.subr.mxu0 0.0
    %856 = vmatpush1.msra.mxu0 0.0
    %857 = vmatprep.subr.mxu0 0.0
    %858 = vmatpush1.msra.mxu0 0.0
    %859 = vmatprep.subr.mxu0 0.0
    %860 = vmatpush1.msra.mxu0 0.0
    %861 = vmatprep.subr.mxu0 0.0
    %862 = vmatpush1.msra.mxu0 0.0
    %863 = vmatprep.subr.mxu0 0.0
    %864 = vmatpush1.msra.mxu0 0.0
    %865 = vmatprep.subr.mxu0 0.0
    %866 = vmatpush1.msra.mxu0 0.0
    %867 = vmatprep.subr.mxu0 0.0
    %868 = vmatpush1.msra.mxu0 0.0
    %869 = vmatprep.subr.mxu0 0.0
    %870 = vmatpush1.msra.mxu0 0.0
    %871 = vmatprep.subr.mxu0 0.0
    %872 = vmatpush1.msra.mxu0 0.0
    %873 = vmatprep.subr.mxu0 0.0
    %874 = vmatpush1.msra.mxu0 0.0
    %875 = vmatprep.subr.mxu0 0.0
    %876 = vmatpush1.msra.mxu0 0.0
    %877 = vmatprep.subr.mxu0 0.0
    %878 = vmatpush1.msra.mxu0 0.0
    %879 = vmatprep.subr.mxu0 0.0
    %880 = vmatpush1.msra.mxu0 0.0
    %881 = vmatprep.subr.mxu0 0.0
    %882 = vmatpush1.msra.mxu0 0.0
    %883 = vmatprep.subr.mxu0 0.0
    %884 = vmatpush1.msra.mxu0 0.0
    %885 = vmatprep.subr.mxu0 0.0
    %886 = vmatpush1.msra.mxu0 0.0
    %887 = vmatprep.subr.mxu0 0.0
    %888 = vmatpush1.msra.mxu0 0.0
    %889 = vmatprep.subr.mxu0 0.0
    %890 = vmatpush1.msra.mxu0 0.0
    %891 = vmatprep.subr.mxu0 0.0
    %892 = vmatpush1.msra.mxu0 0.0
    %893 = vmatprep.subr.mxu0 0.0
    %894 = vmatpush1.msra.mxu0 0.0
    %895 = vmatprep.subr.mxu0 0.0
    %896 = vmatpush1.msra.mxu0 0.0
    %897 = vmatprep.subr.mxu0 0.0
    %898 = vmatpush1.msra.mxu0 0.0
    %899 = vmatprep.subr.mxu0 0.0
    %900 = vmatpush1.msra.mxu0 0.0
    %901 = vmatprep.subr.mxu0 0.0
    %902 = vmatpush1.msra.mxu0 0.0
    %903 = vmatprep.subr.mxu0 0.0
    %904 = vmatpush1.msra.mxu0 0.0
    %905 = vmatprep.subr.mxu0 0.0
    %906 = vmatpush1.msra.mxu0 0.0
    %907 = vmatprep.subr.mxu0 0.0
    %908 = vmatpush1.msra.mxu0 0.0
    %909 = vmatprep.mubr.f32.mxu0 0.0
    %910 = vmatmul.mubr.f32.gmra.mrb[0].mxu0 %v609
    %v911 = vpop.f32.mrb[0].mxu0
    %v912 = vadd.f32 0.0, %v911
    %v913 = vpop.f32.mrb[0].mxu0
    %914 = vdwg.mxu0
    %916 = vrot.lane.b32.xlu0 %v912, 96
    %v917 = vpop.permute.xlu0 %916
    %v919 = vadd.f32 %v221, %v917
    %v920 = vxor.u32 %v919, 2147483648
    %v921 = vmul.f32 %v920, 1.442695
    %v922 = vpow.pop %v921
    %v923 = vadd.f32 %v922, 1.0
    %v924 = vrcp.pop %v923
    %v925 = vmul.f32 1.0, %v924
    %v926 = vmul.f32 %v768, %v599
    %928 = vrot.lane.b32.xlu0 %v844, 64
    %v929 = vpop.permute.xlu0 %928
    %v931 = vmul.f32 %v687, %v929
    %933 = vrot.lane.b32.xlu0 %v931, 32
    %v934 = vpop.permute.xlu0 %933
    %v936 = vadd.f32 %v926, %v934
    %v937 = vtanh.pop %v936
    %939 = vrot.lane.b32.xlu0 %v937, 64
    %v940 = vpop.permute.xlu0 %939
    %v942 = vmul.f32 %v925, %v940
    %944 = vrot.lane.b32.xlu0 %v942, 32
    %v945 = vpop.permute.xlu0 %944
    %v946 = vsel %vm270, %v945, 0
    %948 = vmatprep.subr.mxu0 0.0
    %949 = vmatpush1.msra.mxu0 %v254
    %950 = vmatprep.subr.mxu0 0.0
    %951 = vmatpush1.msra.mxu0 %v255
    %952 = vmatprep.subr.mxu0 0.0
    %953 = vmatpush1.msra.mxu0 %v256
    %954 = vmatprep.subr.mxu0 0.0
    %955 = vmatpush1.msra.mxu0 %v257
    %956 = vmatprep.subr.mxu0 0.0
    %957 = vmatpush1.msra.mxu0 0.0
    %958 = vmatprep.subr.mxu0 0.0
    %959 = vmatpush1.msra.mxu0 0.0
    %960 = vmatprep.subr.mxu0 0.0
    %961 = vmatpush1.msra.mxu0 0.0
    %962 = vmatprep.subr.mxu0 0.0
    %963 = vmatpush1.msra.mxu0 0.0
    %964 = vmatprep.subr.mxu0 0.0
    %965 = vmatpush1.msra.mxu0 0.0
    %966 = vmatprep.subr.mxu0 0.0
    %967 = vmatpush1.msra.mxu0 0.0
    %968 = vmatprep.subr.mxu0 0.0
    %969 = vmatpush1.msra.mxu0 0.0
    %970 = vmatprep.subr.mxu0 0.0
    %971 = vmatpush1.msra.mxu0 0.0
    %972 = vmatprep.subr.mxu0 0.0
    %973 = vmatpush1.msra.mxu0 0.0
    %974 = vmatprep.subr.mxu0 0.0
    %975 = vmatpush1.msra.mxu0 0.0
    %976 = vmatprep.subr.mxu0 0.0
    %977 = vmatpush1.msra.mxu0 0.0
    %978 = vmatprep.subr.mxu0 0.0
    %979 = vmatpush1.msra.mxu0 0.0
    %980 = vmatprep.subr.mxu0 0.0
    %981 = vmatpush1.msra.mxu0 0.0
    %982 = vmatprep.subr.mxu0 0.0
    %983 = vmatpush1.msra.mxu0 0.0
    %984 = vmatprep.subr.mxu0 0.0
    %985 = vmatpush1.msra.mxu0 0.0
    %986 = vmatprep.subr.mxu0 0.0
    %987 = vmatpush1.msra.mxu0 0.0
    %988 = vmatprep.subr.mxu0 0.0
    %989 = vmatpush1.msra.mxu0 0.0
    %990 = vmatprep.subr.mxu0 0.0
    %991 = vmatpush1.msra.mxu0 0.0
    %992 = vmatprep.subr.mxu0 0.0
    %993 = vmatpush1.msra.mxu0 0.0
    %994 = vmatprep.subr.mxu0 0.0
    %995 = vmatpush1.msra.mxu0 0.0
    %996 = vmatprep.subr.mxu0 0.0
    %997 = vmatpush1.msra.mxu0 0.0
    %998 = vmatprep.subr.mxu0 0.0
    %999 = vmatpush1.msra.mxu0 0.0
    %1000 = vmatprep.subr.mxu0 0.0
    %1001 = vmatpush1.msra.mxu0 0.0
    %1002 = vmatprep.subr.mxu0 0.0
    %1003 = vmatpush1.msra.mxu0 0.0
    %1004 = vmatprep.subr.mxu0 0.0
    %1005 = vmatpush1.msra.mxu0 0.0
    %1006 = vmatprep.subr.mxu0 0.0
    %1007 = vmatpush1.msra.mxu0 0.0
    %1008 = vmatprep.subr.mxu0 0.0
    %1009 = vmatpush1.msra.mxu0 0.0
    %1010 = vmatprep.subr.mxu0 0.0
    %1011 = vmatpush1.msra.mxu0 0.0
    %1012 = vmatprep.mubr.f32.mxu0 0.0
    %1013 = vmatmul.mubr.f32.gmra.mrb[0].mxu0 %v946
    %v1014 = vpop.f32.mrb[0].mxu0
    %v1015 = vadd.f32 0.0, %v1014
    %v1016 = vpop.f32.mrb[0].mxu0
    %1017 = vdwg.mxu0
    %v1018 = vadd.f32 %v226, %v1015
    %v1019 = vxor.u32 %v1018, 2147483648
    %v1020 = vmul.f32 %v1019, 1.442695
    %v1021 = vpow.pop %v1020
    %v1022 = vadd.f32 %v1021, 1.0
    %v1023 = vrcp.pop %v1022
    %v1024 = vmul.f32 1.0, %v1023
    %1025 = vmatprep.subr.mxu0 0.0
    %1026 = vmatpush1.msra.mxu0 %v258
    %1027 = vmatprep.subr.mxu0 0.0
    %1028 = vmatpush1.msra.mxu0 %v259
    %1029 = vmatprep.subr.mxu0 0.0
    %1030 = vmatpush1.msra.mxu0 %v260
    %1031 = vmatprep.subr.mxu0 0.0
    %1032 = vmatpush1.msra.mxu0 %v261
    %1033 = vmatprep.subr.mxu0 0.0
    %1034 = vmatpush1.msra.mxu0 0.0
    %1035 = vmatprep.subr.mxu0 0.0
    %1036 = vmatpush1.msra.mxu0 0.0
    %1037 = vmatprep.subr.mxu0 0.0
    %1038 = vmatpush1.msra.mxu0 0.0
    %1039 = vmatprep.subr.mxu0 0.0
    %1040 = vmatpush1.msra.mxu0 0.0
    %1041 = vmatprep.subr.mxu0 0.0
    %1042 = vmatpush1.msra.mxu0 0.0
    %1043 = vmatprep.subr.mxu0 0.0
    %1044 = vmatpush1.msra.mxu0 0.0
    %1045 = vmatprep.subr.mxu0 0.0
    %1046 = vmatpush1.msra.mxu0 0.0
    %1047 = vmatprep.subr.mxu0 0.0
    %1048 = vmatpush1.msra.mxu0 0.0
    %1049 = vmatprep.subr.mxu0 0.0
    %1050 = vmatpush1.msra.mxu0 0.0
    %1051 = vmatprep.subr.mxu0 0.0
    %1052 = vmatpush1.msra.mxu0 0.0
    %1053 = vmatprep.subr.mxu0 0.0
    %1054 = vmatpush1.msra.mxu0 0.0
    %1055 = vmatprep.subr.mxu0 0.0
    %1056 = vmatpush1.msra.mxu0 0.0
    %1057 = vmatprep.subr.mxu0 0.0
    %1058 = vmatpush1.msra.mxu0 0.0
    %1059 = vmatprep.subr.mxu0 0.0
    %1060 = vmatpush1.msra.mxu0 0.0
    %1061 = vmatprep.subr.mxu0 0.0
    %1062 = vmatpush1.msra.mxu0 0.0
    %1063 = vmatprep.subr.mxu0 0.0
    %1064 = vmatpush1.msra.mxu0 0.0
    %1065 = vmatprep.subr.mxu0 0.0
    %1066 = vmatpush1.msra.mxu0 0.0
    %1067 = vmatprep.subr.mxu0 0.0
    %1068 = vmatpush1.msra.mxu0 0.0
    %1069 = vmatprep.subr.mxu0 0.0
    %1070 = vmatpush1.msra.mxu0 0.0
    %1071 = vmatprep.subr.mxu0 0.0
    %1072 = vmatpush1.msra.mxu0 0.0
    %1073 = vmatprep.subr.mxu0 0.0
    %1074 = vmatpush1.msra.mxu0 0.0
    %1075 = vmatprep.subr.mxu0 0.0
    %1076 = vmatpush1.msra.mxu0 0.0
    %1077 = vmatprep.subr.mxu0 0.0
    %1078 = vmatpush1.msra.mxu0 0.0
    %1079 = vmatprep.subr.mxu0 0.0
    %1080 = vmatpush1.msra.mxu0 0.0
    %1081 = vmatprep.subr.mxu0 0.0
    %1082 = vmatpush1.msra.mxu0 0.0
    %1083 = vmatprep.subr.mxu0 0.0
    %1084 = vmatpush1.msra.mxu0 0.0
    %1085 = vmatprep.subr.mxu0 0.0
    %1086 = vmatpush1.msra.mxu0 0.0
    %1087 = vmatprep.subr.mxu0 0.0
    %1088 = vmatpush1.msra.mxu0 0.0
    %1089 = vmatprep.mubr.f32.mxu0 0.0
    %1090 = vmatmul.mubr.f32.gmra.mrb[0].mxu0 %v946
    %v1091 = vpop.f32.mrb[0].mxu0
    %v1092 = vadd.f32 0.0, %v1091
    %v1093 = vpop.f32.mrb[0].mxu0
    %1094 = vdwg.mxu0
    %1096 = vrot.lane.b32.xlu0 %v1092, 32
    %v1097 = vpop.permute.xlu0 %1096
    %v1099 = vadd.f32 %v226, %v1097
    %v1100 = vxor.u32 %v1099, 2147483648
    %v1101 = vmul.f32 %v1100, 1.442695
    %v1102 = vpow.pop %v1101
    %v1103 = vadd.f32 %v1102, 1.0
    %v1104 = vrcp.pop %v1103
    %v1105 = vmul.f32 1.0, %v1104
    %1106 = vmatprep.subr.mxu0 0.0
    %1107 = vmatpush1.msra.mxu0 %v262
    %1108 = vmatprep.subr.mxu0 0.0
    %1109 = vmatpush1.msra.mxu0 %v263
    %1110 = vmatprep.subr.mxu0 0.0
    %1111 = vmatpush1.msra.mxu0 %v264
    %1112 = vmatprep.subr.mxu0 0.0
    %1113 = vmatpush1.msra.mxu0 %v265
    %1114 = vmatprep.subr.mxu0 0.0
    %1115 = vmatpush1.msra.mxu0 0.0
    %1116 = vmatprep.subr.mxu0 0.0
    %1117 = vmatpush1.msra.mxu0 0.0
    %1118 = vmatprep.subr.mxu0 0.0
    %1119 = vmatpush1.msra.mxu0 0.0
    %1120 = vmatprep.subr.mxu0 0.0
    %1121 = vmatpush1.msra.mxu0 0.0
    %1122 = vmatprep.subr.mxu0 0.0
    %1123 = vmatpush1.msra.mxu0 0.0
    %1124 = vmatprep.subr.mxu0 0.0
    %1125 = vmatpush1.msra.mxu0 0.0
    %1126 = vmatprep.subr.mxu0 0.0
    %1127 = vmatpush1.msra.mxu0 0.0
    %1128 = vmatprep.subr.mxu0 0.0
    %1129 = vmatpush1.msra.mxu0 0.0
    %1130 = vmatprep.subr.mxu0 0.0
    %1131 = vmatpush1.msra.mxu0 0.0
    %1132 = vmatprep.subr.mxu0 0.0
    %1133 = vmatpush1.msra.mxu0 0.0
    %1134 = vmatprep.subr.mxu0 0.0
    %1135 = vmatpush1.msra.mxu0 0.0
    %1136 = vmatprep.subr.mxu0 0.0
    %1137 = vmatpush1.msra.mxu0 0.0
    %1138 = vmatprep.subr.mxu0 0.0
    %1139 = vmatpush1.msra.mxu0 0.0
    %1140 = vmatprep.subr.mxu0 0.0
    %1141 = vmatpush1.msra.mxu0 0.0
    %1142 = vmatprep.subr.mxu0 0.0
    %1143 = vmatpush1.msra.mxu0 0.0
    %1144 = vmatprep.subr.mxu0 0.0
    %1145 = vmatpush1.msra.mxu0 0.0
    %1146 = vmatprep.subr.mxu0 0.0
    %1147 = vmatpush1.msra.mxu0 0.0
    %1148 = vmatprep.subr.mxu0 0.0
    %1149 = vmatpush1.msra.mxu0 0.0
    %1150 = vmatprep.subr.mxu0 0.0
    %1151 = vmatpush1.msra.mxu0 0.0
    %1152 = vmatprep.subr.mxu0 0.0
    %1153 = vmatpush1.msra.mxu0 0.0
    %1154 = vmatprep.subr.mxu0 0.0
    %1155 = vmatpush1.msra.mxu0 0.0
    %1156 = vmatprep.subr.mxu0 0.0
    %1157 = vmatpush1.msra.mxu0 0.0
    %1158 = vmatprep.subr.mxu0 0.0
    %1159 = vmatpush1.msra.mxu0 0.0
    %1160 = vmatprep.subr.mxu0 0.0
    %1161 = vmatpush1.msra.mxu0 0.0
    %1162 = vmatprep.subr.mxu0 0.0
    %1163 = vmatpush1.msra.mxu0 0.0
    %1164 = vmatprep.subr.mxu0 0.0
    %1165 = vmatpush1.msra.mxu0 0.0
    %1166 = vmatprep.subr.mxu0 0.0
    %1167 = vmatpush1.msra.mxu0 0.0
    %1168 = vmatprep.subr.mxu0 0.0
    %1169 = vmatpush1.msra.mxu0 0.0
    %1170 = vmatprep.mubr.f32.mxu0 0.0
    %1171 = vmatmul.mubr.f32.gmra.mrb[0].mxu0 %v946
    %v1172 = vpop.f32.mrb[0].mxu0
    %v1173 = vadd.f32 0.0, %v1172
    %v1174 = vpop.f32.mrb[0].mxu0
    %1175 = vdwg.mxu0
    %1177 = vrot.lane.b32.xlu0 %v1173, 64
    %v1178 = vpop.permute.xlu0 %1177
    %v1180 = vadd.f32 %v226, %v1178
    %v1181 = vtanh.pop %v1180
    %1182 = vmatprep.subr.mxu0 0.0
    %1183 = vmatpush1.msra.mxu0 %v266
    %1184 = vmatprep.subr.mxu0 0.0
    %1185 = vmatpush1.msra.mxu0 %v267
    %1186 = vmatprep.subr.mxu0 0.0
    %1187 = vmatpush1.msra.mxu0 %v268
    %1188 = vmatprep.subr.mxu0 0.0
    %1189 = vmatpush1.msra.mxu0 %v269
    %1190 = vmatprep.subr.mxu0 0.0
    %1191 = vmatpush1.msra.mxu0 0.0
    %1192 = vmatprep.subr.mxu0 0.0
    %1193 = vmatpush1.msra.mxu0 0.0
    %1194 = vmatprep.subr.mxu0 0.0
    %1195 = vmatpush1.msra.mxu0 0.0
    %1196 = vmatprep.subr.mxu0 0.0
    %1197 = vmatpush1.msra.mxu0 0.0
    %1198 = vmatprep.subr.mxu0 0.0
    %1199 = vmatpush1.msra.mxu0 0.0
    %1200 = vmatprep.subr.mxu0 0.0
    %1201 = vmatpush1.msra.mxu0 0.0
    %1202 = vmatprep.subr.mxu0 0.0
    %1203 = vmatpush1.msra.mxu0 0.0
    %1204 = vmatprep.subr.mxu0 0.0
    %1205 = vmatpush1.msra.mxu0 0.0
    %1206 = vmatprep.subr.mxu0 0.0
    %1207 = vmatpush1.msra.mxu0 0.0
    %1208 = vmatprep.subr.mxu0 0.0
    %1209 = vmatpush1.msra.mxu0 0.0
    %1210 = vmatprep.subr.mxu0 0.0
    %1211 = vmatpush1.msra.mxu0 0.0
    %1212 = vmatprep.subr.mxu0 0.0
    %1213 = vmatpush1.msra.mxu0 0.0
    %1214 = vmatprep.subr.mxu0 0.0
    %1215 = vmatpush1.msra.mxu0 0.0
    %1216 = vmatprep.subr.mxu0 0.0
    %1217 = vmatpush1.msra.mxu0 0.0
    %1218 = vmatprep.subr.mxu0 0.0
    %1219 = vmatpush1.msra.mxu0 0.0
    %1220 = vmatprep.subr.mxu0 0.0
    %1221 = vmatpush1.msra.mxu0 0.0
    %1222 = vmatprep.subr.mxu0 0.0
    %1223 = vmatpush1.msra.mxu0 0.0
    %1224 = vmatprep.subr.mxu0 0.0
    %1225 = vmatpush1.msra.mxu0 0.0
    %1226 = vmatprep.subr.mxu0 0.0
    %1227 = vmatpush1.msra.mxu0 0.0
    %1228 = vmatprep.subr.mxu0 0.0
    %1229 = vmatpush1.msra.mxu0 0.0
    %1230 = vmatprep.subr.mxu0 0.0
    %1231 = vmatpush1.msra.mxu0 0.0
    %1232 = vmatprep.subr.mxu0 0.0
    %1233 = vmatpush1.msra.mxu0 0.0
    %1234 = vmatprep.subr.mxu0 0.0
    %1235 = vmatpush1.msra.mxu0 0.0
    %1236 = vmatprep.subr.mxu0 0.0
    %1237 = vmatpush1.msra.mxu0 0.0
    %1238 = vmatprep.subr.mxu0 0.0
    %1239 = vmatpush1.msra.mxu0 0.0
    %1240 = vmatprep.subr.mxu0 0.0
    %1241 = vmatpush1.msra.mxu0 0.0
    %1242 = vmatprep.subr.mxu0 0.0
    %1243 = vmatpush1.msra.mxu0 0.0
    %1244 = vmatprep.subr.mxu0 0.0
    %1245 = vmatpush1.msra.mxu0 0.0
    %1246 = vmatprep.mubr.f32.mxu0 0.0
    %1247 = vmatmul.mubr.f32.gmra.mrb[0].mxu0 %v946
    %v1248 = vpop.f32.mrb[0].mxu0
    %v1249 = vadd.f32 0.0, %v1248
    %v1250 = vpop.f32.mrb[0].mxu0
    %1251 = vdwg.mxu0
    %1253 = vrot.lane.b32.xlu0 %v1249, 96
    %v1254 = vpop.permute.xlu0 %1253
    %v1256 = vadd.f32 %v226, %v1254
    %v1257 = vxor.u32 %v1256, 2147483648
    %v1258 = vmul.f32 %v1257, 1.442695
    %v1259 = vpow.pop %v1258
    %v1260 = vadd.f32 %v1259, 1.0
    %v1261 = vrcp.pop %v1260
    %v1262 = vmul.f32 1.0, %v1261
    %v1263 = vmul.f32 %v1105, %v936
    %1265 = vrot.lane.b32.xlu0 %v1181, 64
    %v1266 = vpop.permute.xlu0 %1265
    %v1268 = vmul.f32 %v1024, %v1266
    %1270 = vrot.lane.b32.xlu0 %v1268, 32
    %v1271 = vpop.permute.xlu0 %1270
    %v1273 = vadd.f32 %v1263, %v1271
    %v1274 = vtanh.pop %v1273
    %1276 = vrot.lane.b32.xlu0 %v1274, 64
    %v1277 = vpop.permute.xlu0 %1276
    %v1279 = vmul.f32 %v1262, %v1277
    %1281 = vrot.lane.b32.xlu0 %v1279, 32
    %v1282 = vpop.permute.xlu0 %1281
    %v1283 = vsel %vm270, %v1282, 0
    %1285 = vmatprep.subr.mxu0 0.0
    %1286 = vmatpush1.msra.mxu0 %v254
    %1287 = vmatprep.subr.mxu0 0.0
    %1288 = vmatpush1.msra.mxu0 %v255
    %1289 = vmatprep.subr.mxu0 0.0
    %1290 = vmatpush1.msra.mxu0 %v256
    %1291 = vmatprep.subr.mxu0 0.0
    %1292 = vmatpush1.msra.mxu0 %v257
    %1293 = vmatprep.subr.mxu0 0.0
    %1294 = vmatpush1.msra.mxu0 0.0
    %1295 = vmatprep.subr.mxu0 0.0
    %1296 = vmatpush1.msra.mxu0 0.0
    %1297 = vmatprep.subr.mxu0 0.0
    %1298 = vmatpush1.msra.mxu0 0.0
    %1299 = vmatprep.subr.mxu0 0.0
    %1300 = vmatpush1.msra.mxu0 0.0
    %1301 = vmatprep.subr.mxu0 0.0
    %1302 = vmatpush1.msra.mxu0 0.0
    %1303 = vmatprep.subr.mxu0 0.0
    %1304 = vmatpush1.msra.mxu0 0.0
    %1305 = vmatprep.subr.mxu0 0.0
    %1306 = vmatpush1.msra.mxu0 0.0
    %1307 = vmatprep.subr.mxu0 0.0
    %1308 = vmatpush1.msra.mxu0 0.0
    %1309 = vmatprep.subr.mxu0 0.0
    %1310 = vmatpush1.msra.mxu0 0.0
    %1311 = vmatprep.subr.mxu0 0.0
    %1312 = vmatpush1.msra.mxu0 0.0
    %1313 = vmatprep.subr.mxu0 0.0
    %1314 = vmatpush1.msra.mxu0 0.0
    %1315 = vmatprep.subr.mxu0 0.0
    %1316 = vmatpush1.msra.mxu0 0.0
    %1317 = vmatprep.subr.mxu0 0.0
    %1318 = vmatpush1.msra.mxu0 0.0
    %1319 = vmatprep.subr.mxu0 0.0
    %1320 = vmatpush1.msra.mxu0 0.0
    %1321 = vmatprep.subr.mxu0 0.0
    %1322 = vmatpush1.msra.mxu0 0.0
    %1323 = vmatprep.subr.mxu0 0.0
    %1324 = vmatpush1.msra.mxu0 0.0
    %1325 = vmatprep.subr.mxu0 0.0
    %1326 = vmatpush1.msra.mxu0 0.0
    %1327 = vmatprep.subr.mxu0 0.0
    %1328 = vmatpush1.msra.mxu0 0.0
    %1329 = vmatprep.subr.mxu0 0.0
    %1330 = vmatpush1.msra.mxu0 0.0
    %1331 = vmatprep.subr.mxu0 0.0
    %1332 = vmatpush1.msra.mxu0 0.0
    %1333 = vmatprep.subr.mxu0 0.0
    %1334 = vmatpush1.msra.mxu0 0.0
    %1335 = vmatprep.subr.mxu0 0.0
    %1336 = vmatpush1.msra.mxu0 0.0
    %1337 = vmatprep.subr.mxu0 0.0
    %1338 = vmatpush1.msra.mxu0 0.0
    %1339 = vmatprep.subr.mxu0 0.0
    %1340 = vmatpush1.msra.mxu0 0.0
    %1341 = vmatprep.subr.mxu0 0.0
    %1342 = vmatpush1.msra.mxu0 0.0
    %1343 = vmatprep.subr.mxu0 0.0
    %1344 = vmatpush1.msra.mxu0 0.0
    %1345 = vmatprep.subr.mxu0 0.0
    %1346 = vmatpush1.msra.mxu0 0.0
    %1347 = vmatprep.subr.mxu0 0.0
    %1348 = vmatpush1.msra.mxu0 0.0
    %1349 = vmatprep.mubr.f32.mxu0 0.0
    %1350 = vmatmul.mubr.f32.gmra.mrb[0].mxu0 %v1283
    %v1351 = vpop.f32.mrb[0].mxu0
    %v1352 = vadd.f32 0.0, %v1351
    %v1353 = vpop.f32.mrb[0].mxu0
    %1354 = vdwg.mxu0
    %v1355 = vadd.f32 %v231, %v1352
    %v1356 = vxor.u32 %v1355, 2147483648
    %v1357 = vmul.f32 %v1356, 1.442695
    %v1358 = vpow.pop %v1357
    %v1359 = vadd.f32 %v1358, 1.0
    %v1360 = vrcp.pop %v1359
    %v1361 = vmul.f32 1.0, %v1360
    %1362 = vmatprep.subr.mxu0 0.0
    %1363 = vmatpush1.msra.mxu0 %v258
    %1364 = vmatprep.subr.mxu0 0.0
    %1365 = vmatpush1.msra.mxu0 %v259
    %1366 = vmatprep.subr.mxu0 0.0
    %1367 = vmatpush1.msra.mxu0 %v260
    %1368 = vmatprep.subr.mxu0 0.0
    %1369 = vmatpush1.msra.mxu0 %v261
    %1370 = vmatprep.subr.mxu0 0.0
    %1371 = vmatpush1.msra.mxu0 0.0
    %1372 = vmatprep.subr.mxu0 0.0
    %1373 = vmatpush1.msra.mxu0 0.0
    %1374 = vmatprep.subr.mxu0 0.0
    %1375 = vmatpush1.msra.mxu0 0.0
    %1376 = vmatprep.subr.mxu0 0.0
    %1377 = vmatpush1.msra.mxu0 0.0
    %1378 = vmatprep.subr.mxu0 0.0
    %1379 = vmatpush1.msra.mxu0 0.0
    %1380 = vmatprep.subr.mxu0 0.0
    %1381 = vmatpush1.msra.mxu0 0.0
    %1382 = vmatprep.subr.mxu0 0.0
    %1383 = vmatpush1.msra.mxu0 0.0
    %1384 = vmatprep.subr.mxu0 0.0
    %1385 = vmatpush1.msra.mxu0 0.0
    %1386 = vmatprep.subr.mxu0 0.0
    %1387 = vmatpush1.msra.mxu0 0.0
    %1388 = vmatprep.subr.mxu0 0.0
    %1389 = vmatpush1.msra.mxu0 0.0
    %1390 = vmatprep.subr.mxu0 0.0
    %1391 = vmatpush1.msra.mxu0 0.0
    %1392 = vmatprep.subr.mxu0 0.0
    %1393 = vmatpush1.msra.mxu0 0.0
    %1394 = vmatprep.subr.mxu0 0.0
    %1395 = vmatpush1.msra.mxu0 0.0
    %1396 = vmatprep.subr.mxu0 0.0
    %1397 = vmatpush1.msra.mxu0 0.0
    %1398 = vmatprep.subr.mxu0 0.0
    %1399 = vmatpush1.msra.mxu0 0.0
    %1400 = vmatprep.subr.mxu0 0.0
    %1401 = vmatpush1.msra.mxu0 0.0
    %1402 = vmatprep.subr.mxu0 0.0
    %1403 = vmatpush1.msra.mxu0 0.0
    %1404 = vmatprep.subr.mxu0 0.0
    %1405 = vmatpush1.msra.mxu0 0.0
    %1406 = vmatprep.subr.mxu0 0.0
    %1407 = vmatpush1.msra.mxu0 0.0
    %1408 = vmatprep.subr.mxu0 0.0
    %1409 = vmatpush1.msra.mxu0 0.0
    %1410 = vmatprep.subr.mxu0 0.0
    %1411 = vmatpush1.msra.mxu0 0.0
    %1412 = vmatprep.subr.mxu0 0.0
    %1413 = vmatpush1.msra.mxu0 0.0
    %1414 = vmatprep.subr.mxu0 0.0
    %1415 = vmatpush1.msra.mxu0 0.0
    %1416 = vmatprep.subr.mxu0 0.0
    %1417 = vmatpush1.msra.mxu0 0.0
    %1418 = vmatprep.subr.mxu0 0.0
    %1419 = vmatpush1.msra.mxu0 0.0
    %1420 = vmatprep.subr.mxu0 0.0
    %1421 = vmatpush1.msra.mxu0 0.0
    %1422 = vmatprep.subr.mxu0 0.0
    %1423 = vmatpush1.msra.mxu0 0.0
    %1424 = vmatprep.subr.mxu0 0.0
    %1425 = vmatpush1.msra.mxu0 0.0
    %1426 = vmatprep.mubr.f32.mxu0 0.0
    %1427 = vmatmul.mubr.f32.gmra.mrb[0].mxu0 %v1283
    %v1428 = vpop.f32.mrb[0].mxu0
    %v1429 = vadd.f32 0.0, %v1428
    %v1430 = vpop.f32.mrb[0].mxu0
    %1431 = vdwg.mxu0
    %1433 = vrot.lane.b32.xlu0 %v1429, 32
    %v1434 = vpop.permute.xlu0 %1433
    %v1436 = vadd.f32 %v231, %v1434
    %v1437 = vxor.u32 %v1436, 2147483648
    %v1438 = vmul.f32 %v1437, 1.442695
    %v1439 = vpow.pop %v1438
    %v1440 = vadd.f32 %v1439, 1.0
    %v1441 = vrcp.pop %v1440
    %v1442 = vmul.f32 1.0, %v1441
    %1443 = vmatprep.subr.mxu0 0.0
    %1444 = vmatpush1.msra.mxu0 %v262
    %1445 = vmatprep.subr.mxu0 0.0
    %1446 = vmatpush1.msra.mxu0 %v263
    %1447 = vmatprep.subr.mxu0 0.0
    %1448 = vmatpush1.msra.mxu0 %v264
    %1449 = vmatprep.subr.mxu0 0.0
    %1450 = vmatpush1.msra.mxu0 %v265
    %1451 = vmatprep.subr.mxu0 0.0
    %1452 = vmatpush1.msra.mxu0 0.0
    %1453 = vmatprep.subr.mxu0 0.0
    %1454 = vmatpush1.msra.mxu0 0.0
    %1455 = vmatprep.subr.mxu0 0.0
    %1456 = vmatpush1.msra.mxu0 0.0
    %1457 = vmatprep.subr.mxu0 0.0
    %1458 = vmatpush1.msra.mxu0 0.0
    %1459 = vmatprep.subr.mxu0 0.0
    %1460 = vmatpush1.msra.mxu0 0.0
    %1461 = vmatprep.subr.mxu0 0.0
    %1462 = vmatpush1.msra.mxu0 0.0
    %1463 = vmatprep.subr.mxu0 0.0
    %1464 = vmatpush1.msra.mxu0 0.0
    %1465 = vmatprep.subr.mxu0 0.0
    %1466 = vmatpush1.msra.mxu0 0.0
    %1467 = vmatprep.subr.mxu0 0.0
    %1468 = vmatpush1.msra.mxu0 0.0
    %1469 = vmatprep.subr.mxu0 0.0
    %1470 = vmatpush1.msra.mxu0 0.0
    %1471 = vmatprep.subr.mxu0 0.0
    %1472 = vmatpush1.msra.mxu0 0.0
    %1473 = vmatprep.subr.mxu0 0.0
    %1474 = vmatpush1.msra.mxu0 0.0
    %1475 = vmatprep.subr.mxu0 0.0
    %1476 = vmatpush1.msra.mxu0 0.0
    %1477 = vmatprep.subr.mxu0 0.0
    %1478 = vmatpush1.msra.mxu0 0.0
    %1479 = vmatprep.subr.mxu0 0.0
    %1480 = vmatpush1.msra.mxu0 0.0
    %1481 = vmatprep.subr.mxu0 0.0
    %1482 = vmatpush1.msra.mxu0 0.0
    %1483 = vmatprep.subr.mxu0 0.0
    %1484 = vmatpush1.msra.mxu0 0.0
    %1485 = vmatprep.subr.mxu0 0.0
    %1486 = vmatpush1.msra.mxu0 0.0
    %1487 = vmatprep.subr.mxu0 0.0
    %1488 = vmatpush1.msra.mxu0 0.0
    %1489 = vmatprep.subr.mxu0 0.0
    %1490 = vmatpush1.msra.mxu0 0.0
    %1491 = vmatprep.subr.mxu0 0.0
    %1492 = vmatpush1.msra.mxu0 0.0
    %1493 = vmatprep.subr.mxu0 0.0
    %1494 = vmatpush1.msra.mxu0 0.0
    %1495 = vmatprep.subr.mxu0 0.0
    %1496 = vmatpush1.msra.mxu0 0.0
    %1497 = vmatprep.subr.mxu0 0.0
    %1498 = vmatpush1.msra.mxu0 0.0
    %1499 = vmatprep.subr.mxu0 0.0
    %1500 = vmatpush1.msra.mxu0 0.0
    %1501 = vmatprep.subr.mxu0 0.0
    %1502 = vmatpush1.msra.mxu0 0.0
    %1503 = vmatprep.subr.mxu0 0.0
    %1504 = vmatpush1.msra.mxu0 0.0
    %1505 = vmatprep.subr.mxu0 0.0
    %1506 = vmatpush1.msra.mxu0 0.0
    %1507 = vmatprep.mubr.f32.mxu0 0.0
    %1508 = vmatmul.mubr.f32.gmra.mrb[0].mxu0 %v1283
    %v1509 = vpop.f32.mrb[0].mxu0
    %v1510 = vadd.f32 0.0, %v1509
    %v1511 = vpop.f32.mrb[0].mxu0
    %1512 = vdwg.mxu0
    %1514 = vrot.lane.b32.xlu0 %v1510, 64
    %v1515 = vpop.permute.xlu0 %1514
    %v1517 = vadd.f32 %v231, %v1515
    %v1518 = vtanh.pop %v1517
    %1519 = vmatprep.subr.mxu0 0.0
    %1520 = vmatpush1.msra.mxu0 %v266
    %1521 = vmatprep.subr.mxu0 0.0
    %1522 = vmatpush1.msra.mxu0 %v267
    %1523 = vmatprep.subr.mxu0 0.0
    %1524 = vmatpush1.msra.mxu0 %v268
    %1525 = vmatprep.subr.mxu0 0.0
    %1526 = vmatpush1.msra.mxu0 %v269
    %1527 = vmatprep.subr.mxu0 0.0
    %1528 = vmatpush1.msra.mxu0 0.0
    %1529 = vmatprep.subr.mxu0 0.0
    %1530 = vmatpush1.msra.mxu0 0.0
    %1531 = vmatprep.subr.mxu0 0.0
    %1532 = vmatpush1.msra.mxu0 0.0
    %1533 = vmatprep.subr.mxu0 0.0
    %1534 = vmatpush1.msra.mxu0 0.0
    %1535 = vmatprep.subr.mxu0 0.0
    %1536 = vmatpush1.msra.mxu0 0.0
    %1537 = vmatprep.subr.mxu0 0.0
    %1538 = vmatpush1.msra.mxu0 0.0
    %1539 = vmatprep.subr.mxu0 0.0
    %1540 = vmatpush1.msra.mxu0 0.0
    %1541 = vmatprep.subr.mxu0 0.0
    %1542 = vmatpush1.msra.mxu0 0.0
    %1543 = vmatprep.subr.mxu0 0.0
    %1544 = vmatpush1.msra.mxu0 0.0
    %1545 = vmatprep.subr.mxu0 0.0
    %1546 = vmatpush1.msra.mxu0 0.0
    %1547 = vmatprep.subr.mxu0 0.0
    %1548 = vmatpush1.msra.mxu0 0.0
    %1549 = vmatprep.subr.mxu0 0.0
    %1550 = vmatpush1.msra.mxu0 0.0
    %1551 = vmatprep.subr.mxu0 0.0
    %1552 = vmatpush1.msra.mxu0 0.0
    %1553 = vmatprep.subr.mxu0 0.0
    %1554 = vmatpush1.msra.mxu0 0.0
    %1555 = vmatprep.subr.mxu0 0.0
    %1556 = vmatpush1.msra.mxu0 0.0
    %1557 = vmatprep.subr.mxu0 0.0
    %1558 = vmatpush1.msra.mxu0 0.0
    %1559 = vmatprep.subr.mxu0 0.0
    %1560 = vmatpush1.msra.mxu0 0.0
    %1561 = vmatprep.subr.mxu0 0.0
    %1562 = vmatpush1.msra.mxu0 0.0
    %1563 = vmatprep.subr.mxu0 0.0
    %1564 = vmatpush1.msra.mxu0 0.0
    %1565 = vmatprep.subr.mxu0 0.0
    %1566 = vmatpush1.msra.mxu0 0.0
    %1567 = vmatprep.subr.mxu0 0.0
    %1568 = vmatpush1.msra.mxu0 0.0
    %1569 = vmatprep.subr.mxu0 0.0
    %1570 = vmatpush1.msra.mxu0 0.0
    %1571 = vmatprep.subr.mxu0 0.0
    %1572 = vmatpush1.msra.mxu0 0.0
    %1573 = vmatprep.subr.mxu0 0.0
    %1574 = vmatpush1.msra.mxu0 0.0
    %1575 = vmatprep.subr.mxu0 0.0
    %1576 = vmatpush1.msra.mxu0 0.0
    %1577 = vmatprep.subr.mxu0 0.0
    %1578 = vmatpush1.msra.mxu0 0.0
    %1579 = vmatprep.subr.mxu0 0.0
    %1580 = vmatpush1.msra.mxu0 0.0
    %1581 = vmatprep.subr.mxu0 0.0
    %1582 = vmatpush1.msra.mxu0 0.0
    %1583 = vmatprep.mubr.f32.mxu0 0.0
    %1584 = vmatmul.mubr.f32.gmra.mrb[0].mxu0 %v1283
    %v1585 = vpop.f32.mrb[0].mxu0
    %v1586 = vadd.f32 0.0, %v1585
    %v1587 = vpop.f32.mrb[0].mxu0
    %1588 = vdwg.mxu0
    %1590 = vrot.lane.b32.xlu0 %v1586, 96
    %v1591 = vpop.permute.xlu0 %1590
    %v1593 = vadd.f32 %v231, %v1591
    %v1594 = vxor.u32 %v1593, 2147483648
    %v1595 = vmul.f32 %v1594, 1.442695
    %v1596 = vpow.pop %v1595
    %v1597 = vadd.f32 %v1596, 1.0
    %v1598 = vrcp.pop %v1597
    %v1599 = vmul.f32 1.0, %v1598
    %v1600 = vmul.f32 %v1442, %v1273
    %1602 = vrot.lane.b32.xlu0 %v1518, 64
    %v1603 = vpop.permute.xlu0 %1602
    %v1605 = vmul.f32 %v1361, %v1603
    %1607 = vrot.lane.b32.xlu0 %v1605, 32
    %v1608 = vpop.permute.xlu0 %1607
    %v1610 = vadd.f32 %v1600, %v1608
    %v1611 = vtanh.pop %v1610
    %1613 = vrot.lane.b32.xlu0 %v1611, 64
    %v1614 = vpop.permute.xlu0 %1613
    %v1616 = vmul.f32 %v1599, %v1614
    %1618 = vrot.lane.b32.xlu0 %v1616, 32
    %v1619 = vpop.permute.xlu0 %1618
    %v1620 = vsel %vm270, %v1619, 0
    %1622 = vmatprep.subr.mxu0 0.0
    %1623 = vmatpush1.msra.mxu0 %v254
    %1624 = vmatprep.subr.mxu0 0.0
    %1625 = vmatpush1.msra.mxu0 %v255
    %1626 = vmatprep.subr.mxu0 0.0
    %1627 = vmatpush1.msra.mxu0 %v256
    %1628 = vmatprep.subr.mxu0 0.0
    %1629 = vmatpush1.msra.mxu0 %v257
    %1630 = vmatprep.subr.mxu0 0.0
    %1631 = vmatpush1.msra.mxu0 0.0
    %1632 = vmatprep.subr.mxu0 0.0
    %1633 = vmatpush1.msra.mxu0 0.0
    %1634 = vmatprep.subr.mxu0 0.0
    %1635 = vmatpush1.msra.mxu0 0.0
    %1636 = vmatprep.subr.mxu0 0.0
    %1637 = vmatpush1.msra.mxu0 0.0
    %1638 = vmatprep.subr.mxu0 0.0
    %1639 = vmatpush1.msra.mxu0 0.0
    %1640 = vmatprep.subr.mxu0 0.0
    %1641 = vmatpush1.msra.mxu0 0.0
    %1642 = vmatprep.subr.mxu0 0.0
    %1643 = vmatpush1.msra.mxu0 0.0
    %1644 = vmatprep.subr.mxu0 0.0
    %1645 = vmatpush1.msra.mxu0 0.0
    %1646 = vmatprep.subr.mxu0 0.0
    %1647 = vmatpush1.msra.mxu0 0.0
    %1648 = vmatprep.subr.mxu0 0.0
    %1649 = vmatpush1.msra.mxu0 0.0
    %1650 = vmatprep.subr.mxu0 0.0
    %1651 = vmatpush1.msra.mxu0 0.0
    %1652 = vmatprep.subr.mxu0 0.0
    %1653 = vmatpush1.msra.mxu0 0.0
    %1654 = vmatprep.subr.mxu0 0.0
    %1655 = vmatpush1.msra.mxu0 0.0
    %1656 = vmatprep.subr.mxu0 0.0
    %1657 = vmatpush1.msra.mxu0 0.0
    %1658 = vmatprep.subr.mxu0 0.0
    %1659 = vmatpush1.msra.mxu0 0.0
    %1660 = vmatprep.subr.mxu0 0.0
    %1661 = vmatpush1.msra.mxu0 0.0
    %1662 = vmatprep.subr.mxu0 0.0
    %1663 = vmatpush1.msra.mxu0 0.0
    %1664 = vmatprep.subr.mxu0 0.0
    %1665 = vmatpush1.msra.mxu0 0.0
    %1666 = vmatprep.subr.mxu0 0.0
    %1667 = vmatpush1.msra.mxu0 0.0
    %1668 = vmatprep.subr.mxu0 0.0
    %1669 = vmatpush1.msra.mxu0 0.0
    %1670 = vmatprep.subr.mxu0 0.0
    %1671 = vmatpush1.msra.mxu0 0.0
    %1672 = vmatprep.subr.mxu0 0.0
    %1673 = vmatpush1.msra.mxu0 0.0
    %1674 = vmatprep.subr.mxu0 0.0
    %1675 = vmatpush1.msra.mxu0 0.0
    %1676 = vmatprep.subr.mxu0 0.0
    %1677 = vmatpush1.msra.mxu0 0.0
    %1678 = vmatprep.subr.mxu0 0.0
    %1679 = vmatpush1.msra.mxu0 0.0
    %1680 = vmatprep.subr.mxu0 0.0
    %1681 = vmatpush1.msra.mxu0 0.0
    %1682 = vmatprep.subr.mxu0 0.0
    %1683 = vmatpush1.msra.mxu0 0.0
    %1684 = vmatprep.subr.mxu0 0.0
    %1685 = vmatpush1.msra.mxu0 0.0
    %1686 = vmatprep.mubr.f32.mxu0 0.0
    %1687 = vmatmul.mubr.f32.gmra.mrb[0].mxu0 %v1620
    %v1688 = vpop.f32.mrb[0].mxu0
    %v1689 = vadd.f32 0.0, %v1688
    %v1690 = vpop.f32.mrb[0].mxu0
    %1691 = vdwg.mxu0
    %v1692 = vadd.f32 %v236, %v1689
    %v1693 = vxor.u32 %v1692, 2147483648
    %v1694 = vmul.f32 %v1693, 1.442695
    %v1695 = vpow.pop %v1694
    %v1696 = vadd.f32 %v1695, 1.0
    %v1697 = vrcp.pop %v1696
    %v1698 = vmul.f32 1.0, %v1697
    %1699 = vmatprep.subr.mxu0 0.0
    %1700 = vmatpush1.msra.mxu0 %v258
    %1701 = vmatprep.subr.mxu0 0.0
    %1702 = vmatpush1.msra.mxu0 %v259
    %1703 = vmatprep.subr.mxu0 0.0
    %1704 = vmatpush1.msra.mxu0 %v260
    %1705 = vmatprep.subr.mxu0 0.0
    %1706 = vmatpush1.msra.mxu0 %v261
    %1707 = vmatprep.subr.mxu0 0.0
    %1708 = vmatpush1.msra.mxu0 0.0
    %1709 = vmatprep.subr.mxu0 0.0
    %1710 = vmatpush1.msra.mxu0 0.0
    %1711 = vmatprep.subr.mxu0 0.0
    %1712 = vmatpush1.msra.mxu0 0.0
    %1713 = vmatprep.subr.mxu0 0.0
    %1714 = vmatpush1.msra.mxu0 0.0
    %1715 = vmatprep.subr.mxu0 0.0
    %1716 = vmatpush1.msra.mxu0 0.0
    %1717 = vmatprep.subr.mxu0 0.0
    %1718 = vmatpush1.msra.mxu0 0.0
    %1719 = vmatprep.subr.mxu0 0.0
    %1720 = vmatpush1.msra.mxu0 0.0
    %1721 = vmatprep.subr.mxu0 0.0
    %1722 = vmatpush1.msra.mxu0 0.0
    %1723 = vmatprep.subr.mxu0 0.0
    %1724 = vmatpush1.msra.mxu0 0.0
    %1725 = vmatprep.subr.mxu0 0.0
    %1726 = vmatpush1.msra.mxu0 0.0
    %1727 = vmatprep.subr.mxu0 0.0
    %1728 = vmatpush1.msra.mxu0 0.0
    %1729 = vmatprep.subr.mxu0 0.0
    %1730 = vmatpush1.msra.mxu0 0.0
    %1731 = vmatprep.subr.mxu0 0.0
    %1732 = vmatpush1.msra.mxu0 0.0
    %1733 = vmatprep.subr.mxu0 0.0
    %1734 = vmatpush1.msra.mxu0 0.0
    %1735 = vmatprep.subr.mxu0 0.0
    %1736 = vmatpush1.msra.mxu0 0.0
    %1737 = vmatprep.subr.mxu0 0.0
    %1738 = vmatpush1.msra.mxu0 0.0
    %1739 = vmatprep.subr.mxu0 0.0
    %1740 = vmatpush1.msra.mxu0 0.0
    %1741 = vmatprep.subr.mxu0 0.0
    %1742 = vmatpush1.msra.mxu0 0.0
    %1743 = vmatprep.subr.mxu0 0.0
    %1744 = vmatpush1.msra.mxu0 0.0
    %1745 = vmatprep.subr.mxu0 0.0
    %1746 = vmatpush1.msra.mxu0 0.0
    %1747 = vmatprep.subr.mxu0 0.0
    %1748 = vmatpush1.msra.mxu0 0.0
    %1749 = vmatprep.subr.mxu0 0.0
    %1750 = vmatpush1.msra.mxu0 0.0
    %1751 = vmatprep.subr.mxu0 0.0
    %1752 = vmatpush1.msra.mxu0 0.0
    %1753 = vmatprep.subr.mxu0 0.0
    %1754 = vmatpush1.msra.mxu0 0.0
    %1755 = vmatprep.subr.mxu0 0.0
    %1756 = vmatpush1.msra.mxu0 0.0
    %1757 = vmatprep.subr.mxu0 0.0
    %1758 = vmatpush1.msra.mxu0 0.0
    %1759 = vmatprep.subr.mxu0 0.0
    %1760 = vmatpush1.msra.mxu0 0.0
    %1761 = vmatprep.subr.mxu0 0.0
    %1762 = vmatpush1.msra.mxu0 0.0
    %1763 = vmatprep.mubr.f32.mxu0 0.0
    %1764 = vmatmul.mubr.f32.gmra.mrb[0].mxu0 %v1620
    %v1765 = vpop.f32.mrb[0].mxu0
    %v1766 = vadd.f32 0.0, %v1765
    %v1767 = vpop.f32.mrb[0].mxu0
    %1768 = vdwg.mxu0
    %1770 = vrot.lane.b32.xlu0 %v1766, 32
    %v1771 = vpop.permute.xlu0 %1770
    %v1773 = vadd.f32 %v236, %v1771
    %v1774 = vxor.u32 %v1773, 2147483648
    %v1775 = vmul.f32 %v1774, 1.442695
    %v1776 = vpow.pop %v1775
    %v1777 = vadd.f32 %v1776, 1.0
    %v1778 = vrcp.pop %v1777
    %v1779 = vmul.f32 1.0, %v1778
    %1780 = vmatprep.subr.mxu0 0.0
    %1781 = vmatpush1.msra.mxu0 %v262
    %1782 = vmatprep.subr.mxu0 0.0
    %1783 = vmatpush1.msra.mxu0 %v263
    %1784 = vmatprep.subr.mxu0 0.0
    %1785 = vmatpush1.msra.mxu0 %v264
    %1786 = vmatprep.subr.mxu0 0.0
    %1787 = vmatpush1.msra.mxu0 %v265
    %1788 = vmatprep.subr.mxu0 0.0
    %1789 = vmatpush1.msra.mxu0 0.0
    %1790 = vmatprep.subr.mxu0 0.0
    %1791 = vmatpush1.msra.mxu0 0.0
    %1792 = vmatprep.subr.mxu0 0.0
    %1793 = vmatpush1.msra.mxu0 0.0
    %1794 = vmatprep.subr.mxu0 0.0
    %1795 = vmatpush1.msra.mxu0 0.0
    %1796 = vmatprep.subr.mxu0 0.0
    %1797 = vmatpush1.msra.mxu0 0.0
    %1798 = vmatprep.subr.mxu0 0.0
    %1799 = vmatpush1.msra.mxu0 0.0
    %1800 = vmatprep.subr.mxu0 0.0
    %1801 = vmatpush1.msra.mxu0 0.0
    %1802 = vmatprep.subr.mxu0 0.0
    %1803 = vmatpush1.msra.mxu0 0.0
    %1804 = vmatprep.subr.mxu0 0.0
    %1805 = vmatpush1.msra.mxu0 0.0
    %1806 = vmatprep.subr.mxu0 0.0
    %1807 = vmatpush1.msra.mxu0 0.0
    %1808 = vmatprep.subr.mxu0 0.0
    %1809 = vmatpush1.msra.mxu0 0.0
    %1810 = vmatprep.subr.mxu0 0.0
    %1811 = vmatpush1.msra.mxu0 0.0
    %1812 = vmatprep.subr.mxu0 0.0
    %1813 = vmatpush1.msra.mxu0 0.0
    %1814 = vmatprep.subr.mxu0 0.0
    %1815 = vmatpush1.msra.mxu0 0.0
    %1816 = vmatprep.subr.mxu0 0.0
    %1817 = vmatpush1.msra.mxu0 0.0
    %1818 = vmatprep.subr.mxu0 0.0
    %1819 = vmatpush1.msra.mxu0 0.0
    %1820 = vmatprep.subr.mxu0 0.0
    %1821 = vmatpush1.msra.mxu0 0.0
    %1822 = vmatprep.subr.mxu0 0.0
    %1823 = vmatpush1.msra.mxu0 0.0
    %1824 = vmatprep.subr.mxu0 0.0
    %1825 = vmatpush1.msra.mxu0 0.0
    %1826 = vmatprep.subr.mxu0 0.0
    %1827 = vmatpush1.msra.mxu0 0.0
    %1828 = vmatprep.subr.mxu0 0.0
    %1829 = vmatpush1.msra.mxu0 0.0
    %1830 = vmatprep.subr.mxu0 0.0
    %1831 = vmatpush1.msra.mxu0 0.0
    %1832 = vmatprep.subr.mxu0 0.0
    %1833 = vmatpush1.msra.mxu0 0.0
    %1834 = vmatprep.subr.mxu0 0.0
    %1835 = vmatpush1.msra.mxu0 0.0
    %1836 = vmatprep.subr.mxu0 0.0
    %1837 = vmatpush1.msra.mxu0 0.0
    %1838 = vmatprep.subr.mxu0 0.0
    %1839 = vmatpush1.msra.mxu0 0.0
    %1840 = vmatprep.subr.mxu0 0.0
    %1841 = vmatpush1.msra.mxu0 0.0
    %1842 = vmatprep.subr.mxu0 0.0
    %1843 = vmatpush1.msra.mxu0 0.0
    %1844 = vmatprep.mubr.f32.mxu0 0.0
    %1845 = vmatmul.mubr.f32.gmra.mrb[0].mxu0 %v1620
    %v1846 = vpop.f32.mrb[0].mxu0
    %v1847 = vadd.f32 0.0, %v1846
    %v1848 = vpop.f32.mrb[0].mxu0
    %1849 = vdwg.mxu0
    %1851 = vrot.lane.b32.xlu0 %v1847, 64
    %v1852 = vpop.permute.xlu0 %1851
    %v1854 = vadd.f32 %v236, %v1852
    %v1855 = vtanh.pop %v1854
    %1856 = vmatprep.subr.mxu0 0.0
    %1857 = vmatpush1.msra.mxu0 %v266
    %1858 = vmatprep.subr.mxu0 0.0
    %1859 = vmatpush1.msra.mxu0 %v267
    %1860 = vmatprep.subr.mxu0 0.0
    %1861 = vmatpush1.msra.mxu0 %v268
    %1862 = vmatprep.subr.mxu0 0.0
    %1863 = vmatpush1.msra.mxu0 %v269
    %1864 = vmatprep.subr.mxu0 0.0
    %1865 = vmatpush1.msra.mxu0 0.0
    %1866 = vmatprep.subr.mxu0 0.0
    %1867 = vmatpush1.msra.mxu0 0.0
    %1868 = vmatprep.subr.mxu0 0.0
    %1869 = vmatpush1.msra.mxu0 0.0
    %1870 = vmatprep.subr.mxu0 0.0
    %1871 = vmatpush1.msra.mxu0 0.0
    %1872 = vmatprep.subr.mxu0 0.0
    %1873 = vmatpush1.msra.mxu0 0.0
    %1874 = vmatprep.subr.mxu0 0.0
    %1875 = vmatpush1.msra.mxu0 0.0
    %1876 = vmatprep.subr.mxu0 0.0
    %1877 = vmatpush1.msra.mxu0 0.0
    %1878 = vmatprep.subr.mxu0 0.0
    %1879 = vmatpush1.msra.mxu0 0.0
    %1880 = vmatprep.subr.mxu0 0.0
    %1881 = vmatpush1.msra.mxu0 0.0
    %1882 = vmatprep.subr.mxu0 0.0
    %1883 = vmatpush1.msra.mxu0 0.0
    %1884 = vmatprep.subr.mxu0 0.0
    %1885 = vmatpush1.msra.mxu0 0.0
    %1886 = vmatprep.subr.mxu0 0.0
    %1887 = vmatpush1.msra.mxu0 0.0
    %1888 = vmatprep.subr.mxu0 0.0
    %1889 = vmatpush1.msra.mxu0 0.0
    %1890 = vmatprep.subr.mxu0 0.0
    %1891 = vmatpush1.msra.mxu0 0.0
    %1892 = vmatprep.subr.mxu0 0.0
    %1893 = vmatpush1.msra.mxu0 0.0
    %1894 = vmatprep.subr.mxu0 0.0
    %1895 = vmatpush1.msra.mxu0 0.0
    %1896 = vmatprep.subr.mxu0 0.0
    %1897 = vmatpush1.msra.mxu0 0.0
    %1898 = vmatprep.subr.mxu0 0.0
    %1899 = vmatpush1.msra.mxu0 0.0
    %1900 = vmatprep.subr.mxu0 0.0
    %1901 = vmatpush1.msra.mxu0 0.0
    %1902 = vmatprep.subr.mxu0 0.0
    %1903 = vmatpush1.msra.mxu0 0.0
    %1904 = vmatprep.subr.mxu0 0.0
    %1905 = vmatpush1.msra.mxu0 0.0
    %1906 = vmatprep.subr.mxu0 0.0
    %1907 = vmatpush1.msra.mxu0 0.0
    %1908 = vmatprep.subr.mxu0 0.0
    %1909 = vmatpush1.msra.mxu0 0.0
    %1910 = vmatprep.subr.mxu0 0.0
    %1911 = vmatpush1.msra.mxu0 0.0
    %1912 = vmatprep.subr.mxu0 0.0
    %1913 = vmatpush1.msra.mxu0 0.0
    %1914 = vmatprep.subr.mxu0 0.0
    %1915 = vmatpush1.msra.mxu0 0.0
    %1916 = vmatprep.subr.mxu0 0.0
    %1917 = vmatpush1.msra.mxu0 0.0
    %1918 = vmatprep.subr.mxu0 0.0
    %1919 = vmatpush1.msra.mxu0 0.0
    %1920 = vmatprep.mubr.f32.mxu0 0.0
    %1921 = vmatmul.mubr.f32.gmra.mrb[0].mxu0 %v1620
    %v1922 = vpop.f32.mrb[0].mxu0
    %v1923 = vadd.f32 0.0, %v1922
    %v1924 = vpop.f32.mrb[0].mxu0
    %1925 = vdwg.mxu0
    %1927 = vrot.lane.b32.xlu0 %v1923, 96
    %v1928 = vpop.permute.xlu0 %1927
    %v1930 = vadd.f32 %v236, %v1928
    %v1931 = vxor.u32 %v1930, 2147483648
    %v1932 = vmul.f32 %v1931, 1.442695
    %v1933 = vpow.pop %v1932
    %v1934 = vadd.f32 %v1933, 1.0
    %v1935 = vrcp.pop %v1934
    %v1936 = vmul.f32 1.0, %v1935
    %v1937 = vmul.f32 %v1779, %v1610
    %1939 = vrot.lane.b32.xlu0 %v1855, 64
    %v1940 = vpop.permute.xlu0 %1939
    %v1942 = vmul.f32 %v1698, %v1940
    %1944 = vrot.lane.b32.xlu0 %v1942, 32
    %v1945 = vpop.permute.xlu0 %1944
    %v1947 = vadd.f32 %v1937, %v1945
    %v1948 = vtanh.pop %v1947
    %1950 = vrot.lane.b32.xlu0 %v1948, 64
    %v1951 = vpop.permute.xlu0 %1950
    %v1953 = vmul.f32 %v1936, %v1951
    %1955 = vrot.lane.b32.xlu0 %v1953, 32
    %v1956 = vpop.permute.xlu0 %1955
    %v1957 = vsel %vm270, %v1956, 0
    %1959 = vmatprep.subr.mxu0 0.0
    %1960 = vmatpush1.msra.mxu0 %v254
    %1961 = vmatprep.subr.mxu0 0.0
    %1962 = vmatpush1.msra.mxu0 %v255
    %1963 = vmatprep.subr.mxu0 0.0
    %1964 = vmatpush1.msra.mxu0 %v256
    %1965 = vmatprep.subr.mxu0 0.0
    %1966 = vmatpush1.msra.mxu0 %v257
    %1967 = vmatprep.subr.mxu0 0.0
    %1968 = vmatpush1.msra.mxu0 0.0
    %1969 = vmatprep.subr.mxu0 0.0
    %1970 = vmatpush1.msra.mxu0 0.0
    %1971 = vmatprep.subr.mxu0 0.0
    %1972 = vmatpush1.msra.mxu0 0.0
    %1973 = vmatprep.subr.mxu0 0.0
    %1974 = vmatpush1.msra.mxu0 0.0
    %1975 = vmatprep.subr.mxu0 0.0
    %1976 = vmatpush1.msra.mxu0 0.0
    %1977 = vmatprep.subr.mxu0 0.0
    %1978 = vmatpush1.msra.mxu0 0.0
    %1979 = vmatprep.subr.mxu0 0.0
    %1980 = vmatpush1.msra.mxu0 0.0
    %1981 = vmatprep.subr.mxu0 0.0
    %1982 = vmatpush1.msra.mxu0 0.0
    %1983 = vmatprep.subr.mxu0 0.0
    %1984 = vmatpush1.msra.mxu0 0.0
    %1985 = vmatprep.subr.mxu0 0.0
    %1986 = vmatpush1.msra.mxu0 0.0
    %1987 = vmatprep.subr.mxu0 0.0
    %1988 = vmatpush1.msra.mxu0 0.0
    %1989 = vmatprep.subr.mxu0 0.0
    %1990 = vmatpush1.msra.mxu0 0.0
    %1991 = vmatprep.subr.mxu0 0.0
    %1992 = vmatpush1.msra.mxu0 0.0
    %1993 = vmatprep.subr.mxu0 0.0
    %1994 = vmatpush1.msra.mxu0 0.0
    %1995 = vmatprep.subr.mxu0 0.0
    %1996 = vmatpush1.msra.mxu0 0.0
    %1997 = vmatprep.subr.mxu0 0.0
    %1998 = vmatpush1.msra.mxu0 0.0
    %1999 = vmatprep.subr.mxu0 0.0
    %2000 = vmatpush1.msra.mxu0 0.0
    %2001 = vmatprep.subr.mxu0 0.0
    %2002 = vmatpush1.msra.mxu0 0.0
    %2003 = vmatprep.subr.mxu0 0.0
    %2004 = vmatpush1.msra.mxu0 0.0
    %2005 = vmatprep.subr.mxu0 0.0
    %2006 = vmatpush1.msra.mxu0 0.0
    %2007 = vmatprep.subr.mxu0 0.0
    %2008 = vmatpush1.msra.mxu0 0.0
    %2009 = vmatprep.subr.mxu0 0.0
    %2010 = vmatpush1.msra.mxu0 0.0
    %2011 = vmatprep.subr.mxu0 0.0
    %2012 = vmatpush1.msra.mxu0 0.0
    %2013 = vmatprep.subr.mxu0 0.0
    %2014 = vmatpush1.msra.mxu0 0.0
    %2015 = vmatprep.subr.mxu0 0.0
    %2016 = vmatpush1.msra.mxu0 0.0
    %2017 = vmatprep.subr.mxu0 0.0
    %2018 = vmatpush1.msra.mxu0 0.0
    %2019 = vmatprep.subr.mxu0 0.0
    %2020 = vmatpush1.msra.mxu0 0.0
    %2021 = vmatprep.subr.mxu0 0.0
    %2022 = vmatpush1.msra.mxu0 0.0
    %2023 = vmatprep.mubr.f32.mxu0 0.0
    %2024 = vmatmul.mubr.f32.gmra.mrb[0].mxu0 %v1957
    %v2025 = vpop.f32.mrb[0].mxu0
    %v2026 = vadd.f32 0.0, %v2025
    %v2027 = vpop.f32.mrb[0].mxu0
    %2028 = vdwg.mxu0
    %v2029 = vadd.f32 %v241, %v2026
    %v2030 = vxor.u32 %v2029, 2147483648
    %v2031 = vmul.f32 %v2030, 1.442695
    %v2032 = vpow.pop %v2031
    %v2033 = vadd.f32 %v2032, 1.0
    %v2034 = vrcp.pop %v2033
    %v2035 = vmul.f32 1.0, %v2034
    %2036 = vmatprep.subr.mxu0 0.0
    %2037 = vmatpush1.msra.mxu0 %v258
    %2038 = vmatprep.subr.mxu0 0.0
    %2039 = vmatpush1.msra.mxu0 %v259
    %2040 = vmatprep.subr.mxu0 0.0
    %2041 = vmatpush1.msra.mxu0 %v260
    %2042 = vmatprep.subr.mxu0 0.0
    %2043 = vmatpush1.msra.mxu0 %v261
    %2044 = vmatprep.subr.mxu0 0.0
    %2045 = vmatpush1.msra.mxu0 0.0
    %2046 = vmatprep.subr.mxu0 0.0
    %2047 = vmatpush1.msra.mxu0 0.0
    %2048 = vmatprep.subr.mxu0 0.0
    %2049 = vmatpush1.msra.mxu0 0.0
    %2050 = vmatprep.subr.mxu0 0.0
    %2051 = vmatpush1.msra.mxu0 0.0
    %2052 = vmatprep.subr.mxu0 0.0
    %2053 = vmatpush1.msra.mxu0 0.0
    %2054 = vmatprep.subr.mxu0 0.0
    %2055 = vmatpush1.msra.mxu0 0.0
    %2056 = vmatprep.subr.mxu0 0.0
    %2057 = vmatpush1.msra.mxu0 0.0
    %2058 = vmatprep.subr.mxu0 0.0
    %2059 = vmatpush1.msra.mxu0 0.0
    %2060 = vmatprep.subr.mxu0 0.0
    %2061 = vmatpush1.msra.mxu0 0.0
    %2062 = vmatprep.subr.mxu0 0.0
    %2063 = vmatpush1.msra.mxu0 0.0
    %2064 = vmatprep.subr.mxu0 0.0
    %2065 = vmatpush1.msra.mxu0 0.0
    %2066 = vmatprep.subr.mxu0 0.0
    %2067 = vmatpush1.msra.mxu0 0.0
    %2068 = vmatprep.subr.mxu0 0.0
    %2069 = vmatpush1.msra.mxu0 0.0
    %2070 = vmatprep.subr.mxu0 0.0
    %2071 = vmatpush1.msra.mxu0 0.0
    %2072 = vmatprep.subr.mxu0 0.0
    %2073 = vmatpush1.msra.mxu0 0.0
    %2074 = vmatprep.subr.mxu0 0.0
    %2075 = vmatpush1.msra.mxu0 0.0
    %2076 = vmatprep.subr.mxu0 0.0
    %2077 = vmatpush1.msra.mxu0 0.0
    %2078 = vmatprep.subr.mxu0 0.0
    %2079 = vmatpush1.msra.mxu0 0.0
    %2080 = vmatprep.subr.mxu0 0.0
    %2081 = vmatpush1.msra.mxu0 0.0
    %2082 = vmatprep.subr.mxu0 0.0
    %2083 = vmatpush1.msra.mxu0 0.0
    %2084 = vmatprep.subr.mxu0 0.0
    %2085 = vmatpush1.msra.mxu0 0.0
    %2086 = vmatprep.subr.mxu0 0.0
    %2087 = vmatpush1.msra.mxu0 0.0
    %2088 = vmatprep.subr.mxu0 0.0
    %2089 = vmatpush1.msra.mxu0 0.0
    %2090 = vmatprep.subr.mxu0 0.0
    %2091 = vmatpush1.msra.mxu0 0.0
    %2092 = vmatprep.subr.mxu0 0.0
    %2093 = vmatpush1.msra.mxu0 0.0
    %2094 = vmatprep.subr.mxu0 0.0
    %2095 = vmatpush1.msra.mxu0 0.0
    %2096 = vmatprep.subr.mxu0 0.0
    %2097 = vmatpush1.msra.mxu0 0.0
    %2098 = vmatprep.subr.mxu0 0.0
    %2099 = vmatpush1.msra.mxu0 0.0
    %2100 = vmatprep.mubr.f32.mxu0 0.0
    %2101 = vmatmul.mubr.f32.gmra.mrb[0].mxu0 %v1957
    %v2102 = vpop.f32.mrb[0].mxu0
    %v2103 = vadd.f32 0.0, %v2102
    %v2104 = vpop.f32.mrb[0].mxu0
    %2105 = vdwg.mxu0
    %2107 = vrot.lane.b32.xlu0 %v2103, 32
    %v2108 = vpop.permute.xlu0 %2107
    %v2110 = vadd.f32 %v241, %v2108
    %v2111 = vxor.u32 %v2110, 2147483648
    %v2112 = vmul.f32 %v2111, 1.442695
    %v2113 = vpow.pop %v2112
    %v2114 = vadd.f32 %v2113, 1.0
    %v2115 = vrcp.pop %v2114
    %v2116 = vmul.f32 1.0, %v2115
    %2117 = vmatprep.subr.mxu0 0.0
    %2118 = vmatpush1.msra.mxu0 %v262
    %2119 = vmatprep.subr.mxu0 0.0
    %2120 = vmatpush1.msra.mxu0 %v263
    %2121 = vmatprep.subr.mxu0 0.0
    %2122 = vmatpush1.msra.mxu0 %v264
    %2123 = vmatprep.subr.mxu0 0.0
    %2124 = vmatpush1.msra.mxu0 %v265
    %2125 = vmatprep.subr.mxu0 0.0
    %2126 = vmatpush1.msra.mxu0 0.0
    %2127 = vmatprep.subr.mxu0 0.0
    %2128 = vmatpush1.msra.mxu0 0.0
    %2129 = vmatprep.subr.mxu0 0.0
    %2130 = vmatpush1.msra.mxu0 0.0
    %2131 = vmatprep.subr.mxu0 0.0
    %2132 = vmatpush1.msra.mxu0 0.0
    %2133 = vmatprep.subr.mxu0 0.0
    %2134 = vmatpush1.msra.mxu0 0.0
    %2135 = vmatprep.subr.mxu0 0.0
    %2136 = vmatpush1.msra.mxu0 0.0
    %2137 = vmatprep.subr.mxu0 0.0
    %2138 = vmatpush1.msra.mxu0 0.0
    %2139 = vmatprep.subr.mxu0 0.0
    %2140 = vmatpush1.msra.mxu0 0.0
    %2141 = vmatprep.subr.mxu0 0.0
    %2142 = vmatpush1.msra.mxu0 0.0
    %2143 = vmatprep.subr.mxu0 0.0
    %2144 = vmatpush1.msra.mxu0 0.0
    %2145 = vmatprep.subr.mxu0 0.0
    %2146 = vmatpush1.msra.mxu0 0.0
    %2147 = vmatprep.subr.mxu0 0.0
    %2148 = vmatpush1.msra.mxu0 0.0
    %2149 = vmatprep.subr.mxu0 0.0
    %2150 = vmatpush1.msra.mxu0 0.0
    %2151 = vmatprep.subr.mxu0 0.0
    %2152 = vmatpush1.msra.mxu0 0.0
    %2153 = vmatprep.subr.mxu0 0.0
    %2154 = vmatpush1.msra.mxu0 0.0
    %2155 = vmatprep.subr.mxu0 0.0
    %2156 = vmatpush1.msra.mxu0 0.0
    %2157 = vmatprep.subr.mxu0 0.0
    %2158 = vmatpush1.msra.mxu0 0.0
    %2159 = vmatprep.subr.mxu0 0.0
    %2160 = vmatpush1.msra.mxu0 0.0
    %2161 = vmatprep.subr.mxu0 0.0
    %2162 = vmatpush1.msra.mxu0 0.0
    %2163 = vmatprep.subr.mxu0 0.0
    %2164 = vmatpush1.msra.mxu0 0.0
    %2165 = vmatprep.subr.mxu0 0.0
    %2166 = vmatpush1.msra.mxu0 0.0
    %2167 = vmatprep.subr.mxu0 0.0
    %2168 = vmatpush1.msra.mxu0 0.0
    %2169 = vmatprep.subr.mxu0 0.0
    %2170 = vmatpush1.msra.mxu0 0.0
    %2171 = vmatprep.subr.mxu0 0.0
    %2172 = vmatpush1.msra.mxu0 0.0
    %2173 = vmatprep.subr.mxu0 0.0
    %2174 = vmatpush1.msra.mxu0 0.0
    %2175 = vmatprep.subr.mxu0 0.0
    %2176 = vmatpush1.msra.mxu0 0.0
    %2177 = vmatprep.subr.mxu0 0.0
    %2178 = vmatpush1.msra.mxu0 0.0
    %2179 = vmatprep.subr.mxu0 0.0
    %2180 = vmatpush1.msra.mxu0 0.0
    %2181 = vmatprep.mubr.f32.mxu0 0.0
    %2182 = vmatmul.mubr.f32.gmra.mrb[0].mxu0 %v1957
    %v2183 = vpop.f32.mrb[0].mxu0
    %v2184 = vadd.f32 0.0, %v2183
    %v2185 = vpop.f32.mrb[0].mxu0
    %2186 = vdwg.mxu0
    %2188 = vrot.lane.b32.xlu0 %v2184, 64
    %v2189 = vpop.permute.xlu0 %2188
    %v2191 = vadd.f32 %v241, %v2189
    %v2192 = vtanh.pop %v2191
    %2193 = vmatprep.subr.mxu0 0.0
    %2194 = vmatpush1.msra.mxu0 %v266
    %2195 = vmatprep.subr.mxu0 0.0
    %2196 = vmatpush1.msra.mxu0 %v267
    %2197 = vmatprep.subr.mxu0 0.0
    %2198 = vmatpush1.msra.mxu0 %v268
    %2199 = vmatprep.subr.mxu0 0.0
    %2200 = vmatpush1.msra.mxu0 %v269
    %2201 = vmatprep.subr.mxu0 0.0
    %2202 = vmatpush1.msra.mxu0 0.0
    %2203 = vmatprep.subr.mxu0 0.0
    %2204 = vmatpush1.msra.mxu0 0.0
    %2205 = vmatprep.subr.mxu0 0.0
    %2206 = vmatpush1.msra.mxu0 0.0
    %2207 = vmatprep.subr.mxu0 0.0
    %2208 = vmatpush1.msra.mxu0 0.0
    %2209 = vmatprep.subr.mxu0 0.0
    %2210 = vmatpush1.msra.mxu0 0.0
    %2211 = vmatprep.subr.mxu0 0.0
    %2212 = vmatpush1.msra.mxu0 0.0
    %2213 = vmatprep.subr.mxu0 0.0
    %2214 = vmatpush1.msra.mxu0 0.0
    %2215 = vmatprep.subr.mxu0 0.0
    %2216 = vmatpush1.msra.mxu0 0.0
    %2217 = vmatprep.subr.mxu0 0.0
    %2218 = vmatpush1.msra.mxu0 0.0
    %2219 = vmatprep.subr.mxu0 0.0
    %2220 = vmatpush1.msra.mxu0 0.0
    %2221 = vmatprep.subr.mxu0 0.0
    %2222 = vmatpush1.msra.mxu0 0.0
    %2223 = vmatprep.subr.mxu0 0.0
    %2224 = vmatpush1.msra.mxu0 0.0
    %2225 = vmatprep.subr.mxu0 0.0
    %2226 = vmatpush1.msra.mxu0 0.0
    %2227 = vmatprep.subr.mxu0 0.0
    %2228 = vmatpush1.msra.mxu0 0.0
    %2229 = vmatprep.subr.mxu0 0.0
    %2230 = vmatpush1.msra.mxu0 0.0
    %2231 = vmatprep.subr.mxu0 0.0
    %2232 = vmatpush1.msra.mxu0 0.0
    %2233 = vmatprep.subr.mxu0 0.0
    %2234 = vmatpush1.msra.mxu0 0.0
    %2235 = vmatprep.subr.mxu0 0.0
    %2236 = vmatpush1.msra.mxu0 0.0
    %2237 = vmatprep.subr.mxu0 0.0
    %2238 = vmatpush1.msra.mxu0 0.0
    %2239 = vmatprep.subr.mxu0 0.0
    %2240 = vmatpush1.msra.mxu0 0.0
    %2241 = vmatprep.subr.mxu0 0.0
    %2242 = vmatpush1.msra.mxu0 0.0
    %2243 = vmatprep.subr.mxu0 0.0
    %2244 = vmatpush1.msra.mxu0 0.0
    %2245 = vmatprep.subr.mxu0 0.0
    %2246 = vmatpush1.msra.mxu0 0.0
    %2247 = vmatprep.subr.mxu0 0.0
    %2248 = vmatpush1.msra.mxu0 0.0
    %2249 = vmatprep.subr.mxu0 0.0
    %2250 = vmatpush1.msra.mxu0 0.0
    %2251 = vmatprep.subr.mxu0 0.0
    %2252 = vmatpush1.msra.mxu0 0.0
    %2253 = vmatprep.subr.mxu0 0.0
    %2254 = vmatpush1.msra.mxu0 0.0
    %2255 = vmatprep.subr.mxu0 0.0
    %2256 = vmatpush1.msra.mxu0 0.0
    %2257 = vmatprep.mubr.f32.mxu0 0.0
    %2258 = vmatmul.mubr.f32.gmra.mrb[0].mxu0 %v1957
    %v2259 = vpop.f32.mrb[0].mxu0
    %v2260 = vadd.f32 0.0, %v2259
    %v2261 = vpop.f32.mrb[0].mxu0
    %2262 = vdwg.mxu0
    %2264 = vrot.lane.b32.xlu0 %v2260, 96
    %v2265 = vpop.permute.xlu0 %2264
    %v2267 = vadd.f32 %v241, %v2265
    %v2268 = vxor.u32 %v2267, 2147483648
    %v2269 = vmul.f32 %v2268, 1.442695
    %v2270 = vpow.pop %v2269
    %v2271 = vadd.f32 %v2270, 1.0
    %v2272 = vrcp.pop %v2271
    %v2273 = vmul.f32 1.0, %v2272
    %v2274 = vmul.f32 %v2116, %v1947
    %2276 = vrot.lane.b32.xlu0 %v2192, 64
    %v2277 = vpop.permute.xlu0 %2276
    %v2279 = vmul.f32 %v2035, %v2277
    %2281 = vrot.lane.b32.xlu0 %v2279, 32
    %v2282 = vpop.permute.xlu0 %2281
    %v2284 = vadd.f32 %v2274, %v2282
    %v2285 = vtanh.pop %v2284
    %2287 = vrot.lane.b32.xlu0 %v2285, 64
    %v2288 = vpop.permute.xlu0 %2287
    %v2290 = vmul.f32 %v2273, %v2288
    %2292 = vrot.lane.b32.xlu0 %v2290, 32
    %v2293 = vpop.permute.xlu0 %2292
    %v2294 = vsel %vm270, %v2293, 0
    %2296 = vmatprep.subr.mxu0 0.0
    %2297 = vmatpush1.msra.mxu0 %v254
    %2298 = vmatprep.subr.mxu0 0.0
    %2299 = vmatpush1.msra.mxu0 %v255
    %2300 = vmatprep.subr.mxu0 0.0
    %2301 = vmatpush1.msra.mxu0 %v256
    %2302 = vmatprep.subr.mxu0 0.0
    %2303 = vmatpush1.msra.mxu0 %v257
    %2304 = vmatprep.subr.mxu0 0.0
    %2305 = vmatpush1.msra.mxu0 0.0
    %2306 = vmatprep.subr.mxu0 0.0
    %2307 = vmatpush1.msra.mxu0 0.0
    %2308 = vmatprep.subr.mxu0 0.0
    %2309 = vmatpush1.msra.mxu0 0.0
    %2310 = vmatprep.subr.mxu0 0.0
    %2311 = vmatpush1.msra.mxu0 0.0
    %2312 = vmatprep.subr.mxu0 0.0
    %2313 = vmatpush1.msra.mxu0 0.0
    %2314 = vmatprep.subr.mxu0 0.0
    %2315 = vmatpush1.msra.mxu0 0.0
    %2316 = vmatprep.subr.mxu0 0.0
    %2317 = vmatpush1.msra.mxu0 0.0
    %2318 = vmatprep.subr.mxu0 0.0
    %2319 = vmatpush1.msra.mxu0 0.0
    %2320 = vmatprep.subr.mxu0 0.0
    %2321 = vmatpush1.msra.mxu0 0.0
    %2322 = vmatprep.subr.mxu0 0.0
    %2323 = vmatpush1.msra.mxu0 0.0
    %2324 = vmatprep.subr.mxu0 0.0
    %2325 = vmatpush1.msra.mxu0 0.0
    %2326 = vmatprep.subr.mxu0 0.0
    %2327 = vmatpush1.msra.mxu0 0.0
    %2328 = vmatprep.subr.mxu0 0.0
    %2329 = vmatpush1.msra.mxu0 0.0
    %2330 = vmatprep.subr.mxu0 0.0
    %2331 = vmatpush1.msra.mxu0 0.0
    %2332 = vmatprep.subr.mxu0 0.0
    %2333 = vmatpush1.msra.mxu0 0.0
    %2334 = vmatprep.subr.mxu0 0.0
    %2335 = vmatpush1.msra.mxu0 0.0
    %2336 = vmatprep.subr.mxu0 0.0
    %2337 = vmatpush1.msra.mxu0 0.0
    %2338 = vmatprep.subr.mxu0 0.0
    %2339 = vmatpush1.msra.mxu0 0.0
    %2340 = vmatprep.subr.mxu0 0.0
    %2341 = vmatpush1.msra.mxu0 0.0
    %2342 = vmatprep.subr.mxu0 0.0
    %2343 = vmatpush1.msra.mxu0 0.0
    %2344 = vmatprep.subr.mxu0 0.0
    %2345 = vmatpush1.msra.mxu0 0.0
    %2346 = vmatprep.subr.mxu0 0.0
    %2347 = vmatpush1.msra.mxu0 0.0
    %2348 = vmatprep.subr.mxu0 0.0
    %2349 = vmatpush1.msra.mxu0 0.0
    %2350 = vmatprep.subr.mxu0 0.0
    %2351 = vmatpush1.msra.mxu0 0.0
    %2352 = vmatprep.subr.mxu0 0.0
    %2353 = vmatpush1.msra.mxu0 0.0
    %2354 = vmatprep.subr.mxu0 0.0
    %2355 = vmatpush1.msra.mxu0 0.0
    %2356 = vmatprep.subr.mxu0 0.0
    %2357 = vmatpush1.msra.mxu0 0.0
    %2358 = vmatprep.subr.mxu0 0.0
    %2359 = vmatpush1.msra.mxu0 0.0
    %2360 = vmatprep.mubr.f32.mxu0 0.0
    %2361 = vmatmul.mubr.f32.gmra.mrb[0].mxu0 %v2294
    %v2362 = vpop.f32.mrb[0].mxu0
    %v2363 = vadd.f32 0.0, %v2362
    %v2364 = vpop.f32.mrb[0].mxu0
    %2365 = vdwg.mxu0
    %v2366 = vadd.f32 %v246, %v2363
    %v2367 = vxor.u32 %v2366, 2147483648
    %v2368 = vmul.f32 %v2367, 1.442695
    %v2369 = vpow.pop %v2368
    %v2370 = vadd.f32 %v2369, 1.0
    %v2371 = vrcp.pop %v2370
    %v2372 = vmul.f32 1.0, %v2371
    %2373 = vmatprep.subr.mxu0 0.0
    %2374 = vmatpush1.msra.mxu0 %v258
    %2375 = vmatprep.subr.mxu0 0.0
    %2376 = vmatpush1.msra.mxu0 %v259
    %2377 = vmatprep.subr.mxu0 0.0
    %2378 = vmatpush1.msra.mxu0 %v260
    %2379 = vmatprep.subr.mxu0 0.0
    %2380 = vmatpush1.msra.mxu0 %v261
    %2381 = vmatprep.subr.mxu0 0.0
    %2382 = vmatpush1.msra.mxu0 0.0
    %2383 = vmatprep.subr.mxu0 0.0
    %2384 = vmatpush1.msra.mxu0 0.0
    %2385 = vmatprep.subr.mxu0 0.0
    %2386 = vmatpush1.msra.mxu0 0.0
    %2387 = vmatprep.subr.mxu0 0.0
    %2388 = vmatpush1.msra.mxu0 0.0
    %2389 = vmatprep.subr.mxu0 0.0
    %2390 = vmatpush1.msra.mxu0 0.0
    %2391 = vmatprep.subr.mxu0 0.0
    %2392 = vmatpush1.msra.mxu0 0.0
    %2393 = vmatprep.subr.mxu0 0.0
    %2394 = vmatpush1.msra.mxu0 0.0
    %2395 = vmatprep.subr.mxu0 0.0
    %2396 = vmatpush1.msra.mxu0 0.0
    %2397 = vmatprep.subr.mxu0 0.0
    %2398 = vmatpush1.msra.mxu0 0.0
    %2399 = vmatprep.subr.mxu0 0.0
    %2400 = vmatpush1.msra.mxu0 0.0
    %2401 = vmatprep.subr.mxu0 0.0
    %2402 = vmatpush1.msra.mxu0 0.0
    %2403 = vmatprep.subr.mxu0 0.0
    %2404 = vmatpush1.msra.mxu0 0.0
    %2405 = vmatprep.subr.mxu0 0.0
    %2406 = vmatpush1.msra.mxu0 0.0
    %2407 = vmatprep.subr.mxu0 0.0
    %2408 = vmatpush1.msra.mxu0 0.0
    %2409 = vmatprep.subr.mxu0 0.0
    %2410 = vmatpush1.msra.mxu0 0.0
    %2411 = vmatprep.subr.mxu0 0.0
    %2412 = vmatpush1.msra.mxu0 0.0
    %2413 = vmatprep.subr.mxu0 0.0
    %2414 = vmatpush1.msra.mxu0 0.0
    %2415 = vmatprep.subr.mxu0 0.0
    %2416 = vmatpush1.msra.mxu0 0.0
    %2417 = vmatprep.subr.mxu0 0.0
    %2418 = vmatpush1.msra.mxu0 0.0
    %2419 = vmatprep.subr.mxu0 0.0
    %2420 = vmatpush1.msra.mxu0 0.0
    %2421 = vmatprep.subr.mxu0 0.0
    %2422 = vmatpush1.msra.mxu0 0.0
    %2423 = vmatprep.subr.mxu0 0.0
    %2424 = vmatpush1.msra.mxu0 0.0
    %2425 = vmatprep.subr.mxu0 0.0
    %2426 = vmatpush1.msra.mxu0 0.0
    %2427 = vmatprep.subr.mxu0 0.0
    %2428 = vmatpush1.msra.mxu0 0.0
    %2429 = vmatprep.subr.mxu0 0.0
    %2430 = vmatpush1.msra.mxu0 0.0
    %2431 = vmatprep.subr.mxu0 0.0
    %2432 = vmatpush1.msra.mxu0 0.0
    %2433 = vmatprep.subr.mxu0 0.0
    %2434 = vmatpush1.msra.mxu0 0.0
    %2435 = vmatprep.subr.mxu0 0.0
    %2436 = vmatpush1.msra.mxu0 0.0
    %2437 = vmatprep.mubr.f32.mxu0 0.0
    %2438 = vmatmul.mubr.f32.gmra.mrb[0].mxu0 %v2294
    %v2439 = vpop.f32.mrb[0].mxu0
    %v2440 = vadd.f32 0.0, %v2439
    %v2441 = vpop.f32.mrb[0].mxu0
    %2442 = vdwg.mxu0
    %2444 = vrot.lane.b32.xlu0 %v2440, 32
    %v2445 = vpop.permute.xlu0 %2444
    %v2447 = vadd.f32 %v246, %v2445
    %v2448 = vxor.u32 %v2447, 2147483648
    %v2449 = vmul.f32 %v2448, 1.442695
    %v2450 = vpow.pop %v2449
    %v2451 = vadd.f32 %v2450, 1.0
    %v2452 = vrcp.pop %v2451
    %v2453 = vmul.f32 1.0, %v2452
    %2454 = vmatprep.subr.mxu0 0.0
    %2455 = vmatpush1.msra.mxu0 %v262
    %2456 = vmatprep.subr.mxu0 0.0
    %2457 = vmatpush1.msra.mxu0 %v263
    %2458 = vmatprep.subr.mxu0 0.0
    %2459 = vmatpush1.msra.mxu0 %v264
    %2460 = vmatprep.subr.mxu0 0.0
    %2461 = vmatpush1.msra.mxu0 %v265
    %2462 = vmatprep.subr.mxu0 0.0
    %2463 = vmatpush1.msra.mxu0 0.0
    %2464 = vmatprep.subr.mxu0 0.0
    %2465 = vmatpush1.msra.mxu0 0.0
    %2466 = vmatprep.subr.mxu0 0.0
    %2467 = vmatpush1.msra.mxu0 0.0
    %2468 = vmatprep.subr.mxu0 0.0
    %2469 = vmatpush1.msra.mxu0 0.0
    %2470 = vmatprep.subr.mxu0 0.0
    %2471 = vmatpush1.msra.mxu0 0.0
    %2472 = vmatprep.subr.mxu0 0.0
    %2473 = vmatpush1.msra.mxu0 0.0
    %2474 = vmatprep.subr.mxu0 0.0
    %2475 = vmatpush1.msra.mxu0 0.0
    %2476 = vmatprep.subr.mxu0 0.0
    %2477 = vmatpush1.msra.mxu0 0.0
    %2478 = vmatprep.subr.mxu0 0.0
    %2479 = vmatpush1.msra.mxu0 0.0
    %2480 = vmatprep.subr.mxu0 0.0
    %2481 = vmatpush1.msra.mxu0 0.0
    %2482 = vmatprep.subr.mxu0 0.0
    %2483 = vmatpush1.msra.mxu0 0.0
    %2484 = vmatprep.subr.mxu0 0.0
    %2485 = vmatpush1.msra.mxu0 0.0
    %2486 = vmatprep.subr.mxu0 0.0
    %2487 = vmatpush1.msra.mxu0 0.0
    %2488 = vmatprep.subr.mxu0 0.0
    %2489 = vmatpush1.msra.mxu0 0.0
    %2490 = vmatprep.subr.mxu0 0.0
    %2491 = vmatpush1.msra.mxu0 0.0
    %2492 = vmatprep.subr.mxu0 0.0
    %2493 = vmatpush1.msra.mxu0 0.0
    %2494 = vmatprep.subr.mxu0 0.0
    %2495 = vmatpush1.msra.mxu0 0.0
    %2496 = vmatprep.subr.mxu0 0.0
    %2497 = vmatpush1.msra.mxu0 0.0
    %2498 = vmatprep.subr.mxu0 0.0
    %2499 = vmatpush1.msra.mxu0 0.0
    %2500 = vmatprep.subr.mxu0 0.0
    %2501 = vmatpush1.msra.mxu0 0.0
    %2502 = vmatprep.subr.mxu0 0.0
    %2503 = vmatpush1.msra.mxu0 0.0
    %2504 = vmatprep.subr.mxu0 0.0
    %2505 = vmatpush1.msra.mxu0 0.0
    %2506 = vmatprep.subr.mxu0 0.0
    %2507 = vmatpush1.msra.mxu0 0.0
    %2508 = vmatprep.subr.mxu0 0.0
    %2509 = vmatpush1.msra.mxu0 0.0
    %2510 = vmatprep.subr.mxu0 0.0
    %2511 = vmatpush1.msra.mxu0 0.0
    %2512 = vmatprep.subr.mxu0 0.0
    %2513 = vmatpush1.msra.mxu0 0.0
    %2514 = vmatprep.subr.mxu0 0.0
    %2515 = vmatpush1.msra.mxu0 0.0
    %2516 = vmatprep.subr.mxu0 0.0
    %2517 = vmatpush1.msra.mxu0 0.0
    %2518 = vmatprep.mubr.f32.mxu0 0.0
    %2519 = vmatmul.mubr.f32.gmra.mrb[0].mxu0 %v2294
    %v2520 = vpop.f32.mrb[0].mxu0
    %v2521 = vadd.f32 0.0, %v2520
    %v2522 = vpop.f32.mrb[0].mxu0
    %2523 = vdwg.mxu0
    %2525 = vrot.lane.b32.xlu0 %v2521, 64
    %v2526 = vpop.permute.xlu0 %2525
    %v2528 = vadd.f32 %v246, %v2526
    %v2529 = vtanh.pop %v2528
    %2530 = vmatprep.subr.mxu0 0.0
    %2531 = vmatpush1.msra.mxu0 %v266
    %2532 = vmatprep.subr.mxu0 0.0
    %2533 = vmatpush1.msra.mxu0 %v267
    %2534 = vmatprep.subr.mxu0 0.0
    %2535 = vmatpush1.msra.mxu0 %v268
    %2536 = vmatprep.subr.mxu0 0.0
    %2537 = vmatpush1.msra.mxu0 %v269
    %2538 = vmatprep.subr.mxu0 0.0
    %2539 = vmatpush1.msra.mxu0 0.0
    %2540 = vmatprep.subr.mxu0 0.0
    %2541 = vmatpush1.msra.mxu0 0.0
    %2542 = vmatprep.subr.mxu0 0.0
    %2543 = vmatpush1.msra.mxu0 0.0
    %2544 = vmatprep.subr.mxu0 0.0
    %2545 = vmatpush1.msra.mxu0 0.0
    %2546 = vmatprep.subr.mxu0 0.0
    %2547 = vmatpush1.msra.mxu0 0.0
    %2548 = vmatprep.subr.mxu0 0.0
    %2549 = vmatpush1.msra.mxu0 0.0
    %2550 = vmatprep.subr.mxu0 0.0
    %2551 = vmatpush1.msra.mxu0 0.0
    %2552 = vmatprep.subr.mxu0 0.0
    %2553 = vmatpush1.msra.mxu0 0.0
    %2554 = vmatprep.subr.mxu0 0.0
    %2555 = vmatpush1.msra.mxu0 0.0
    %2556 = vmatprep.subr.mxu0 0.0
    %2557 = vmatpush1.msra.mxu0 0.0
    %2558 = vmatprep.subr.mxu0 0.0
    %2559 = vmatpush1.msra.mxu0 0.0
    %2560 = vmatprep.subr.mxu0 0.0
    %2561 = vmatpush1.msra.mxu0 0.0
    %2562 = vmatprep.subr.mxu0 0.0
    %2563 = vmatpush1.msra.mxu0 0.0
    %2564 = vmatprep.subr.mxu0 0.0
    %2565 = vmatpush1.msra.mxu0 0.0
    %2566 = vmatprep.subr.mxu0 0.0
    %2567 = vmatpush1.msra.mxu0 0.0
    %2568 = vmatprep.subr.mxu0 0.0
    %2569 = vmatpush1.msra.mxu0 0.0
    %2570 = vmatprep.subr.mxu0 0.0
    %2571 = vmatpush1.msra.mxu0 0.0
    %2572 = vmatprep.subr.mxu0 0.0
    %2573 = vmatpush1.msra.mxu0 0.0
    %2574 = vmatprep.subr.mxu0 0.0
    %2575 = vmatpush1.msra.mxu0 0.0
    %2576 = vmatprep.subr.mxu0 0.0
    %2577 = vmatpush1.msra.mxu0 0.0
    %2578 = vmatprep.subr.mxu0 0.0
    %2579 = vmatpush1.msra.mxu0 0.0
    %2580 = vmatprep.subr.mxu0 0.0
    %2581 = vmatpush1.msra.mxu0 0.0
    %2582 = vmatprep.subr.mxu0 0.0
    %2583 = vmatpush1.msra.mxu0 0.0
    %2584 = vmatprep.subr.mxu0 0.0
    %2585 = vmatpush1.msra.mxu0 0.0
    %2586 = vmatprep.subr.mxu0 0.0
    %2587 = vmatpush1.msra.mxu0 0.0
    %2588 = vmatprep.subr.mxu0 0.0
    %2589 = vmatpush1.msra.mxu0 0.0
    %2590 = vmatprep.subr.mxu0 0.0
    %2591 = vmatpush1.msra.mxu0 0.0
    %2592 = vmatprep.subr.mxu0 0.0
    %2593 = vmatpush1.msra.mxu0 0.0
    %2594 = vmatprep.mubr.f32.mxu0 0.0
    %2595 = vmatmul.mubr.f32.gmra.mrb[0].mxu0 %v2294
    %v2596 = vpop.f32.mrb[0].mxu0
    %v2597 = vadd.f32 0.0, %v2596
    %v2598 = vpop.f32.mrb[0].mxu0
    %2599 = vdwg.mxu0
    %2601 = vrot.lane.b32.xlu0 %v2597, 96
    %v2602 = vpop.permute.xlu0 %2601
    %v2604 = vadd.f32 %v246, %v2602
    %v2605 = vxor.u32 %v2604, 2147483648
    %v2606 = vmul.f32 %v2605, 1.442695
    %v2607 = vpow.pop %v2606
    %v2608 = vadd.f32 %v2607, 1.0
    %v2609 = vrcp.pop %v2608
    %v2610 = vmul.f32 1.0, %v2609
    %v2611 = vmul.f32 %v2453, %v2284
    %2613 = vrot.lane.b32.xlu0 %v2529, 64
    %v2614 = vpop.permute.xlu0 %2613
    %v2616 = vmul.f32 %v2372, %v2614
    %2618 = vrot.lane.b32.xlu0 %v2616, 32
    %v2619 = vpop.permute.xlu0 %2618
    %v2621 = vadd.f32 %v2611, %v2619
    %v2622 = vtanh.pop %v2621
    %2624 = vrot.lane.b32.xlu0 %v2622, 64
    %v2625 = vpop.permute.xlu0 %2624
    %v2627 = vmul.f32 %v2610, %v2625
    %2629 = vrot.lane.b32.xlu0 %v2627, 32
    %v2630 = vpop.permute.xlu0 %2629
    %v2631 = vsel %vm270, %v2630, 0
    %2633 = vmatprep.subr.mxu0 0.0
    %2634 = vmatpush1.msra.mxu0 %v254
    %2635 = vmatprep.subr.mxu0 0.0
    %2636 = vmatpush1.msra.mxu0 %v255
    %2637 = vmatprep.subr.mxu0 0.0
    %2638 = vmatpush1.msra.mxu0 %v256
    %2639 = vmatprep.subr.mxu0 0.0
    %2640 = vmatpush1.msra.mxu0 %v257
    %2641 = vmatprep.subr.mxu0 0.0
    %2642 = vmatpush1.msra.mxu0 0.0
    %2643 = vmatprep.subr.mxu0 0.0
    %2644 = vmatpush1.msra.mxu0 0.0
    %2645 = vmatprep.subr.mxu0 0.0
    %2646 = vmatpush1.msra.mxu0 0.0
    %2647 = vmatprep.subr.mxu0 0.0
    %2648 = vmatpush1.msra.mxu0 0.0
    %2649 = vmatprep.subr.mxu0 0.0
    %2650 = vmatpush1.msra.mxu0 0.0
    %2651 = vmatprep.subr.mxu0 0.0
    %2652 = vmatpush1.msra.mxu0 0.0
    %2653 = vmatprep.subr.mxu0 0.0
    %2654 = vmatpush1.msra.mxu0 0.0
    %2655 = vmatprep.subr.mxu0 0.0
    %2656 = vmatpush1.msra.mxu0 0.0
    %2657 = vmatprep.subr.mxu0 0.0
    %2658 = vmatpush1.msra.mxu0 0.0
    %2659 = vmatprep.subr.mxu0 0.0
    %2660 = vmatpush1.msra.mxu0 0.0
    %2661 = vmatprep.subr.mxu0 0.0
    %2662 = vmatpush1.msra.mxu0 0.0
    %2663 = vmatprep.subr.mxu0 0.0
    %2664 = vmatpush1.msra.mxu0 0.0
    %2665 = vmatprep.subr.mxu0 0.0
    %2666 = vmatpush1.msra.mxu0 0.0
    %2667 = vmatprep.subr.mxu0 0.0
    %2668 = vmatpush1.msra.mxu0 0.0
    %2669 = vmatprep.subr.mxu0 0.0
    %2670 = vmatpush1.msra.mxu0 0.0
    %2671 = vmatprep.subr.mxu0 0.0
    %2672 = vmatpush1.msra.mxu0 0.0
    %2673 = vmatprep.subr.mxu0 0.0
    %2674 = vmatpush1.msra.mxu0 0.0
    %2675 = vmatprep.subr.mxu0 0.0
    %2676 = vmatpush1.msra.mxu0 0.0
    %2677 = vmatprep.subr.mxu0 0.0
    %2678 = vmatpush1.msra.mxu0 0.0
    %2679 = vmatprep.subr.mxu0 0.0
    %2680 = vmatpush1.msra.mxu0 0.0
    %2681 = vmatprep.subr.mxu0 0.0
    %2682 = vmatpush1.msra.mxu0 0.0
    %2683 = vmatprep.subr.mxu0 0.0
    %2684 = vmatpush1.msra.mxu0 0.0
    %2685 = vmatprep.subr.mxu0 0.0
    %2686 = vmatpush1.msra.mxu0 0.0
    %2687 = vmatprep.subr.mxu0 0.0
    %2688 = vmatpush1.msra.mxu0 0.0
    %2689 = vmatprep.subr.mxu0 0.0
    %2690 = vmatpush1.msra.mxu0 0.0
    %2691 = vmatprep.subr.mxu0 0.0
    %2692 = vmatpush1.msra.mxu0 0.0
    %2693 = vmatprep.subr.mxu0 0.0
    %2694 = vmatpush1.msra.mxu0 0.0
    %2695 = vmatprep.subr.mxu0 0.0
    %2696 = vmatpush1.msra.mxu0 0.0
    %2697 = vmatprep.mubr.f32.mxu0 0.0
    %2698 = vmatmul.mubr.f32.gmra.mrb[0].mxu0 %v2631
    %v2699 = vpop.f32.mrb[0].mxu0
    %v2700 = vadd.f32 0.0, %v2699
    %v2701 = vpop.f32.mrb[0].mxu0
    %2702 = vdwg.mxu0
    %v2703 = vadd.f32 %v251, %v2700
    %v2704 = vxor.u32 %v2703, 2147483648
    %v2705 = vmul.f32 %v2704, 1.442695
    %v2706 = vpow.pop %v2705
    %v2707 = vadd.f32 %v2706, 1.0
    %v2708 = vrcp.pop %v2707
    %v2709 = vmul.f32 1.0, %v2708
    %2710 = vmatprep.subr.mxu0 0.0
    %2711 = vmatpush1.msra.mxu0 %v258
    %2712 = vmatprep.subr.mxu0 0.0
    %2713 = vmatpush1.msra.mxu0 %v259
    %2714 = vmatprep.subr.mxu0 0.0
    %2715 = vmatpush1.msra.mxu0 %v260
    %2716 = vmatprep.subr.mxu0 0.0
    %2717 = vmatpush1.msra.mxu0 %v261
    %2718 = vmatprep.subr.mxu0 0.0
    %2719 = vmatpush1.msra.mxu0 0.0
    %2720 = vmatprep.subr.mxu0 0.0
    %2721 = vmatpush1.msra.mxu0 0.0
    %2722 = vmatprep.subr.mxu0 0.0
    %2723 = vmatpush1.msra.mxu0 0.0
    %2724 = vmatprep.subr.mxu0 0.0
    %2725 = vmatpush1.msra.mxu0 0.0
    %2726 = vmatprep.subr.mxu0 0.0
    %2727 = vmatpush1.msra.mxu0 0.0
    %2728 = vmatprep.subr.mxu0 0.0
    %2729 = vmatpush1.msra.mxu0 0.0
    %2730 = vmatprep.subr.mxu0 0.0
    %2731 = vmatpush1.msra.mxu0 0.0
    %2732 = vmatprep.subr.mxu0 0.0
    %2733 = vmatpush1.msra.mxu0 0.0
    %2734 = vmatprep.subr.mxu0 0.0
    %2735 = vmatpush1.msra.mxu0 0.0
    %2736 = vmatprep.subr.mxu0 0.0
    %2737 = vmatpush1.msra.mxu0 0.0
    %2738 = vmatprep.subr.mxu0 0.0
    %2739 = vmatpush1.msra.mxu0 0.0
    %2740 = vmatprep.subr.mxu0 0.0
    %2741 = vmatpush1.msra.mxu0 0.0
    %2742 = vmatprep.subr.mxu0 0.0
    %2743 = vmatpush1.msra.mxu0 0.0
    %2744 = vmatprep.subr.mxu0 0.0
    %2745 = vmatpush1.msra.mxu0 0.0
    %2746 = vmatprep.subr.mxu0 0.0
    %2747 = vmatpush1.msra.mxu0 0.0
    %2748 = vmatprep.subr.mxu0 0.0
    %2749 = vmatpush1.msra.mxu0 0.0
    %2750 = vmatprep.subr.mxu0 0.0
    %2751 = vmatpush1.msra.mxu0 0.0
    %2752 = vmatprep.subr.mxu0 0.0
    %2753 = vmatpush1.msra.mxu0 0.0
    %2754 = vmatprep.subr.mxu0 0.0
    %2755 = vmatpush1.msra.mxu0 0.0
    %2756 = vmatprep.subr.mxu0 0.0
    %2757 = vmatpush1.msra.mxu0 0.0
    %2758 = vmatprep.subr.mxu0 0.0
    %2759 = vmatpush1.msra.mxu0 0.0
    %2760 = vmatprep.subr.mxu0 0.0
    %2761 = vmatpush1.msra.mxu0 0.0
    %2762 = vmatprep.subr.mxu0 0.0
    %2763 = vmatpush1.msra.mxu0 0.0
    %2764 = vmatprep.subr.mxu0 0.0
    %2765 = vmatpush1.msra.mxu0 0.0
    %2766 = vmatprep.subr.mxu0 0.0
    %2767 = vmatpush1.msra.mxu0 0.0
    %2768 = vmatprep.subr.mxu0 0.0
    %2769 = vmatpush1.msra.mxu0 0.0
    %2770 = vmatprep.subr.mxu0 0.0
    %2771 = vmatpush1.msra.mxu0 0.0
    %2772 = vmatprep.subr.mxu0 0.0
    %2773 = vmatpush1.msra.mxu0 0.0
    %2774 = vmatprep.mubr.f32.mxu0 0.0
    %2775 = vmatmul.mubr.f32.gmra.mrb[0].mxu0 %v2631
    %v2776 = vpop.f32.mrb[0].mxu0
    %v2777 = vadd.f32 0.0, %v2776
    %v2778 = vpop.f32.mrb[0].mxu0
    %2779 = vdwg.mxu0
    %2781 = vrot.lane.b32.xlu0 %v2777, 32
    %v2782 = vpop.permute.xlu0 %2781
    %v2784 = vadd.f32 %v251, %v2782
    %v2785 = vxor.u32 %v2784, 2147483648
    %v2786 = vmul.f32 %v2785, 1.442695
    %v2787 = vpow.pop %v2786
    %v2788 = vadd.f32 %v2787, 1.0
    %v2789 = vrcp.pop %v2788
    %v2790 = vmul.f32 1.0, %v2789
    %2791 = vmatprep.subr.mxu0 0.0
    %2792 = vmatpush1.msra.mxu0 %v262
    %2793 = vmatprep.subr.mxu0 0.0
    %2794 = vmatpush1.msra.mxu0 %v263
    %2795 = vmatprep.subr.mxu0 0.0
    %2796 = vmatpush1.msra.mxu0 %v264
    %2797 = vmatprep.subr.mxu0 0.0
    %2798 = vmatpush1.msra.mxu0 %v265
    %2799 = vmatprep.subr.mxu0 0.0
    %2800 = vmatpush1.msra.mxu0 0.0
    %2801 = vmatprep.subr.mxu0 0.0
    %2802 = vmatpush1.msra.mxu0 0.0
    %2803 = vmatprep.subr.mxu0 0.0
    %2804 = vmatpush1.msra.mxu0 0.0
    %2805 = vmatprep.subr.mxu0 0.0
    %2806 = vmatpush1.msra.mxu0 0.0
    %2807 = vmatprep.subr.mxu0 0.0
    %2808 = vmatpush1.msra.mxu0 0.0
    %2809 = vmatprep.subr.mxu0 0.0
    %2810 = vmatpush1.msra.mxu0 0.0
    %2811 = vmatprep.subr.mxu0 0.0
    %2812 = vmatpush1.msra.mxu0 0.0
    %2813 = vmatprep.subr.mxu0 0.0
    %2814 = vmatpush1.msra.mxu0 0.0
    %2815 = vmatprep.subr.mxu0 0.0
    %2816 = vmatpush1.msra.mxu0 0.0
    %2817 = vmatprep.subr.mxu0 0.0
    %2818 = vmatpush1.msra.mxu0 0.0
    %2819 = vmatprep.subr.mxu0 0.0
    %2820 = vmatpush1.msra.mxu0 0.0
    %2821 = vmatprep.subr.mxu0 0.0
    %2822 = vmatpush1.msra.mxu0 0.0
    %2823 = vmatprep.subr.mxu0 0.0
    %2824 = vmatpush1.msra.mxu0 0.0
    %2825 = vmatprep.subr.mxu0 0.0
    %2826 = vmatpush1.msra.mxu0 0.0
    %2827 = vmatprep.subr.mxu0 0.0
    %2828 = vmatpush1.msra.mxu0 0.0
    %2829 = vmatprep.subr.mxu0 0.0
    %2830 = vmatpush1.msra.mxu0 0.0
    %2831 = vmatprep.subr.mxu0 0.0
    %2832 = vmatpush1.msra.mxu0 0.0
    %2833 = vmatprep.subr.mxu0 0.0
    %2834 = vmatpush1.msra.mxu0 0.0
    %2835 = vmatprep.subr.mxu0 0.0
    %2836 = vmatpush1.msra.mxu0 0.0
    %2837 = vmatprep.subr.mxu0 0.0
    %2838 = vmatpush1.msra.mxu0 0.0
    %2839 = vmatprep.subr.mxu0 0.0
    %2840 = vmatpush1.msra.mxu0 0.0
    %2841 = vmatprep.subr.mxu0 0.0
    %2842 = vmatpush1.msra.mxu0 0.0
    %2843 = vmatprep.subr.mxu0 0.0
    %2844 = vmatpush1.msra.mxu0 0.0
    %2845 = vmatprep.subr.mxu0 0.0
    %2846 = vmatpush1.msra.mxu0 0.0
    %2847 = vmatprep.subr.mxu0 0.0
    %2848 = vmatpush1.msra.mxu0 0.0
    %2849 = vmatprep.subr.mxu0 0.0
    %2850 = vmatpush1.msra.mxu0 0.0
    %2851 = vmatprep.subr.mxu0 0.0
    %2852 = vmatpush1.msra.mxu0 0.0
    %2853 = vmatprep.subr.mxu0 0.0
    %2854 = vmatpush1.msra.mxu0 0.0
    %2855 = vmatprep.mubr.f32.mxu0 0.0
    %2856 = vmatmul.mubr.f32.gmra.mrb[0].mxu0 %v2631
    %v2857 = vpop.f32.mrb[0].mxu0
    %v2858 = vadd.f32 0.0, %v2857
    %v2859 = vpop.f32.mrb[0].mxu0
    %2860 = vdwg.mxu0
    %2862 = vrot.lane.b32.xlu0 %v2858, 64
    %v2863 = vpop.permute.xlu0 %2862
    %v2865 = vadd.f32 %v251, %v2863
    %v2866 = vtanh.pop %v2865
    %2867 = vmatprep.subr.mxu0 0.0
    %2868 = vmatpush1.msra.mxu0 %v266
    %2869 = vmatprep.subr.mxu0 0.0
    %2870 = vmatpush1.msra.mxu0 %v267
    %2871 = vmatprep.subr.mxu0 0.0
    %2872 = vmatpush1.msra.mxu0 %v268
    %2873 = vmatprep.subr.mxu0 0.0
    %2874 = vmatpush1.msra.mxu0 %v269
    %2875 = vmatprep.subr.mxu0 0.0
    %2876 = vmatpush1.msra.mxu0 0.0
    %2877 = vmatprep.subr.mxu0 0.0
    %2878 = vmatpush1.msra.mxu0 0.0
    %2879 = vmatprep.subr.mxu0 0.0
    %2880 = vmatpush1.msra.mxu0 0.0
    %2881 = vmatprep.subr.mxu0 0.0
    %2882 = vmatpush1.msra.mxu0 0.0
    %2883 = vmatprep.subr.mxu0 0.0
    %2884 = vmatpush1.msra.mxu0 0.0
    %2885 = vmatprep.subr.mxu0 0.0
    %2886 = vmatpush1.msra.mxu0 0.0
    %2887 = vmatprep.subr.mxu0 0.0
    %2888 = vmatpush1.msra.mxu0 0.0
    %2889 = vmatprep.subr.mxu0 0.0
    %2890 = vmatpush1.msra.mxu0 0.0
    %2891 = vmatprep.subr.mxu0 0.0
    %2892 = vmatpush1.msra.mxu0 0.0
    %2893 = vmatprep.subr.mxu0 0.0
    %2894 = vmatpush1.msra.mxu0 0.0
    %2895 = vmatprep.subr.mxu0 0.0
    %2896 = vmatpush1.msra.mxu0 0.0
    %2897 = vmatprep.subr.mxu0 0.0
    %2898 = vmatpush1.msra.mxu0 0.0
    %2899 = vmatprep.subr.mxu0 0.0
    %2900 = vmatpush1.msra.mxu0 0.0
    %2901 = vmatprep.subr.mxu0 0.0
    %2902 = vmatpush1.msra.mxu0 0.0
    %2903 = vmatprep.subr.mxu0 0.0
    %2904 = vmatpush1.msra.mxu0 0.0
    %2905 = vmatprep.subr.mxu0 0.0
    %2906 = vmatpush1.msra.mxu0 0.0
    %2907 = vmatprep.subr.mxu0 0.0
    %2908 = vmatpush1.msra.mxu0 0.0
    %2909 = vmatprep.subr.mxu0 0.0
    %2910 = vmatpush1.msra.mxu0 0.0
    %2911 = vmatprep.subr.mxu0 0.0
    %2912 = vmatpush1.msra.mxu0 0.0
    %2913 = vmatprep.subr.mxu0 0.0
    %2914 = vmatpush1.msra.mxu0 0.0
    %2915 = vmatprep.subr.mxu0 0.0
    %2916 = vmatpush1.msra.mxu0 0.0
    %2917 = vmatprep.subr.mxu0 0.0
    %2918 = vmatpush1.msra.mxu0 0.0
    %2919 = vmatprep.subr.mxu0 0.0
    %2920 = vmatpush1.msra.mxu0 0.0
    %2921 = vmatprep.subr.mxu0 0.0
    %2922 = vmatpush1.msra.mxu0 0.0
    %2923 = vmatprep.subr.mxu0 0.0
    %2924 = vmatpush1.msra.mxu0 0.0
    %2925 = vmatprep.subr.mxu0 0.0
    %2926 = vmatpush1.msra.mxu0 0.0
    %2927 = vmatprep.subr.mxu0 0.0
    %2928 = vmatpush1.msra.mxu0 0.0
    %2929 = vmatprep.subr.mxu0 0.0
    %2930 = vmatpush1.msra.mxu0 0.0
    %2931 = vmatprep.mubr.f32.mxu0 0.0
    %2932 = vmatmul.mubr.f32.gmra.mrb[0].mxu0 %v2631
    %v2933 = vpop.f32.mrb[0].mxu0
    %v2934 = vadd.f32 0.0, %v2933
    %v2935 = vpop.f32.mrb[0].mxu0
    %2936 = vdwg.mxu0
    %2938 = vrot.lane.b32.xlu0 %v2934, 96
    %v2939 = vpop.permute.xlu0 %2938
    %v2941 = vadd.f32 %v251, %v2939
    %v2942 = vxor.u32 %v2941, 2147483648
    %v2943 = vmul.f32 %v2942, 1.442695
    %v2944 = vpow.pop %v2943
    %v2945 = vadd.f32 %v2944, 1.0
    %v2946 = vrcp.pop %v2945
    %v2947 = vmul.f32 1.0, %v2946
    %v2948 = vmul.f32 %v2790, %v2621
    %2950 = vrot.lane.b32.xlu0 %v2866, 64
    %v2951 = vpop.permute.xlu0 %2950
    %v2953 = vmul.f32 %v2709, %v2951
    %2955 = vrot.lane.b32.xlu0 %v2953, 32
    %v2956 = vpop.permute.xlu0 %2955
    %v2958 = vadd.f32 %v2948, %v2956
    %v2959 = vtanh.pop %v2958
    %2961 = vrot.lane.b32.xlu0 %v2959, 64
    %v2962 = vpop.permute.xlu0 %2961
    %v2964 = vmul.f32 %v2947, %v2962
    %v2965 = vmax.f32 %v605, 0.0
    %v2966 = vmax.f32 %v942, 0.0
    %v2967 = vmax.f32 %v1279, 0.0
    %v2968 = vmax.f32 %v1616, 0.0
    %v2969 = vmax.f32 %v1953, 0.0
    %v2970 = vmax.f32 %v2290, 0.0
    %v2971 = vmax.f32 %v2627, 0.0
    %v2972 = vmax.f32 %v2964, 0.0
    %v2973 = vld [vmem:[%s7] sm:$0xff]
    %v2974 = vld [vmem:[%s7 + $0x8] sm:$0xff]
    %v2975 = vld [vmem:[%s7 + $0x10] sm:$0xff]
    %v2976 = vld [vmem:[%s7 + $0x18] sm:$0xff]
    %v2977 = vld [vmem:[%s8] sm:$0x1]
    %v2979 = vlaneseq
    %v2980 = vshrl.u32 %v2979, 7
    %v2981 = vsub.s32 0, %v2980
    %v2982 = vrot.slane %v2977, %v2981
    %2992 = vrot.lane.b32.xlu0 %v2965, 32
    %v2993 = vpop.permute.xlu0 %2992
    %2994 = vrot.lane.b32.xlu0 %v2966, 32
    %v2995 = vpop.permute.xlu0 %2994
    %2996 = vrot.lane.b32.xlu0 %v2967, 32
    %v2997 = vpop.permute.xlu0 %2996
    %2998 = vrot.lane.b32.xlu0 %v2968, 32
    %v2999 = vpop.permute.xlu0 %2998
    %3000 = vrot.lane.b32.xlu0 %v2969, 32
    %v3001 = vpop.permute.xlu0 %3000
    %3002 = vrot.lane.b32.xlu0 %v2970, 32
    %v3003 = vpop.permute.xlu0 %3002
    %3004 = vrot.lane.b32.xlu0 %v2971, 32
    %v3005 = vpop.permute.xlu0 %3004
    %3006 = vrot.lane.b32.xlu0 %v2972, 32
    %v3007 = vpop.permute.xlu0 %3006
    %v3008 = vsel %vm270, %v2993, 0
    %v3010 = vsel %vm270, %v2995, 0
    %v3012 = vsel %vm270, %v2997, 0
    %v3014 = vsel %vm270, %v2999, 0
    %v3016 = vsel %vm270, %v3001, 0
    %v3018 = vsel %vm270, %v3003, 0
    %v3020 = vsel %vm270, %v3005, 0
    %v3022 = vsel %vm270, %v3007, 0
    %3024 = vmatprep.subr.mxu0 0.0
    %3025 = vmatpush1.msra.mxu0 %v2973
    %3026 = vmatprep.subr.mxu0 0.0
    %3027 = vmatpush1.msra.mxu0 %v2974
    %3028 = vmatprep.subr.mxu0 0.0
    %3029 = vmatpush1.msra.mxu0 %v2975
    %3030 = vmatprep.subr.mxu0 0.0
    %3031 = vmatpush1.msra.mxu0 %v2976
    %3032 = vmatprep.subr.mxu0 0.0
    %3033 = vmatpush1.msra.mxu0 0.0
    %3034 = vmatprep.subr.mxu0 0.0
    %3035 = vmatpush1.msra.mxu0 0.0
    %3036 = vmatprep.subr.mxu0 0.0
    %3037 = vmatpush1.msra.mxu0 0.0
    %3038 = vmatprep.subr.mxu0 0.0
    %3039 = vmatpush1.msra.mxu0 0.0
    %3040 = vmatprep.subr.mxu0 0.0
    %3041 = vmatpush1.msra.mxu0 0.0
    %3042 = vmatprep.subr.mxu0 0.0
    %3043 = vmatpush1.msra.mxu0 0.0
    %3044 = vmatprep.subr.mxu0 0.0
    %3045 = vmatpush1.msra.mxu0 0.0
    %3046 = vmatprep.subr.mxu0 0.0
    %3047 = vmatpush1.msra.mxu0 0.0
    %3048 = vmatprep.subr.mxu0 0.0
    %3049 = vmatpush1.msra.mxu0 0.0
    %3050 = vmatprep.subr.mxu0 0.0
    %3051 = vmatpush1.msra.mxu0 0.0
    %3052 = vmatprep.subr.mxu0 0.0
    %3053 = vmatpush1.msra.mxu0 0.0
    %3054 = vmatprep.subr.mxu0 0.0
    %3055 = vmatpush1.msra.mxu0 0.0
    %3056 = vmatprep.subr.mxu0 0.0
    %3057 = vmatpush1.msra.mxu0 0.0
    %3058 = vmatprep.subr.mxu0 0.0
    %3059 = vmatpush1.msra.mxu0 0.0
    %3060 = vmatprep.subr.mxu0 0.0
    %3061 = vmatpush1.msra.mxu0 0.0
    %3062 = vmatprep.subr.mxu0 0.0
    %3063 = vmatpush1.msra.mxu0 0.0
    %3064 = vmatprep.subr.mxu0 0.0
    %3065 = vmatpush1.msra.mxu0 0.0
    %3066 = vmatprep.subr.mxu0 0.0
    %3067 = vmatpush1.msra.mxu0 0.0
    %3068 = vmatprep.subr.mxu0 0.0
    %3069 = vmatpush1.msra.mxu0 0.0
    %3070 = vmatprep.subr.mxu0 0.0
    %3071 = vmatpush1.msra.mxu0 0.0
    %3072 = vmatprep.subr.mxu0 0.0
    %3073 = vmatpush1.msra.mxu0 0.0
    %3074 = vmatprep.subr.mxu0 0.0
    %3075 = vmatpush1.msra.mxu0 0.0
    %3076 = vmatprep.subr.mxu0 0.0
    %3077 = vmatpush1.msra.mxu0 0.0
    %3078 = vmatprep.subr.mxu0 0.0
    %3079 = vmatpush1.msra.mxu0 0.0
    %3080 = vmatprep.subr.mxu0 0.0
    %3081 = vmatpush1.msra.mxu0 0.0
    %3082 = vmatprep.subr.mxu0 0.0
    %3083 = vmatpush1.msra.mxu0 0.0
    %3084 = vmatprep.subr.mxu0 0.0
    %3085 = vmatpush1.msra.mxu0 0.0
    %3086 = vmatprep.subr.mxu0 0.0
    %3087 = vmatpush1.msra.mxu0 0.0
    %3088 = vmatprep.mubr.f32.mxu0 0.0
    %3089 = vmatmul.mubr.f32.gmra.mrb[0].mxu0 %v3008
    %v3090 = vpop.f32.mrb[0].mxu0
    %v3091 = vadd.f32 %v2982, %v3090
    %v3092 = vpop.f32.mrb[0].mxu0
    %3093 = vmatprep.mubr.f32.mxu0 0.0
    %3094 = vmatmul.mubr.f32.gmra.mrb[0].mxu0 %v3010
    %v3095 = vpop.f32.mrb[0].mxu0
    %v3096 = vadd.f32 %v2982, %v3095
    %v3097 = vpop.f32.mrb[0].mxu0
    %3098 = vmatprep.mubr.f32.mxu0 0.0
    %3099 = vmatmul.mubr.f32.gmra.mrb[0].mxu0 %v3012
    %v3100 = vpop.f32.mrb[0].mxu0
    %v3101 = vadd.f32 %v2982, %v3100
    %v3102 = vpop.f32.mrb[0].mxu0
    %3103 = vmatprep.mubr.f32.mxu0 0.0
    %3104 = vmatmul.mubr.f32.gmra.mrb[0].mxu0 %v3014
    %v3105 = vpop.f32.mrb[0].mxu0
    %v3106 = vadd.f32 %v2982, %v3105
    %v3107 = vpop.f32.mrb[0].mxu0
    %3108 = vmatprep.mubr.f32.mxu0 0.0
    %3109 = vmatmul.mubr.f32.gmra.mrb[0].mxu0 %v3016
    %v3110 = vpop.f32.mrb[0].mxu0
    %v3111 = vadd.f32 %v2982, %v3110
    %v3112 = vpop.f32.mrb[0].mxu0
    %3113 = vmatprep.mubr.f32.mxu0 0.0
    %3114 = vmatmul.mubr.f32.gmra.mrb[0].mxu0 %v3018
    %v3115 = vpop.f32.mrb[0].mxu0
    %v3116 = vadd.f32 %v2982, %v3115
    %v3117 = vpop.f32.mrb[0].mxu0
    %3118 = vmatprep.mubr.f32.mxu0 0.0
    %3119 = vmatmul.mubr.f32.gmra.mrb[0].mxu0 %v3020
    %v3120 = vpop.f32.mrb[0].mxu0
    %v3121 = vadd.f32 %v2982, %v3120
    %v3122 = vpop.f32.mrb[0].mxu0
    %3123 = vmatprep.mubr.f32.mxu0 0.0
    %3124 = vmatmul.mubr.f32.gmra.mrb[0].mxu0 %v3022
    %v3125 = vpop.f32.mrb[0].mxu0
    %v3126 = vadd.f32 %v2982, %v3125
    %v3127 = vpop.f32.mrb[0].mxu0
    %3128 = vdwg.mxu0
    %v3129 = vmax.f32 %v3091, 0.0
    %v3130 = vmax.f32 %v3096, 0.0
    %v3131 = vmax.f32 %v3101, 0.0
    %v3132 = vmax.f32 %v3106, 0.0
    %v3133 = vmax.f32 %v3111, 0.0
    %v3134 = vmax.f32 %v3116, 0.0
    %v3135 = vmax.f32 %v3121, 0.0
    %v3136 = vmax.f32 %v3126, 0.0
    %v3137 = vld [vmem:[%s9] sm:$0xff]
    %v3138 = vld [vmem:[%s9 + $0x8] sm:$0xff]
    %v3139 = vld [vmem:[%s9 + $0x10] sm:$0xff]
    %v3140 = vld [vmem:[%s9 + $0x18] sm:$0xff]
    %v3141 = vld [vmem:[%s10] sm:$0x1]
    %v3143 = vlaneseq
    %v3144 = vshrl.u32 %v3143, 7
    %v3145 = vsub.s32 0, %v3144
    %v3146 = vrot.slane %v3141, %v3145
    %v3149 = vsel %vm270, %v3129, 0
    %v3152 = vsel %vm270, %v3130, 0
    %v3155 = vsel %vm270, %v3131, 0
    %v3158 = vsel %vm270, %v3132, 0
    %v3161 = vsel %vm270, %v3133, 0
    %v3164 = vsel %vm270, %v3134, 0
    %v3167 = vsel %vm270, %v3135, 0
    %v3170 = vsel %vm270, %v3136, 0
    %3172 = vmatprep.subr.mxu0 0.0
    %3173 = vmatpush1.msra.mxu0 %v3137
    %3174 = vmatprep.subr.mxu0 0.0
    %3175 = vmatpush1.msra.mxu0 %v3138
    %3176 = vmatprep.subr.mxu0 0.0
    %3177 = vmatpush1.msra.mxu0 %v3139
    %3178 = vmatprep.subr.mxu0 0.0
    %3179 = vmatpush1.msra.mxu0 %v3140
    %3180 = vmatprep.subr.mxu0 0.0
    %3181 = vmatpush1.msra.mxu0 0.0
    %3182 = vmatprep.subr.mxu0 0.0
    %3183 = vmatpush1.msra.mxu0 0.0
    %3184 = vmatprep.subr.mxu0 0.0
    %3185 = vmatpush1.msra.mxu0 0.0
    %3186 = vmatprep.subr.mxu0 0.0
    %3187 = vmatpush1.msra.mxu0 0.0
    %3188 = vmatprep.subr.mxu0 0.0
    %3189 = vmatpush1.msra.mxu0 0.0
    %3190 = vmatprep.subr.mxu0 0.0
    %3191 = vmatpush1.msra.mxu0 0.0
    %3192 = vmatprep.subr.mxu0 0.0
    %3193 = vmatpush1.msra.mxu0 0.0
    %3194 = vmatprep.subr.mxu0 0.0
    %3195 = vmatpush1.msra.mxu0 0.0
    %3196 = vmatprep.subr.mxu0 0.0
    %3197 = vmatpush1.msra.mxu0 0.0
    %3198 = vmatprep.subr.mxu0 0.0
    %3199 = vmatpush1.msra.mxu0 0.0
    %3200 = vmatprep.subr.mxu0 0.0
    %3201 = vmatpush1.msra.mxu0 0.0
    %3202 = vmatprep.subr.mxu0 0.0
    %3203 = vmatpush1.msra.mxu0 0.0
    %3204 = vmatprep.subr.mxu0 0.0
    %3205 = vmatpush1.msra.mxu0 0.0
    %3206 = vmatprep.subr.mxu0 0.0
    %3207 = vmatpush1.msra.mxu0 0.0
    %3208 = vmatprep.subr.mxu0 0.0
    %3209 = vmatpush1.msra.mxu0 0.0
    %3210 = vmatprep.subr.mxu0 0.0
    %3211 = vmatpush1.msra.mxu0 0.0
    %3212 = vmatprep.subr.mxu0 0.0
    %3213 = vmatpush1.msra.mxu0 0.0
    %3214 = vmatprep.subr.mxu0 0.0
    %3215 = vmatpush1.msra.mxu0 0.0
    %3216 = vmatprep.subr.mxu0 0.0
    %3217 = vmatpush1.msra.mxu0 0.0
    %3218 = vmatprep.subr.mxu0 0.0
    %3219 = vmatpush1.msra.mxu0 0.0
    %3220 = vmatprep.subr.mxu0 0.0
    %3221 = vmatpush1.msra.mxu0 0.0
    %3222 = vmatprep.subr.mxu0 0.0
    %3223 = vmatpush1.msra.mxu0 0.0
    %3224 = vmatprep.subr.mxu0 0.0
    %3225 = vmatpush1.msra.mxu0 0.0
    %3226 = vmatprep.subr.mxu0 0.0
    %3227 = vmatpush1.msra.mxu0 0.0
    %3228 = vmatprep.subr.mxu0 0.0
    %3229 = vmatpush1.msra.mxu0 0.0
    %3230 = vmatprep.subr.mxu0 0.0
    %3231 = vmatpush1.msra.mxu0 0.0
    %3232 = vmatprep.subr.mxu0 0.0
    %3233 = vmatpush1.msra.mxu0 0.0
    %3234 = vmatprep.subr.mxu0 0.0
    %3235 = vmatpush1.msra.mxu0 0.0
    %3236 = vmatprep.mubr.f32.mxu0 0.0
    %3237 = vmatmul.mubr.f32.gmra.mrb[0].mxu0 %v3149
    %v3238 = vpop.f32.mrb[0].mxu0
    %v3239 = vadd.f32 %v3146, %v3238
    %v3240 = vpop.f32.mrb[0].mxu0
    %3241 = vmatprep.mubr.f32.mxu0 0.0
    %3242 = vmatmul.mubr.f32.gmra.mrb[0].mxu0 %v3152
    %v3243 = vpop.f32.mrb[0].mxu0
    %v3244 = vadd.f32 %v3146, %v3243
    %v3245 = vpop.f32.mrb[0].mxu0
    %3246 = vmatprep.mubr.f32.mxu0 0.0
    %3247 = vmatmul.mubr.f32.gmra.mrb[0].mxu0 %v3155
    %v3248 = vpop.f32.mrb[0].mxu0
    %v3249 = vadd.f32 %v3146, %v3248
    %v3250 = vpop.f32.mrb[0].mxu0
    %3251 = vmatprep.mubr.f32.mxu0 0.0
    %3252 = vmatmul.mubr.f32.gmra.mrb[0].mxu0 %v3158
    %v3253 = vpop.f32.mrb[0].mxu0
    %v3254 = vadd.f32 %v3146, %v3253
    %v3255 = vpop.f32.mrb[0].mxu0
    %3256 = vmatprep.mubr.f32.mxu0 0.0
    %3257 = vmatmul.mubr.f32.gmra.mrb[0].mxu0 %v3161
    %v3258 = vpop.f32.mrb[0].mxu0
    %v3259 = vadd.f32 %v3146, %v3258
    %v3260 = vpop.f32.mrb[0].mxu0
    %3261 = vmatprep.mubr.f32.mxu0 0.0
    %3262 = vmatmul.mubr.f32.gmra.mrb[0].mxu0 %v3164
    %v3263 = vpop.f32.mrb[0].mxu0
    %v3264 = vadd.f32 %v3146, %v3263
    %v3265 = vpop.f32.mrb[0].mxu0
    %3266 = vmatprep.mubr.f32.mxu0 0.0
    %3267 = vmatmul.mubr.f32.gmra.mrb[0].mxu0 %v3167
    %v3268 = vpop.f32.mrb[0].mxu0
    %v3269 = vadd.f32 %v3146, %v3268
    %v3270 = vpop.f32.mrb[0].mxu0
    %3271 = vmatprep.mubr.f32.mxu0 0.0
    %3272 = vmatmul.mubr.f32.gmra.mrb[0].mxu0 %v3170
    %v3273 = vpop.f32.mrb[0].mxu0
    %v3274 = vadd.f32 %v3146, %v3273
    %v3275 = vpop.f32.mrb[0].mxu0
    %3276 = vdwg.mxu0
    %v3277 = vadd.f32 %v3239, %v3244
    %v3278 = vadd.f32 %v3277, %v3249
    %v3279 = vadd.f32 %v3278, %v3254
    %v3280 = vadd.f32 %v3279, %v3259
    %v3281 = vadd.f32 %v3280, %v3264
    %v3282 = vadd.f32 %v3281, %v3269
    %v3283 = vadd.f32 %v3282, %v3274
    %vm3284 = vcmask 64512
    %3285 = vst.msk [vmem:[#allocation11] sm:$0xff] %vm3284, %v3283
    // Predicated region
    $region66: #{tpu_custom_call.1} parent=1 // pred_check
      _
    $region67: #{tpu_custom_call.1} parent=1 // pred_check_branch
      %3287 = sbr.rel (0) target = $region69
    $region68: #{tpu_custom_call.1} parent=1 // pred_region
      %s3289 = ssub.s32 128, 128
      %3290 = vsyncadd [#allocation4], %s3289
      %s3292 = sshll.u32 [#allocation11], 4
      %s3293 = int_to_ptr.vmem [resolvable:$true] %s3292
      %3295 = dma.vmem_to_hbm [thread:$0]  %s3293, 128, %s11, [#allocation4]
    $region69: #{tpu_custom_call.1} parent=1 // pred_fallthru
      _
    // Predicated region
    $region70: #{tpu_custom_call.1} parent=1 // pred_check
      _
    $region71: #{tpu_custom_call.1} parent=1 // pred_check_branch
      %3297 = sbr.rel (0) target = $region73
    $region72: #{tpu_custom_call.1} parent=1 // pred_region
      %3298 = dma.done [#allocation4], 128
    $region73: #{tpu_custom_call.1} parent=1 // pred_fallthru
      _
    %3299 = vsyncpa [#allocation3], 1
    %3300 = vsyncpa [#allocation6], 1
    %3301 = vsyncpa [#allocation9], 1
    %3302 = vsyncpa [#allocation4], 1

</llo_original>
